<compile_context>
chip_gen: v6e
topology: v6e:2x2x1
jax: 0.10.0
libtpu: 0.0.40
codegen_flags: <defaults>
</compile_context>

<pallas_src>
import functools

import jax
import jax.numpy as jnp
from jax.experimental import pallas as pl
from jax.experimental.pallas import tpu as pltpu


_SQRT_2_OVER_PI = 0.7978845608028654


def _gelu(x):
    # tanh-approx GELU (identical in kernel and reference).
    # TODO(synk): PyTorch nn.GELU() defaults to the exact erf formulation
    # (difference <= ~1e-3); switch to erf if bit-exactness vs torch is needed.
    return 0.5 * x * (1.0 + jnp.tanh(_SQRT_2_OVER_PI * (x + 0.044715 * x * x * x)))


_TAPS = tuple((ki, kj) for ki in range(3) for kj in range(3))


# --------------------------------------------------------------------------- #
# Fused UpBlock kernel (one grid step per batch element, channels-first)
# --------------------------------------------------------------------------- #
def _make_upblock_kernel(H, W, Cin, Cout, has_attn):
    S = H * W
    f32 = jnp.float32

    def _conv3x3(pad_ref, act_chw, w_ref, C):
        """Zero-pad `act_chw` (C,H,W) into scratch, im2col to (9*C,S), 1 matmul."""
        # Re-zeroed every step on purpose: the "parallel" batch axis may be split
        # across TensorCores, so a program_id==0-only init is not safe (per-core
        # scratch). The full zero is only a few KB of VMEM stores.
        pad_ref[...] = jnp.zeros_like(pad_ref)
        pad_ref[:, pl.ds(1, H), pl.ds(1, W)] = act_chw
        padded = pad_ref[...]
        im2col = jnp.concatenate(
            [padded[:, ki:ki + H, kj:kj + W].reshape(C, S) for (ki, kj) in _TAPS],
            axis=0)                                            # (9*C, S)
        return jnp.dot(w_ref[...], im2col, preferred_element_type=f32)   # (Cout, S)

    def kernel(*refs):
        if has_attn:
            (x_ref, emb_ref, w1_ref, b1_ref, we_ref, be_ref,
             w2_ref, b2_ref, wsc_ref, bsc_ref,
             wq_ref, bq_ref, wk_ref, bk_ref, wv_ref, bv_ref, wo_ref, bo_ref,
             o_ref, pad1_ref, pad2_ref) = refs
        else:
            (x_ref, emb_ref, w1_ref, b1_ref, we_ref, be_ref,
             w2_ref, b2_ref, wsc_ref, bsc_ref,
             o_ref, pad1_ref, pad2_ref) = refs

        x = x_ref[0].astype(f32)                               # (Cin, H, W) NCHW block

        # ---- conv1 on gelu(x): single wide-K (K = 9*Cin) matmul ----
        h = _conv3x3(pad1_ref, _gelu(x), w1_ref, Cin)          # (Cout, S)

        # ---- conditioning Linear(cond_ch -> Cout), broadcast over space ----
        emb_row = emb_ref[0].astype(f32)                       # (1, cond_ch)
        emb_out = jnp.sum(we_ref[...] * emb_row, axis=-1, keepdims=True) + be_ref[...]
        h = h + b1_ref[...] + emb_out                          # (Cout, S)

        # ---- conv2 on gelu(h): single wide-K (K = 9*Cout) matmul ----
        h2 = _conv3x3(pad2_ref, _gelu(h).reshape(Cout, H, W), w2_ref, Cout)

        # ---- 1x1 conv shortcut on the original input ----
        sc = jnp.dot(wsc_ref[...], x.reshape(Cin, S),
                     preferred_element_type=f32) + bsc_ref[...]
        res = h2 + b2_ref[...] + sc                            # (Cout, S) ResidualBlock out

        # ---- optional AttentionBlock (n_heads=1, d_k=Cout), transposed layout ----
        if has_attn:
            qT = jnp.dot(wq_ref[...], res, preferred_element_type=f32) + bq_ref[...]
            kT = jnp.dot(wk_ref[...], res, preferred_element_type=f32) + bk_ref[...]
            vT = jnp.dot(wv_ref[...], res, preferred_element_type=f32) + bv_ref[...]
            # sT[j, i] = k_j . q_i  (dk^-0.5 already folded into wq/bq)
            sT = jnp.dot(kT.T, qT, preferred_element_type=f32)            # (S_j, S_i)
            # pdearena quirk: softmax over the *query* axis i — here the lane axis.
            sT = sT - jnp.max(sT, axis=-1, keepdims=True)
            e = jnp.exp(sT)
            inv = pl.reciprocal(jnp.sum(e, axis=-1, keepdims=True), approx=False)
            attn_T = e * inv                                               # (S_j, S_i)
            ctxT = jnp.dot(vT, attn_T, preferred_element_type=f32)        # (dk, S_i)
            res = jnp.dot(wo_ref[...], ctxT, preferred_element_type=f32) \
                  + bo_ref[...] + res

        o_ref[...] = res.reshape(1, Cout, S).astype(o_ref.dtype)

    return kernel


@functools.partial(jax.jit, static_argnames=("has_attn",))
def upblock_forward(x_nchw, emb, packed, *, has_attn=False):
    """x: [B, in_ch+out_ch, H, W], emb: [B, cond_ch] -> [B, out_ch, H, W] (NCHW)."""
    B, Cin, H, W = x_nchw.shape
    S = H * W
    Cout = packed["b1"].shape[0]
    cond_ch = packed["we"].shape[1]
    dk = packed["wq"].shape[0] if has_attn else Cout

    emb3 = emb.reshape(B, 1, cond_ch)

    def const(shape):
        n = len(shape)
        return pl.BlockSpec(shape, lambda b: (0,) * n)

    in_specs = [
        pl.BlockSpec((1, Cin, H, W), lambda b: (b, 0, 0, 0)),
        pl.BlockSpec((1, 1, cond_ch), lambda b: (b, 0, 0)),
        const((Cout, 9 * Cin)), const((Cout, 1)),
        const((Cout, cond_ch)), const((Cout, 1)),
        const((Cout, 9 * Cout)), const((Cout, 1)),
        const((Cout, Cin)), const((Cout, 1)),
    ]
    args = [x_nchw, emb3, packed["w1"], packed["b1"], packed["we"], packed["be"],
            packed["w2"], packed["b2"], packed["wsc"], packed["bsc"]]
    if has_attn:
        in_specs += [const((dk, Cout)), const((dk, 1)),
                     const((dk, Cout)), const((dk, 1)),
                     const((dk, Cout)), const((dk, 1)),
                     const((Cout, dk)), const((Cout, 1))]
        args += [packed["wq"], packed["bq"], packed["wk"], packed["bk"],
                 packed["wv"], packed["bv"], packed["wo"], packed["bo"]]

    kernel = _make_upblock_kernel(H, W, Cin, Cout, has_attn)

    out = pl.pallas_call(
        kernel,
        out_shape=jax.ShapeDtypeStruct((B, Cout, S), x_nchw.dtype),
        grid_spec=pltpu.PrefetchScalarGridSpec(
            num_scalar_prefetch=0,
            grid=(B,),
            in_specs=in_specs,
            out_specs=pl.BlockSpec((1, Cout, S), lambda b: (b, 0, 0)),
            scratch_shapes=[
                pltpu.VMEM((Cin, H + 2, W + 2), jnp.float32),   # conv1 zero-pad buffer
                pltpu.VMEM((Cout, H + 2, W + 2), jnp.float32),  # conv2 zero-pad buffer
            ],
        ),
        compiler_params=pltpu.CompilerParams(
            dimension_semantics=("parallel",),
            vmem_limit_bytes=32 * 1024 * 1024,
        ),
    )(*args)

    # Output is already channels-first; this reshape is free (no transpose).
    return out.reshape(B, Cout, H, W)


# --------------------------------------------------------------------------- #
# Parameter init (PyTorch-style uniform) and one-time packing for the kernel
# --------------------------------------------------------------------------- #
def _uniform(key, shape, bound):
    return jax.random.uniform(key, shape, jnp.float32, -bound, bound)


def init_upblock_params(key, res_in_ch, out_ch, cond_ch):
    ks = jax.random.split(key, 12)
    dk = out_ch                      # AttentionBlock defaults: d_k = n_channels, 1 head
    b_c1 = 1.0 / (res_in_ch * 9) ** 0.5
    b_c2 = 1.0 / (out_ch * 9) ** 0.5
    b_sc = 1.0 / res_in_ch ** 0.5
    b_ce = 1.0 / cond_ch ** 0.5
    b_pr = 1.0 / out_ch ** 0.5
    b_ou = 1.0 / dk ** 0.5
    return dict(
        conv1_w=_uniform(ks[0], (out_ch, res_in_ch, 3, 3), b_c1),
        conv1_b=_uniform(ks[1], (out_ch,), b_c1),
        # NOTE: PyTorch's ResidualBlock.reset_parameters() zero-inits conv2;
        # random init is used here so the conv2 path is numerically exercised.
        conv2_w=_uniform(ks[2], (out_ch, out_ch, 3, 3), b_c2),
        conv2_b=_uniform(ks[3], (out_ch,), b_c2),
        short_w=_uniform(ks[4], (out_ch, res_in_ch, 1, 1), b_sc),
        short_b=_uniform(ks[5], (out_ch,), b_sc),
        cond_w=_uniform(ks[6], (out_ch, cond_ch), b_ce),
        cond_b=_uniform(ks[7], (out_ch,), b_ce),
        proj_w=_uniform(ks[8], (3 * dk, out_ch), b_pr),
        proj_b=_uniform(ks[9], (3 * dk,), b_pr),
        out_w=_uniform(ks[10], (out_ch, dk), b_ou),
        out_b=_uniform(ks[11], (out_ch,), b_ou),
        d_k=dk,
    )


def pack_upblock_params(p, *, has_attn):
    """One-time packing: (tap, cin)-major merged conv weights, bias columns,
    split q/k/v with the dk**-0.5 scale folded into wq/bq."""
    Cout, Cin = p["conv1_w"].shape[:2]
    dk = p["d_k"]

    def conv_w(w):          # (Cout, C, 3, 3) -> (Cout, 9*C), K ordered (tap, c)
        co, c = w.shape[:2]
        return jnp.transpose(w, (0, 2, 3, 1)).reshape(co, 9 * c)

    packed = dict(
        w1=conv_w(p["conv1_w"]), b1=p["conv1_b"].reshape(Cout, 1),
        w2=conv_w(p["conv2_w"]), b2=p["conv2_b"].reshape(Cout, 1),
        wsc=p["short_w"].reshape(Cout, Cin), bsc=p["short_b"].reshape(Cout, 1),
        we=p["cond_w"], be=p["cond_b"].reshape(Cout, 1),
    )
    if has_attn:
        scale = float(dk) ** -0.5
        pw, pb = p["proj_w"], p["proj_b"]
        packed.update(
            wq=pw[0:dk, :] * scale, bq=(pb[0:dk] * scale).reshape(dk, 1),
            wk=pw[dk:2 * dk, :], bk=pb[dk:2 * dk].reshape(dk, 1),
            wv=pw[2 * dk:3 * dk, :], bv=pb[2 * dk:3 * dk].reshape(dk, 1),
            wo=p["out_w"], bo=p["out_b"].reshape(Cout, 1),
        )
    return packed


# --------------------------------------------------------------------------- #
# Pure-JAX reference (mirrors the PyTorch forward exactly)
# --------------------------------------------------------------------------- #
def upblock_reference(x, emb, p, *, has_attn):
    conv = functools.partial(jax.lax.conv_general_dilated, window_strides=(1, 1),
                             dimension_numbers=("NCHW", "OIHW", "NCHW"))
    h = conv(_gelu(x), p["conv1_w"], padding=((1, 1), (1, 1))) \
        + p["conv1_b"][None, :, None, None]
    emb_out = emb @ p["cond_w"].T + p["cond_b"]
    h = h + emb_out[:, :, None, None]
    h = conv(_gelu(h), p["conv2_w"], padding=((1, 1), (1, 1))) \
        + p["conv2_b"][None, :, None, None]
    sc = conv(x, p["short_w"], padding=((0, 0), (0, 0))) \
        + p["short_b"][None, :, None, None]
    r = h + sc
    if not has_attn:
        return r
    B, C, H, W = r.shape
    dk = p["d_k"]
    t = r.reshape(B, C, H * W).transpose(0, 2, 1)                  # [B, S, C]
    qkv = t @ p["proj_w"].T + p["proj_b"]
    q, k, v = qkv[..., :dk], qkv[..., dk:2 * dk], qkv[..., 2 * dk:]
    s = jnp.einsum("bid,bjd->bij", q, k) * (float(dk) ** -0.5)
    a = jax.nn.softmax(s, axis=1)                                  # softmax over i (dim=1)
    ctx = jnp.einsum("bij,bjd->bid", a, v)
    ctx = ctx @ p["out_w"].T + p["out_b"]
    ctx = ctx + t
    return ctx.transpose(0, 2, 1).reshape(B, C, H, W)


if __name__ == "__main__":
    key = jax.random.PRNGKey(0)
    k_x, k_e, k_p = jax.random.split(key, 3)

    # UpBlock(in_channels=4, out_channels=4, cond_channels=32):
    # its ResidualBlock sees in_channels + out_channels = 8 input channels.
    in_ch, out_ch, cond_ch = 4, 4, 32
    B, H, W = 2, 16, 16
    Cin = in_ch + out_ch

    x = jax.random.normal(k_x, (B, Cin, H, W), jnp.float32)
    emb = jax.random.normal(k_e, (B, cond_ch), jnp.float32)
    params = init_upblock_params(k_p, Cin, out_ch, cond_ch)

    for has_attn in (False, True):
        packed = pack_upblock_params(params, has_attn=has_attn)
        out = upblock_forward(x, emb, packed, has_attn=has_attn)
        out = jax.block_until_ready(out)
        ref = upblock_reference(x, emb, params, has_attn=has_attn)
        assert out.shape == (B, out_ch, H, W), out.shape
        err = float(jnp.max(jnp.abs(out - ref)))
        assert jnp.allclose(out, ref, atol=2e-3, rtol=2e-3), (has_attn, err)

    print("KERNEL_OK")
</pallas_src>

<mosaic_0001>
module attributes {stable_mosaic.version = 11 : i64} {
  func.func @kernel(%arg0: i32, %arg1: memref<1x8x16x16xf32, #tpu.memory_space<vmem>>, %arg2: memref<1x1x32xf32, #tpu.memory_space<vmem>>, %arg3: memref<4x72xf32, #tpu.memory_space<vmem>>, %arg4: memref<4x1xf32, #tpu.memory_space<vmem>>, %arg5: memref<4x32xf32, #tpu.memory_space<vmem>>, %arg6: memref<4x1xf32, #tpu.memory_space<vmem>>, %arg7: memref<4x36xf32, #tpu.memory_space<vmem>>, %arg8: memref<4x1xf32, #tpu.memory_space<vmem>>, %arg9: memref<4x8xf32, #tpu.memory_space<vmem>>, %arg10: memref<4x1xf32, #tpu.memory_space<vmem>>, %arg11: memref<1x4x256xf32, #tpu.memory_space<vmem>>, %arg12: memref<8x18x18xf32, #tpu.memory_space<vmem>>, %arg13: memref<4x18x18xf32, #tpu.memory_space<vmem>>) attributes {dimension_semantics = [#tpu.dimension_semantics<parallel>], iteration_bounds = array<i64: 2>, scalar_prefetch = 0 : i64, scratch_operands = 2 : i64, tpu.core_type = #tpu.core_type<tc>, window_params = [{transform_indices = @transform_0, window_bounds = array<i64: 1, 8, 16, 16>}, {transform_indices = @transform_1, window_bounds = array<i64: 1, 1, 32>}, {pipeline_mode = #tpu.pipeline_mode<synchronous>, transform_indices = @transform_2, window_bounds = array<i64: 4, 72>}, {pipeline_mode = #tpu.pipeline_mode<synchronous>, transform_indices = @transform_3, window_bounds = array<i64: 4, 1>}, {pipeline_mode = #tpu.pipeline_mode<synchronous>, transform_indices = @transform_4, window_bounds = array<i64: 4, 32>}, {pipeline_mode = #tpu.pipeline_mode<synchronous>, transform_indices = @transform_5, window_bounds = array<i64: 4, 1>}, {pipeline_mode = #tpu.pipeline_mode<synchronous>, transform_indices = @transform_6, window_bounds = array<i64: 4, 36>}, {pipeline_mode = #tpu.pipeline_mode<synchronous>, transform_indices = @transform_7, window_bounds = array<i64: 4, 1>}, {pipeline_mode = #tpu.pipeline_mode<synchronous>, transform_indices = @transform_8, window_bounds = array<i64: 4, 8>}, {pipeline_mode = #tpu.pipeline_mode<synchronous>, transform_indices = @transform_9, window_bounds = array<i64: 4, 1>}, {transform_indices = @transform_10, window_bounds = array<i64: 1, 4, 256>}]} {
    %c0 = arith.constant 0 : index
    %c0_0 = arith.constant 0 : index
    %c0_1 = arith.constant 0 : index
    %c0_2 = arith.constant 0 : index
    %0 = vector.load %arg1[%c0, %c0_0, %c0_1, %c0_2] : memref<1x8x16x16xf32, #tpu.memory_space<vmem>>, vector<1x8x16x16xf32>
    %1 = vector.shape_cast %0 : vector<1x8x16x16xf32> to vector<8x16x16xf32>
    %cst = arith.constant 5.000000e-01 : f32
    %2 = vector.broadcast %cst : f32 to vector<8x16x16xf32>
    %3 = arith.mulf %2, %1 : vector<8x16x16xf32>
    %cst_3 = arith.constant 4.471500e-02 : f32
    %4 = vector.broadcast %cst_3 : f32 to vector<8x16x16xf32>
    %5 = arith.mulf %4, %1 : vector<8x16x16xf32>
    %6 = arith.mulf %5, %1 : vector<8x16x16xf32>
    %7 = arith.mulf %6, %1 : vector<8x16x16xf32>
    %8 = arith.addf %1, %7 : vector<8x16x16xf32>
    %cst_4 = arith.constant 0.797884583 : f32
    %9 = vector.broadcast %cst_4 : f32 to vector<8x16x16xf32>
    %10 = arith.mulf %9, %8 : vector<8x16x16xf32>
    %11 = math.tanh %10 : vector<8x16x16xf32>
    %cst_5 = arith.constant 1.000000e+00 : f32
    %12 = vector.broadcast %cst_5 : f32 to vector<8x16x16xf32>
    %13 = arith.addf %12, %11 : vector<8x16x16xf32>
    %14 = arith.mulf %3, %13 : vector<8x16x16xf32>
    %cst_6 = arith.constant 0.000000e+00 : f32
    %15 = vector.broadcast %cst_6 : f32 to vector<8x18x18xf32>
    %c0_7 = arith.constant 0 : index
    %c0_8 = arith.constant 0 : index
    %c0_9 = arith.constant 0 : index
    %16 = vector.load %arg12[%c0_7, %c0_8, %c0_9] : memref<8x18x18xf32, #tpu.memory_space<vmem>>, vector<8x18x18xf32>
    tpu.vector_store %arg12[%c0_7, %c0_8, %c0_9], %15 {strides = array<i32>} : memref<8x18x18xf32, #tpu.memory_space<vmem>>, vector<8x18x18xf32>,
    %c0_10 = arith.constant 0 : index
    %c1 = arith.constant 1 : index
    %c1_11 = arith.constant 1 : index
    %17 = vector.load %arg12[%c0_10, %c1, %c1_11] : memref<8x18x18xf32, #tpu.memory_space<vmem>>, vector<8x16x16xf32>
    tpu.vector_store %arg12[%c0_10, %c1, %c1_11], %14 {strides = array<i32>} : memref<8x18x18xf32, #tpu.memory_space<vmem>>, vector<8x16x16xf32>,
    %c0_12 = arith.constant 0 : index
    %c0_13 = arith.constant 0 : index
    %c0_14 = arith.constant 0 : index
    %18 = vector.load %arg12[%c0_12, %c0_13, %c0_14] : memref<8x18x18xf32, #tpu.memory_space<vmem>>, vector<8x18x18xf32>
    %19 = vector.extract_strided_slice %18 {offsets = [0, 0, 0], sizes = [8, 16, 16], strides = [1, 1, 1]} : vector<8x18x18xf32> to vector<8x16x16xf32>
    %20 = vector.shape_cast %19 : vector<8x16x16xf32> to vector<8x256xf32>
    %21 = vector.extract_strided_slice %18 {offsets = [0, 0, 1], sizes = [8, 16, 16], strides = [1, 1, 1]} : vector<8x18x18xf32> to vector<8x16x16xf32>
    %22 = vector.shape_cast %21 : vector<8x16x16xf32> to vector<8x256xf32>
    %23 = vector.extract_strided_slice %18 {offsets = [0, 0, 2], sizes = [8, 16, 16], strides = [1, 1, 1]} : vector<8x18x18xf32> to vector<8x16x16xf32>
    %24 = vector.shape_cast %23 : vector<8x16x16xf32> to vector<8x256xf32>
    %25 = vector.extract_strided_slice %18 {offsets = [0, 1, 0], sizes = [8, 16, 16], strides = [1, 1, 1]} : vector<8x18x18xf32> to vector<8x16x16xf32>
    %26 = vector.shape_cast %25 : vector<8x16x16xf32> to vector<8x256xf32>
    %27 = vector.extract_strided_slice %18 {offsets = [0, 1, 1], sizes = [8, 16, 16], strides = [1, 1, 1]} : vector<8x18x18xf32> to vector<8x16x16xf32>
    %28 = vector.shape_cast %27 : vector<8x16x16xf32> to vector<8x256xf32>
    %29 = vector.extract_strided_slice %18 {offsets = [0, 1, 2], sizes = [8, 16, 16], strides = [1, 1, 1]} : vector<8x18x18xf32> to vector<8x16x16xf32>
    %30 = vector.shape_cast %29 : vector<8x16x16xf32> to vector<8x256xf32>
    %31 = vector.extract_strided_slice %18 {offsets = [0, 2, 0], sizes = [8, 16, 16], strides = [1, 1, 1]} : vector<8x18x18xf32> to vector<8x16x16xf32>
    %32 = vector.shape_cast %31 : vector<8x16x16xf32> to vector<8x256xf32>
    %33 = vector.extract_strided_slice %18 {offsets = [0, 2, 1], sizes = [8, 16, 16], strides = [1, 1, 1]} : vector<8x18x18xf32> to vector<8x16x16xf32>
    %34 = vector.shape_cast %33 : vector<8x16x16xf32> to vector<8x256xf32>
    %35 = vector.extract_strided_slice %18 {offsets = [0, 2, 2], sizes = [8, 16, 16], strides = [1, 1, 1]} : vector<8x18x18xf32> to vector<8x16x16xf32>
    %36 = vector.shape_cast %35 : vector<8x16x16xf32> to vector<8x256xf32>
    %37 = tpu.concatenate %20, %22, %24, %26, %28, %30, %32, %34, %36 in 0 : vector<8x256xf32>, vector<8x256xf32>, vector<8x256xf32>, vector<8x256xf32>, vector<8x256xf32>, vector<8x256xf32>, vector<8x256xf32>, vector<8x256xf32>, vector<8x256xf32> -> vector<72x256xf32>
    %c0_15 = arith.constant 0 : index
    %c0_16 = arith.constant 0 : index
    %38 = vector.load %arg3[%c0_15, %c0_16] : memref<4x72xf32, #tpu.memory_space<vmem>>, vector<4x72xf32>
    %cst_17 = arith.constant dense<0.000000e+00> : vector<4x256xf32>
    %39 = tpu.matmul %38, %37, %cst_17 {dimension_numbers = #tpu.dot_dimension_numbers<[1], [0], [0], [1], [0, 0, 1, 1], [], []>} : vector<4x72xf32>, vector<72x256xf32>, vector<4x256xf32> -> vector<4x256xf32>
    %c0_18 = arith.constant 0 : index
    %c0_19 = arith.constant 0 : index
    %c0_20 = arith.constant 0 : index
    %40 = vector.load %arg2[%c0_18, %c0_19, %c0_20] : memref<1x1x32xf32, #tpu.memory_space<vmem>>, vector<1x1x32xf32>
    %41 = vector.shape_cast %40 : vector<1x1x32xf32> to vector<1x32xf32>
    %c0_21 = arith.constant 0 : index
    %c0_22 = arith.constant 0 : index
    %42 = vector.load %arg5[%c0_21, %c0_22] : memref<4x32xf32, #tpu.memory_space<vmem>>, vector<4x32xf32>
    %43 = vector.broadcast %41 : vector<1x32xf32> to vector<4x32xf32>
    %44 = arith.mulf %42, %43 : vector<4x32xf32>
    %cst_23 = arith.constant dense<0.000000e+00> : vector<4xf32>
    %45 = vector.multi_reduction <add>, %44, %cst_23 [1] : vector<4x32xf32> to vector<4xf32>
    %46 = vector.shape_cast %45 : vector<4xf32> to vector<4x1xf32>
    %c0_24 = arith.constant 0 : index
    %c0_25 = arith.constant 0 : index
    %47 = vector.load %arg6[%c0_24, %c0_25] : memref<4x1xf32, #tpu.memory_space<vmem>>, vector<4x1xf32>
    %48 = arith.addf %46, %47 : vector<4x1xf32>
    %c0_26 = arith.constant 0 : index
    %c0_27 = arith.constant 0 : index
    %49 = vector.load %arg4[%c0_26, %c0_27] : memref<4x1xf32, #tpu.memory_space<vmem>>, vector<4x1xf32>
    %50 = vector.broadcast %49 : vector<4x1xf32> to vector<4x256xf32>
    %51 = arith.addf %39, %50 : vector<4x256xf32>
    %52 = vector.broadcast %48 : vector<4x1xf32> to vector<4x256xf32>
    %53 = arith.addf %51, %52 : vector<4x256xf32>
    %cst_28 = arith.constant 5.000000e-01 : f32
    %54 = vector.broadcast %cst_28 : f32 to vector<4x256xf32>
    %55 = arith.mulf %54, %53 : vector<4x256xf32>
    %cst_29 = arith.constant 4.471500e-02 : f32
    %56 = vector.broadcast %cst_29 : f32 to vector<4x256xf32>
    %57 = arith.mulf %56, %53 : vector<4x256xf32>
    %58 = arith.mulf %57, %53 : vector<4x256xf32>
    %59 = arith.mulf %58, %53 : vector<4x256xf32>
    %60 = arith.addf %53, %59 : vector<4x256xf32>
    %cst_30 = arith.constant 0.797884583 : f32
    %61 = vector.broadcast %cst_30 : f32 to vector<4x256xf32>
    %62 = arith.mulf %61, %60 : vector<4x256xf32>
    %63 = math.tanh %62 : vector<4x256xf32>
    %cst_31 = arith.constant 1.000000e+00 : f32
    %64 = vector.broadcast %cst_31 : f32 to vector<4x256xf32>
    %65 = arith.addf %64, %63 : vector<4x256xf32>
    %66 = arith.mulf %55, %65 : vector<4x256xf32>
    %67 = vector.shape_cast %66 : vector<4x256xf32> to vector<4x16x16xf32>
    %cst_32 = arith.constant 0.000000e+00 : f32
    %68 = vector.broadcast %cst_32 : f32 to vector<4x18x18xf32>
    %c0_33 = arith.constant 0 : index
    %c0_34 = arith.constant 0 : index
    %c0_35 = arith.constant 0 : index
    %69 = vector.load %arg13[%c0_33, %c0_34, %c0_35] : memref<4x18x18xf32, #tpu.memory_space<vmem>>, vector<4x18x18xf32>
    tpu.vector_store %arg13[%c0_33, %c0_34, %c0_35], %68 {strides = array<i32>} : memref<4x18x18xf32, #tpu.memory_space<vmem>>, vector<4x18x18xf32>,
    %c0_36 = arith.constant 0 : index
    %c1_37 = arith.constant 1 : index
    %c1_38 = arith.constant 1 : index
    %70 = vector.load %arg13[%c0_36, %c1_37, %c1_38] : memref<4x18x18xf32, #tpu.memory_space<vmem>>, vector<4x16x16xf32>
    tpu.vector_store %arg13[%c0_36, %c1_37, %c1_38], %67 {strides = array<i32>} : memref<4x18x18xf32, #tpu.memory_space<vmem>>, vector<4x16x16xf32>,
    %c0_39 = arith.constant 0 : index
    %c0_40 = arith.constant 0 : index
    %c0_41 = arith.constant 0 : index
    %71 = vector.load %arg13[%c0_39, %c0_40, %c0_41] : memref<4x18x18xf32, #tpu.memory_space<vmem>>, vector<4x18x18xf32>
    %72 = vector.extract_strided_slice %71 {offsets = [0, 0, 0], sizes = [4, 16, 16], strides = [1, 1, 1]} : vector<4x18x18xf32> to vector<4x16x16xf32>
    %73 = vector.shape_cast %72 : vector<4x16x16xf32> to vector<4x256xf32>
    %74 = vector.extract_strided_slice %71 {offsets = [0, 0, 1], sizes = [4, 16, 16], strides = [1, 1, 1]} : vector<4x18x18xf32> to vector<4x16x16xf32>
    %75 = vector.shape_cast %74 : vector<4x16x16xf32> to vector<4x256xf32>
    %76 = vector.extract_strided_slice %71 {offsets = [0, 0, 2], sizes = [4, 16, 16], strides = [1, 1, 1]} : vector<4x18x18xf32> to vector<4x16x16xf32>
    %77 = vector.shape_cast %76 : vector<4x16x16xf32> to vector<4x256xf32>
    %78 = vector.extract_strided_slice %71 {offsets = [0, 1, 0], sizes = [4, 16, 16], strides = [1, 1, 1]} : vector<4x18x18xf32> to vector<4x16x16xf32>
    %79 = vector.shape_cast %78 : vector<4x16x16xf32> to vector<4x256xf32>
    %80 = vector.extract_strided_slice %71 {offsets = [0, 1, 1], sizes = [4, 16, 16], strides = [1, 1, 1]} : vector<4x18x18xf32> to vector<4x16x16xf32>
    %81 = vector.shape_cast %80 : vector<4x16x16xf32> to vector<4x256xf32>
    %82 = vector.extract_strided_slice %71 {offsets = [0, 1, 2], sizes = [4, 16, 16], strides = [1, 1, 1]} : vector<4x18x18xf32> to vector<4x16x16xf32>
    %83 = vector.shape_cast %82 : vector<4x16x16xf32> to vector<4x256xf32>
    %84 = vector.extract_strided_slice %71 {offsets = [0, 2, 0], sizes = [4, 16, 16], strides = [1, 1, 1]} : vector<4x18x18xf32> to vector<4x16x16xf32>
    %85 = vector.shape_cast %84 : vector<4x16x16xf32> to vector<4x256xf32>
    %86 = vector.extract_strided_slice %71 {offsets = [0, 2, 1], sizes = [4, 16, 16], strides = [1, 1, 1]} : vector<4x18x18xf32> to vector<4x16x16xf32>
    %87 = vector.shape_cast %86 : vector<4x16x16xf32> to vector<4x256xf32>
    %88 = vector.extract_strided_slice %71 {offsets = [0, 2, 2], sizes = [4, 16, 16], strides = [1, 1, 1]} : vector<4x18x18xf32> to vector<4x16x16xf32>
    %89 = vector.shape_cast %88 : vector<4x16x16xf32> to vector<4x256xf32>
    %90 = tpu.concatenate %73, %75, %77, %79, %81, %83, %85, %87, %89 in 0 : vector<4x256xf32>, vector<4x256xf32>, vector<4x256xf32>, vector<4x256xf32>, vector<4x256xf32>, vector<4x256xf32>, vector<4x256xf32>, vector<4x256xf32>, vector<4x256xf32> -> vector<36x256xf32>
    %c0_42 = arith.constant 0 : index
    %c0_43 = arith.constant 0 : index
    %91 = vector.load %arg7[%c0_42, %c0_43] : memref<4x36xf32, #tpu.memory_space<vmem>>, vector<4x36xf32>
    %cst_44 = arith.constant dense<0.000000e+00> : vector<4x256xf32>
    %92 = tpu.matmul %91, %90, %cst_44 {dimension_numbers = #tpu.dot_dimension_numbers<[1], [0], [0], [1], [0, 0, 1, 1], [], []>} : vector<4x36xf32>, vector<36x256xf32>, vector<4x256xf32> -> vector<4x256xf32>
    %c0_45 = arith.constant 0 : index
    %c0_46 = arith.constant 0 : index
    %93 = vector.load %arg9[%c0_45, %c0_46] : memref<4x8xf32, #tpu.memory_space<vmem>>, vector<4x8xf32>
    %94 = vector.shape_cast %1 : vector<8x16x16xf32> to vector<8x256xf32>
    %cst_47 = arith.constant dense<0.000000e+00> : vector<4x256xf32>
    %95 = tpu.matmul %93, %94, %cst_47 {dimension_numbers = #tpu.dot_dimension_numbers<[1], [0], [0], [1], [0, 0, 1, 1], [], []>} : vector<4x8xf32>, vector<8x256xf32>, vector<4x256xf32> -> vector<4x256xf32>
    %c0_48 = arith.constant 0 : index
    %c0_49 = arith.constant 0 : index
    %96 = vector.load %arg10[%c0_48, %c0_49] : memref<4x1xf32, #tpu.memory_space<vmem>>, vector<4x1xf32>
    %97 = vector.broadcast %96 : vector<4x1xf32> to vector<4x256xf32>
    %98 = arith.addf %95, %97 : vector<4x256xf32>
    %c0_50 = arith.constant 0 : index
    %c0_51 = arith.constant 0 : index
    %99 = vector.load %arg8[%c0_50, %c0_51] : memref<4x1xf32, #tpu.memory_space<vmem>>, vector<4x1xf32>
    %100 = vector.broadcast %99 : vector<4x1xf32> to vector<4x256xf32>
    %101 = arith.addf %92, %100 : vector<4x256xf32>
    %102 = arith.addf %101, %98 : vector<4x256xf32>
    %103 = vector.shape_cast %102 : vector<4x256xf32> to vector<1x4x256xf32>
    %c0_52 = arith.constant 0 : index
    %c0_53 = arith.constant 0 : index
    %c0_54 = arith.constant 0 : index
    %104 = vector.load %arg11[%c0_52, %c0_53, %c0_54] : memref<1x4x256xf32, #tpu.memory_space<vmem>>, vector<1x4x256xf32>
    tpu.vector_store %arg11[%c0_52, %c0_53, %c0_54], %103 {strides = array<i32>} : memref<1x4x256xf32, #tpu.memory_space<vmem>>, vector<1x4x256xf32>,
    return
  }
  func.func @transform_0(%arg0: i32) -> (i32, i32, i32, i32) {
    %c0_i32 = arith.constant 0 : i32
    %c0_i32_0 = arith.constant 0 : i32
    %c0_i32_1 = arith.constant 0 : i32
    %c0_i32_2 = arith.constant 0 : i32
    return %arg0, %c0_i32, %c0_i32_0, %c0_i32_1 : i32, i32, i32, i32
  }
  func.func @transform_1(%arg0: i32) -> (i32, i32, i32) {
    %c0_i32 = arith.constant 0 : i32
    %c0_i32_0 = arith.constant 0 : i32
    %c0_i32_1 = arith.constant 0 : i32
    return %arg0, %c0_i32, %c0_i32_0 : i32, i32, i32
  }
  func.func @transform_2(%arg0: i32) -> (i32, i32) {
    %c0_i32 = arith.constant 0 : i32
    %c0_i32_0 = arith.constant 0 : i32
    %c0_i32_1 = arith.constant 0 : i32
    return %c0_i32, %c0_i32_0 : i32, i32
  }
  func.func @transform_3(%arg0: i32) -> (i32, i32) {
    %c0_i32 = arith.constant 0 : i32
    %c0_i32_0 = arith.constant 0 : i32
    %c0_i32_1 = arith.constant 0 : i32
    return %c0_i32, %c0_i32_0 : i32, i32
  }
  func.func @transform_4(%arg0: i32) -> (i32, i32) {
    %c0_i32 = arith.constant 0 : i32
    %c0_i32_0 = arith.constant 0 : i32
    %c0_i32_1 = arith.constant 0 : i32
    return %c0_i32, %c0_i32_0 : i32, i32
  }
  func.func @transform_5(%arg0: i32) -> (i32, i32) {
    %c0_i32 = arith.constant 0 : i32
    %c0_i32_0 = arith.constant 0 : i32
    %c0_i32_1 = arith.constant 0 : i32
    return %c0_i32, %c0_i32_0 : i32, i32
  }
  func.func @transform_6(%arg0: i32) -> (i32, i32) {
    %c0_i32 = arith.constant 0 : i32
    %c0_i32_0 = arith.constant 0 : i32
    %c0_i32_1 = arith.constant 0 : i32
    return %c0_i32, %c0_i32_0 : i32, i32
  }
  func.func @transform_7(%arg0: i32) -> (i32, i32) {
    %c0_i32 = arith.constant 0 : i32
    %c0_i32_0 = arith.constant 0 : i32
    %c0_i32_1 = arith.constant 0 : i32
    return %c0_i32, %c0_i32_0 : i32, i32
  }
  func.func @transform_8(%arg0: i32) -> (i32, i32) {
    %c0_i32 = arith.constant 0 : i32
    %c0_i32_0 = arith.constant 0 : i32
    %c0_i32_1 = arith.constant 0 : i32
    return %c0_i32, %c0_i32_0 : i32, i32
  }
  func.func @transform_9(%arg0: i32) -> (i32, i32) {
    %c0_i32 = arith.constant 0 : i32
    %c0_i32_0 = arith.constant 0 : i32
    %c0_i32_1 = arith.constant 0 : i32
    return %c0_i32, %c0_i32_0 : i32, i32
  }
  func.func @transform_10(%arg0: i32) -> (i32, i32, i32) {
    %c0_i32 = arith.constant 0 : i32
    %c0_i32_0 = arith.constant 0 : i32
    %c0_i32_1 = arith.constant 0 : i32
    return %arg0, %c0_i32, %c0_i32_0 : i32, i32, i32
  }
}

</mosaic_0001>

<llo_original>
// kernel: upblock_forward.1
$region0: #{upblock_forward.1}
  #allocation0 [shape = 'u32[]', space=smem, size = 0x4, offset = 0x4, fixed_abs, tag = 'smem constant byte address 0x4 - core index']
  #allocation1 [shape = 'u32[144,128]{1,0:T(1,128)}', space=vmem, size = 0x12000, scoped, tag = 'internal scratch']
  #allocation2 [shape = 'f32[8,18,18]{2,1,0:T(8,128)}', space=vmem, size = 0x18000, scoped, tag = 'scratch operand']
  #allocation3 [shape = 'f32[4,18,18]{2,1,0:T(8,128)}', space=vmem, size = 0xc000, scoped, tag = 'scratch operand']
  %s0 = inlined_call_operand.hbm [shape: f32[2,8,16,16], index: 0, kind: input, shape index: {}]
  %s1 = inlined_call_operand.vmem [shape: f32[2,1,32], index: 1, kind: input, shape index: {}]
  %s2 = inlined_call_operand.vmem [shape: f32[4,72], index: 2, kind: input, shape index: {}]
  %s3 = inlined_call_operand.vmem [shape: f32[4,1], index: 3, kind: input, shape index: {}]
  %s4 = inlined_call_operand.vmem [shape: f32[4,32], index: 4, kind: input, shape index: {}]
  %s5 = inlined_call_operand.vmem [shape: f32[4,1], index: 5, kind: input, shape index: {}]
  %s6 = inlined_call_operand.vmem [shape: f32[4,36], index: 6, kind: input, shape index: {}]
  %s7 = inlined_call_operand.vmem [shape: f32[4,1], index: 7, kind: input, shape index: {}]
  %s8 = inlined_call_operand.vmem [shape: f32[4,8], index: 8, kind: input, shape index: {}]
  %s9 = inlined_call_operand.vmem [shape: f32[4,1], index: 9, kind: input, shape index: {}]
  %s10 = inlined_call_operand.vmem [shape: f32[2,4,256], index: 10, kind: output, shape index: {}]
  %s11 = sld [smem:[#allocation0]]
  $region77: #{upblock_forward.1} parent=0
    _
  %s13 = ssub.s32 1, %s11
  %s14 = scalar_select 0, %s13, %s11
  $region1: #{upblock_forward.1} parent=0
    #allocation4 [shape = 'u8[131072]{0}', space=vmem, size = 0x20000, scoped, tag = 'input window, operand 0']
    #allocation5 [shape = 's32[2]{0}', space=sflag, size = 0x8, scoped, tag = 'scoped memory for upblock_forward.1']
    %15 = vsyncpa [#allocation5], 0
    %s16 = scalar_lea.sflag [#allocation5], 1
    %17 = vsyncpa %s16, 0
    loop: start=0, step=1, limit=4
    $region2: #{upblock_forward.1} parent=1 // loop_pre_header
      _
    $region3: #{upblock_forward.1} parent=1 // loop_header
      %s19 = sphi 0, %s23
      %p20 = scmp.ge.s32.totalorder %s19, 4
      %s29 = sphi 0, %s31
      %s32 = sphi 0, %s29
      %s33 = sphi 0, %s32
      %s49 = sphi 0, %s33
      %s55 = sphi 0, %s57
      %s58 = sphi 0, %s55
      %s59 = sphi 0, %s58
      %s75 = sphi 0, %s59
      %s79 = sphi 0, %s79
      %s81 = sphi 0, %s79
      %s82 = sphi 0, %s81
      %s96 = sphi 0, %s82
      %s100 = sphi 0, %s100
      %s102 = sphi 0, %s100
      %s103 = sphi 0, %s102
      %s117 = sphi 0, %s103
      %s121 = sphi 0, %s121
      %s123 = sphi 0, %s121
      %s124 = sphi 0, %s123
      %s138 = sphi 0, %s124
      %s142 = sphi 0, %s142
      %s144 = sphi 0, %s142
      %s145 = sphi 0, %s144
      %s159 = sphi 0, %s145
      %s163 = sphi 0, %s163
      %s165 = sphi 0, %s163
      %s166 = sphi 0, %s165
      %s180 = sphi 0, %s166
      %s184 = sphi 0, %s184
      %s186 = sphi 0, %s184
      %s187 = sphi 0, %s186
      %s201 = sphi 0, %s187
      %s205 = sphi 0, %s205
      %s207 = sphi 0, %s205
      %s208 = sphi 0, %s207
      %s222 = sphi 0, %s208
      %s226 = sphi 0, %s226
      %s228 = sphi 0, %s226
      %s229 = sphi 0, %s228
      %s243 = sphi 0, %s229
      %s249 = sphi 0, %s251
      %s252 = sphi 0, %s249
      %s253 = sphi 0, %s252
      %s269 = sphi 0, %s253
    $region4: #{upblock_forward.1} parent=1 // loop_header_branch
      %22 = sbr.rel (%p20) target = $region8
    $region5: #{upblock_forward.1} parent=1 // loop_body
      %s24 = ssub.s32 %s19, 1
      %s25 = ssub.s32 %s19, 2
      %s26 = sadd.s32 %s19, 1
      %s27 = ssub.s32 %s19, %s26
      %p28 = scmp.eq.s32.totalorder %s27, 0
      %s30 = sadd.s32 %s29, 1
      %s31 = scalar_select %p28, %s29, %s30
      %p34 = pneg %p28
      %p35 = scmp.eq.s32.totalorder %s19, 1
      %p36 = por %p34, %p35
      %p37 = scmp.ne.s32.totalorder %s29, %s32
      %p38 = scmp.eq.s32.totalorder %s19, 0
      %p39 = por %p37, %p38
      %p40 = scmp.ne.s32.totalorder %s29, %s32
      %p41 = scmp.eq.s32.totalorder %s24, 1
      %p42 = por %p40, %p41
      %p43 = scmp.ne.s32.totalorder %s32, %s33
      %p44 = scmp.eq.s32.totalorder %s24, 0
      %p45 = por %p43, %p44
      %p46 = scmp.ne.s32.totalorder %s32, %s33
      %p47 = scmp.eq.s32.totalorder %s25, 1
      %p48 = por %p46, %p47
      %p50 = scmp.ne.s32.totalorder %s33, %s49
      %p51 = scmp.eq.s32.totalorder %s25, 0
      %p52 = por %p50, %p51
      %s53 = ssub.s32 %s19, %s26
      %p54 = scmp.eq.s32.totalorder %s53, 0
      %s56 = sadd.s32 %s55, 1
      %s57 = scalar_select %p54, %s55, %s56
      %p60 = pneg %p54
      %p61 = scmp.eq.s32.totalorder %s19, 1
      %p62 = por %p60, %p61
      %p63 = scmp.ne.s32.totalorder %s55, %s58
      %p64 = scmp.eq.s32.totalorder %s19, 0
      %p65 = por %p63, %p64
      %p66 = scmp.ne.s32.totalorder %s55, %s58
      %p67 = scmp.eq.s32.totalorder %s24, 1
      %p68 = por %p66, %p67
      %p69 = scmp.ne.s32.totalorder %s58, %s59
      %p70 = scmp.eq.s32.totalorder %s24, 0
      %p71 = por %p69, %p70
      %p72 = scmp.ne.s32.totalorder %s58, %s59
      %p73 = scmp.eq.s32.totalorder %s25, 1
      %p74 = por %p72, %p73
      %p76 = scmp.ne.s32.totalorder %s59, %s75
      %p77 = scmp.eq.s32.totalorder %s25, 0
      %p78 = por %p76, %p77
      %s80 = sadd.s32 %s79, 1
      %p83 = scmp.eq.s32.totalorder %s19, 1
      %p84 = scmp.ne.s32.totalorder %s79, %s81
      %p85 = scmp.eq.s32.totalorder %s19, 0
      %p86 = por %p84, %p85
      %p87 = scmp.ne.s32.totalorder %s79, %s81
      %p88 = scmp.eq.s32.totalorder %s24, 1
      %p89 = por %p87, %p88
      %p90 = scmp.ne.s32.totalorder %s81, %s82
      %p91 = scmp.eq.s32.totalorder %s24, 0
      %p92 = por %p90, %p91
      %p93 = scmp.ne.s32.totalorder %s81, %s82
      %p94 = scmp.eq.s32.totalorder %s25, 1
      %p95 = por %p93, %p94
      %p97 = scmp.ne.s32.totalorder %s82, %s96
      %p98 = scmp.eq.s32.totalorder %s25, 0
      %p99 = por %p97, %p98
      %s101 = sadd.s32 %s100, 1
      %p104 = scmp.eq.s32.totalorder %s19, 1
      %p105 = scmp.ne.s32.totalorder %s100, %s102
      %p106 = scmp.eq.s32.totalorder %s19, 0
      %p107 = por %p105, %p106
      %p108 = scmp.ne.s32.totalorder %s100, %s102
      %p109 = scmp.eq.s32.totalorder %s24, 1
      %p110 = por %p108, %p109
      %p111 = scmp.ne.s32.totalorder %s102, %s103
      %p112 = scmp.eq.s32.totalorder %s24, 0
      %p113 = por %p111, %p112
      %p114 = scmp.ne.s32.totalorder %s102, %s103
      %p115 = scmp.eq.s32.totalorder %s25, 1
      %p116 = por %p114, %p115
      %p118 = scmp.ne.s32.totalorder %s103, %s117
      %p119 = scmp.eq.s32.totalorder %s25, 0
      %p120 = por %p118, %p119
      %s122 = sadd.s32 %s121, 1
      %p125 = scmp.eq.s32.totalorder %s19, 1
      %p126 = scmp.ne.s32.totalorder %s121, %s123
      %p127 = scmp.eq.s32.totalorder %s19, 0
      %p128 = por %p126, %p127
      %p129 = scmp.ne.s32.totalorder %s121, %s123
      %p130 = scmp.eq.s32.totalorder %s24, 1
      %p131 = por %p129, %p130
      %p132 = scmp.ne.s32.totalorder %s123, %s124
      %p133 = scmp.eq.s32.totalorder %s24, 0
      %p134 = por %p132, %p133
      %p135 = scmp.ne.s32.totalorder %s123, %s124
      %p136 = scmp.eq.s32.totalorder %s25, 1
      %p137 = por %p135, %p136
      %p139 = scmp.ne.s32.totalorder %s124, %s138
      %p140 = scmp.eq.s32.totalorder %s25, 0
      %p141 = por %p139, %p140
      %s143 = sadd.s32 %s142, 1
      %p146 = scmp.eq.s32.totalorder %s19, 1
      %p147 = scmp.ne.s32.totalorder %s142, %s144
      %p148 = scmp.eq.s32.totalorder %s19, 0
      %p149 = por %p147, %p148
      %p150 = scmp.ne.s32.totalorder %s142, %s144
      %p151 = scmp.eq.s32.totalorder %s24, 1
      %p152 = por %p150, %p151
      %p153 = scmp.ne.s32.totalorder %s144, %s145
      %p154 = scmp.eq.s32.totalorder %s24, 0
      %p155 = por %p153, %p154
      %p156 = scmp.ne.s32.totalorder %s144, %s145
      %p157 = scmp.eq.s32.totalorder %s25, 1
      %p158 = por %p156, %p157
      %p160 = scmp.ne.s32.totalorder %s145, %s159
      %p161 = scmp.eq.s32.totalorder %s25, 0
      %p162 = por %p160, %p161
      %s164 = sadd.s32 %s163, 1
      %p167 = scmp.eq.s32.totalorder %s19, 1
      %p168 = scmp.ne.s32.totalorder %s163, %s165
      %p169 = scmp.eq.s32.totalorder %s19, 0
      %p170 = por %p168, %p169
      %p171 = scmp.ne.s32.totalorder %s163, %s165
      %p172 = scmp.eq.s32.totalorder %s24, 1
      %p173 = por %p171, %p172
      %p174 = scmp.ne.s32.totalorder %s165, %s166
      %p175 = scmp.eq.s32.totalorder %s24, 0
      %p176 = por %p174, %p175
      %p177 = scmp.ne.s32.totalorder %s165, %s166
      %p178 = scmp.eq.s32.totalorder %s25, 1
      %p179 = por %p177, %p178
      %p181 = scmp.ne.s32.totalorder %s166, %s180
      %p182 = scmp.eq.s32.totalorder %s25, 0
      %p183 = por %p181, %p182
      %s185 = sadd.s32 %s184, 1
      %p188 = scmp.eq.s32.totalorder %s19, 1
      %p189 = scmp.ne.s32.totalorder %s184, %s186
      %p190 = scmp.eq.s32.totalorder %s19, 0
      %p191 = por %p189, %p190
      %p192 = scmp.ne.s32.totalorder %s184, %s186
      %p193 = scmp.eq.s32.totalorder %s24, 1
      %p194 = por %p192, %p193
      %p195 = scmp.ne.s32.totalorder %s186, %s187
      %p196 = scmp.eq.s32.totalorder %s24, 0
      %p197 = por %p195, %p196
      %p198 = scmp.ne.s32.totalorder %s186, %s187
      %p199 = scmp.eq.s32.totalorder %s25, 1
      %p200 = por %p198, %p199
      %p202 = scmp.ne.s32.totalorder %s187, %s201
      %p203 = scmp.eq.s32.totalorder %s25, 0
      %p204 = por %p202, %p203
      %s206 = sadd.s32 %s205, 1
      %p209 = scmp.eq.s32.totalorder %s19, 1
      %p210 = scmp.ne.s32.totalorder %s205, %s207
      %p211 = scmp.eq.s32.totalorder %s19, 0
      %p212 = por %p210, %p211
      %p213 = scmp.ne.s32.totalorder %s205, %s207
      %p214 = scmp.eq.s32.totalorder %s24, 1
      %p215 = por %p213, %p214
      %p216 = scmp.ne.s32.totalorder %s207, %s208
      %p217 = scmp.eq.s32.totalorder %s24, 0
      %p218 = por %p216, %p217
      %p219 = scmp.ne.s32.totalorder %s207, %s208
      %p220 = scmp.eq.s32.totalorder %s25, 1
      %p221 = por %p219, %p220
      %p223 = scmp.ne.s32.totalorder %s208, %s222
      %p224 = scmp.eq.s32.totalorder %s25, 0
      %p225 = por %p223, %p224
      %s227 = sadd.s32 %s226, 1
      %p230 = scmp.eq.s32.totalorder %s19, 1
      %p231 = scmp.ne.s32.totalorder %s226, %s228
      %p232 = scmp.eq.s32.totalorder %s19, 0
      %p233 = por %p231, %p232
      %p234 = scmp.ne.s32.totalorder %s226, %s228
      %p235 = scmp.eq.s32.totalorder %s24, 1
      %p236 = por %p234, %p235
      %p237 = scmp.ne.s32.totalorder %s228, %s229
      %p238 = scmp.eq.s32.totalorder %s24, 0
      %p239 = por %p237, %p238
      %p240 = scmp.ne.s32.totalorder %s228, %s229
      %p241 = scmp.eq.s32.totalorder %s25, 1
      %p242 = por %p240, %p241
      %p244 = scmp.ne.s32.totalorder %s229, %s243
      %p245 = scmp.eq.s32.totalorder %s25, 0
      %p246 = por %p244, %p245
      %s247 = ssub.s32 %s19, %s26
      %p248 = scmp.eq.s32.totalorder %s247, 0
      %s250 = sadd.s32 %s249, 1
      %s251 = scalar_select %p248, %s249, %s250
      %p254 = pneg %p248
      %p255 = scmp.eq.s32.totalorder %s19, 1
      %p256 = por %p254, %p255
      %p257 = scmp.ne.s32.totalorder %s249, %s252
      %p258 = scmp.eq.s32.totalorder %s19, 0
      %p259 = por %p257, %p258
      %p260 = scmp.ne.s32.totalorder %s249, %s252
      %p261 = scmp.eq.s32.totalorder %s24, 1
      %p262 = por %p260, %p261
      %p263 = scmp.ne.s32.totalorder %s252, %s253
      %p264 = scmp.eq.s32.totalorder %s24, 0
      %p265 = por %p263, %p264
      %p266 = scmp.ne.s32.totalorder %s252, %s253
      %p267 = scmp.eq.s32.totalorder %s25, 1
      %p268 = por %p266, %p267
      %p270 = scmp.ne.s32.totalorder %s253, %s269
      %p271 = scmp.eq.s32.totalorder %s25, 0
      %p272 = por %p270, %p271
      %p273 = scmp.le.s32.totalorder 1, %s19
      %p274 = scmp.lt.s32.totalorder %s19, 3
      %p275 = pnand %p273, %p274
      %p276 = pneg %p275
      // Predicated region
      $region9: #{upblock_forward.1} parent=5 // pred_check
        _
      $region10: #{upblock_forward.1} parent=5 // pred_check_branch
        %278 = sbr.rel (%p275) target = $region12
      $region11: #{upblock_forward.1} parent=5 // pred_region
        %s279 = ssub.s32 %s19, 1
        // Predicated region
        $region13: #{upblock_forward.1} parent=11 // pred_check
          %p280 = pneg %p92
        $region14: #{upblock_forward.1} parent=11 // pred_check_branch
          %282 = sbr.rel (%p280) target = $region16
        $region15: #{upblock_forward.1} parent=11 // pred_region
          _
        $region16: #{upblock_forward.1} parent=11 // pred_fallthru
          _
        // Predicated region
        $region17: #{upblock_forward.1} parent=11 // pred_check
          %p283 = pneg %p113
        $region18: #{upblock_forward.1} parent=11 // pred_check_branch
          %285 = sbr.rel (%p283) target = $region20
        $region19: #{upblock_forward.1} parent=11 // pred_region
          _
        $region20: #{upblock_forward.1} parent=11 // pred_fallthru
          _
        // Predicated region
        $region21: #{upblock_forward.1} parent=11 // pred_check
          %p286 = pneg %p134
        $region22: #{upblock_forward.1} parent=11 // pred_check_branch
          %288 = sbr.rel (%p286) target = $region24
        $region23: #{upblock_forward.1} parent=11 // pred_region
          _
        $region24: #{upblock_forward.1} parent=11 // pred_fallthru
          _
        // Predicated region
        $region25: #{upblock_forward.1} parent=11 // pred_check
          %p289 = pneg %p155
        $region26: #{upblock_forward.1} parent=11 // pred_check_branch
          %291 = sbr.rel (%p289) target = $region28
        $region27: #{upblock_forward.1} parent=11 // pred_region
          _
        $region28: #{upblock_forward.1} parent=11 // pred_fallthru
          _
        // Predicated region
        $region29: #{upblock_forward.1} parent=11 // pred_check
          %p292 = pneg %p176
        $region30: #{upblock_forward.1} parent=11 // pred_check_branch
          %294 = sbr.rel (%p292) target = $region32
        $region31: #{upblock_forward.1} parent=11 // pred_region
          _
        $region32: #{upblock_forward.1} parent=11 // pred_fallthru
          _
        // Predicated region
        $region33: #{upblock_forward.1} parent=11 // pred_check
          %p295 = pneg %p197
        $region34: #{upblock_forward.1} parent=11 // pred_check_branch
          %297 = sbr.rel (%p295) target = $region36
        $region35: #{upblock_forward.1} parent=11 // pred_region
          _
        $region36: #{upblock_forward.1} parent=11 // pred_fallthru
          _
        // Predicated region
        $region37: #{upblock_forward.1} parent=11 // pred_check
          %p298 = pneg %p218
        $region38: #{upblock_forward.1} parent=11 // pred_check_branch
          %300 = sbr.rel (%p298) target = $region40
        $region39: #{upblock_forward.1} parent=11 // pred_region
          _
        $region40: #{upblock_forward.1} parent=11 // pred_fallthru
          _
        // Predicated region
        $region41: #{upblock_forward.1} parent=11 // pred_check
          %p301 = pneg %p239
        $region42: #{upblock_forward.1} parent=11 // pred_check_branch
          %303 = sbr.rel (%p301) target = $region44
        $region43: #{upblock_forward.1} parent=11 // pred_region
          _
        $region44: #{upblock_forward.1} parent=11 // pred_fallthru
          _
      $region12: #{upblock_forward.1} parent=5 // pred_fallthru
        _
      %p304 = scmp.lt.s32.totalorder %s19, 2
      // Predicated region
      $region45: #{upblock_forward.1} parent=5 // pred_check
        %p305 = pneg %p304
      $region46: #{upblock_forward.1} parent=5 // pred_check_branch
        %307 = sbr.rel (%p305) target = $region48
      $region47: #{upblock_forward.1} parent=5 // pred_region
        // Predicated region
        $region49: #{upblock_forward.1} parent=47 // pred_check
          %p308 = pneg %p39
        $region50: #{upblock_forward.1} parent=47 // pred_check_branch
          %310 = sbr.rel (%p308) target = $region52
        $region51: #{upblock_forward.1} parent=47 // pred_region
          %s311 = sand.u32 %s29, 1
          %s312 = scalar_lea.sflag [#allocation5], %s311
          %s313 = sand.u32 %s29, 1
          %s314 = smul.addr %s313, 128
          %s315 = scalar_lea.vmem [#allocation4], %s314
          %s317 = ssub.s32 2048, 2048
          %318 = vsyncadd %s312, %s317
          %s319 = smul.addr %s19, 16
          %s320 = smul.addr %s319, 128
          %s321 = scalar_lea.hbm %s0, %s320
          %s322 = sshll.u32 %s315, 4
          %s323 = int_to_ptr.vmem [resolvable:$true] %s322
          %328 = dma.hbm_to_vmem [thread:$0]  %s321, 2048, %s323, %s312, 128, 128, 8
        $region52: #{upblock_forward.1} parent=47 // pred_fallthru
          _
        // Predicated region
        $region53: #{upblock_forward.1} parent=47 // pred_check
          %p329 = pneg %p65
        $region54: #{upblock_forward.1} parent=47 // pred_check_branch
          %331 = sbr.rel (%p329) target = $region56
        $region55: #{upblock_forward.1} parent=47 // pred_region
          %p332 = scmp.lt.s32.totalorder %s19, 1
          %s333 = scalar_select %p332, %s19, 1
          %s334 = scalar_lea.vmem %s1, %s333
        $region56: #{upblock_forward.1} parent=47 // pred_fallthru
          _
      $region48: #{upblock_forward.1} parent=5 // pred_fallthru
        _
      %p335 = scmp.le.s32.totalorder 1, %s19
      %p336 = scmp.lt.s32.totalorder %s19, 3
      %p337 = pnand %p335, %p336
      %p338 = pneg %p337
      // Predicated region
      $region57: #{upblock_forward.1} parent=5 // pred_check
        _
      $region58: #{upblock_forward.1} parent=5 // pred_check_branch
        %340 = sbr.rel (%p337) target = $region60
      $region59: #{upblock_forward.1} parent=5 // pred_region
        %s341 = ssub.s32 %s19, 1
        %s342 = sand.u32 %s32, 1
        %s343 = scalar_lea.sflag [#allocation5], %s342
        %s344 = sand.u32 %s32, 1
        %s345 = smul.addr %s344, 128
        %s346 = scalar_lea.vmem [#allocation4], %s345
        // Predicated region
        $region61: #{upblock_forward.1} parent=59 // pred_check
          %p347 = pneg %p45
        $region62: #{upblock_forward.1} parent=59 // pred_check_branch
          %349 = sbr.rel (%p347) target = $region64
        $region63: #{upblock_forward.1} parent=59 // pred_region
          %350 = dma.done %s343, 2048
        $region64: #{upblock_forward.1} parent=59 // pred_fallthru
          _
        %s351 = sand.u32 %s32, 1
        %s352 = scalar_lea.sflag [#allocation5], %s351
        %s353 = sand.u32 %s32, 1
        %s354 = smul.addr %s353, 128
        %s355 = scalar_lea.vmem [#allocation4], %s354
        %p356 = pneg %p45
        %p357 = pneg %p42
        %p358 = scmp.lt.s32.totalorder %s24, 1
        %s359 = scalar_select %p358, %s24, 1
        %s360 = scalar_lea.vmem %s1, %s359
        %p361 = pneg %p71
        %p362 = pneg %p68
        %p363 = pneg %p92
        %p364 = pneg %p89
        %p365 = pneg %p113
        %p366 = pneg %p110
        %p367 = pneg %p134
        %p368 = pneg %p131
        %p369 = pneg %p155
        %p370 = pneg %p152
        %p371 = pneg %p176
        %p372 = pneg %p173
        %p373 = pneg %p197
        %p374 = pneg %p194
        %p375 = pneg %p218
        %p376 = pneg %p215
        %p377 = pneg %p239
        %p378 = pneg %p236
        %p379 = pneg %p265
        %p380 = pneg %p262
        %p381 = scmp.lt.s32.totalorder %s24, 1
        %s382 = scalar_select %p381, %s24, 1
        %s383 = smul.addr %s382, 2
        %s384 = smul.addr %s383, 4
        %s385 = scalar_lea.vmem %s10, %s384
        %p386 = scmp.lt.s32.totalorder %s24, 1
        %s387 = scalar_select %p386, %s24, 1
        %s388 = scalar_lea.vmem %s1, %s387
        %p389 = scmp.lt.s32.totalorder %s24, 1
        %s390 = scalar_select %p389, %s24, 1
        %s391 = smul.addr %s390, 2
        %s392 = smul.addr %s391, 4
        %s393 = scalar_lea.vmem %s10, %s392
        %v394 = vld [vmem:[%s346] sm:$0xff]
        %v395 = vld [vmem:[%s346 + $0x8] sm:$0xff]
        %v396 = vld [vmem:[%s346 + $0x10] sm:$0xff]
        %v397 = vld [vmem:[%s346 + $0x18] sm:$0xff]
        %v398 = vld [vmem:[%s346 + $0x20] sm:$0xff]
        %v399 = vld [vmem:[%s346 + $0x28] sm:$0xff]
        %v400 = vld [vmem:[%s346 + $0x30] sm:$0xff]
        %v401 = vld [vmem:[%s346 + $0x38] sm:$0xff]
        %v402 = vld [vmem:[%s346 + $0x40] sm:$0xff]
        %v403 = vld [vmem:[%s346 + $0x48] sm:$0xff]
        %v404 = vld [vmem:[%s346 + $0x50] sm:$0xff]
        %v405 = vld [vmem:[%s346 + $0x58] sm:$0xff]
        %v406 = vld [vmem:[%s346 + $0x60] sm:$0xff]
        %v407 = vld [vmem:[%s346 + $0x68] sm:$0xff]
        %v408 = vld [vmem:[%s346 + $0x70] sm:$0xff]
        %v409 = vld [vmem:[%s346 + $0x78] sm:$0xff]
        %v410 = vmul.f32 %v394, 0.5
        %v411 = vmul.f32 %v395, 0.5
        %v412 = vmul.f32 %v396, 0.5
        %v413 = vmul.f32 %v397, 0.5
        %v414 = vmul.f32 %v398, 0.5
        %v415 = vmul.f32 %v399, 0.5
        %v416 = vmul.f32 %v400, 0.5
        %v417 = vmul.f32 %v401, 0.5
        %v418 = vmul.f32 %v402, 0.5
        %v419 = vmul.f32 %v403, 0.5
        %v420 = vmul.f32 %v404, 0.5
        %v421 = vmul.f32 %v405, 0.5
        %v422 = vmul.f32 %v406, 0.5
        %v423 = vmul.f32 %v407, 0.5
        %v424 = vmul.f32 %v408, 0.5
        %v425 = vmul.f32 %v409, 0.5
        %v426 = vmul.f32 %v394, 0.044715
        %v427 = vmul.f32 %v395, 0.044715
        %v428 = vmul.f32 %v396, 0.044715
        %v429 = vmul.f32 %v397, 0.044715
        %v430 = vmul.f32 %v398, 0.044715
        %v431 = vmul.f32 %v399, 0.044715
        %v432 = vmul.f32 %v400, 0.044715
        %v433 = vmul.f32 %v401, 0.044715
        %v434 = vmul.f32 %v402, 0.044715
        %v435 = vmul.f32 %v403, 0.044715
        %v436 = vmul.f32 %v404, 0.044715
        %v437 = vmul.f32 %v405, 0.044715
        %v438 = vmul.f32 %v406, 0.044715
        %v439 = vmul.f32 %v407, 0.044715
        %v440 = vmul.f32 %v408, 0.044715
        %v441 = vmul.f32 %v409, 0.044715
        %v442 = vmul.f32 %v426, %v394
        %v443 = vmul.f32 %v427, %v395
        %v444 = vmul.f32 %v428, %v396
        %v445 = vmul.f32 %v429, %v397
        %v446 = vmul.f32 %v430, %v398
        %v447 = vmul.f32 %v431, %v399
        %v448 = vmul.f32 %v432, %v400
        %v449 = vmul.f32 %v433, %v401
        %v450 = vmul.f32 %v434, %v402
        %v451 = vmul.f32 %v435, %v403
        %v452 = vmul.f32 %v436, %v404
        %v453 = vmul.f32 %v437, %v405
        %v454 = vmul.f32 %v438, %v406
        %v455 = vmul.f32 %v439, %v407
        %v456 = vmul.f32 %v440, %v408
        %v457 = vmul.f32 %v441, %v409
        %v458 = vmul.f32 %v442, %v394
        %v459 = vmul.f32 %v443, %v395
        %v460 = vmul.f32 %v444, %v396
        %v461 = vmul.f32 %v445, %v397
        %v462 = vmul.f32 %v446, %v398
        %v463 = vmul.f32 %v447, %v399
        %v464 = vmul.f32 %v448, %v400
        %v465 = vmul.f32 %v449, %v401
        %v466 = vmul.f32 %v450, %v402
        %v467 = vmul.f32 %v451, %v403
        %v468 = vmul.f32 %v452, %v404
        %v469 = vmul.f32 %v453, %v405
        %v470 = vmul.f32 %v454, %v406
        %v471 = vmul.f32 %v455, %v407
        %v472 = vmul.f32 %v456, %v408
        %v473 = vmul.f32 %v457, %v409
        %v474 = vadd.f32 %v394, %v458
        %v475 = vadd.f32 %v395, %v459
        %v476 = vadd.f32 %v396, %v460
        %v477 = vadd.f32 %v397, %v461
        %v478 = vadd.f32 %v398, %v462
        %v479 = vadd.f32 %v399, %v463
        %v480 = vadd.f32 %v400, %v464
        %v481 = vadd.f32 %v401, %v465
        %v482 = vadd.f32 %v402, %v466
        %v483 = vadd.f32 %v403, %v467
        %v484 = vadd.f32 %v404, %v468
        %v485 = vadd.f32 %v405, %v469
        %v486 = vadd.f32 %v406, %v470
        %v487 = vadd.f32 %v407, %v471
        %v488 = vadd.f32 %v408, %v472
        %v489 = vadd.f32 %v409, %v473
        %v490 = vmul.f32 %v474, 0.7978846
        %v491 = vmul.f32 %v475, 0.7978846
        %v492 = vmul.f32 %v476, 0.7978846
        %v493 = vmul.f32 %v477, 0.7978846
        %v494 = vmul.f32 %v478, 0.7978846
        %v495 = vmul.f32 %v479, 0.7978846
        %v496 = vmul.f32 %v480, 0.7978846
        %v497 = vmul.f32 %v481, 0.7978846
        %v498 = vmul.f32 %v482, 0.7978846
        %v499 = vmul.f32 %v483, 0.7978846
        %v500 = vmul.f32 %v484, 0.7978846
        %v501 = vmul.f32 %v485, 0.7978846
        %v502 = vmul.f32 %v486, 0.7978846
        %v503 = vmul.f32 %v487, 0.7978846
        %v504 = vmul.f32 %v488, 0.7978846
        %v505 = vmul.f32 %v489, 0.7978846
        %v506 = vtanh.pop %v490
        %v507 = vtanh.pop %v491
        %v508 = vtanh.pop %v492
        %v509 = vtanh.pop %v493
        %v510 = vtanh.pop %v494
        %v511 = vtanh.pop %v495
        %v512 = vtanh.pop %v496
        %v513 = vtanh.pop %v497
        %v514 = vtanh.pop %v498
        %v515 = vtanh.pop %v499
        %v516 = vtanh.pop %v500
        %v517 = vtanh.pop %v501
        %v518 = vtanh.pop %v502
        %v519 = vtanh.pop %v503
        %v520 = vtanh.pop %v504
        %v521 = vtanh.pop %v505
        %v522 = vadd.f32 %v506, 1.0
        %v523 = vadd.f32 %v507, 1.0
        %v524 = vadd.f32 %v508, 1.0
        %v525 = vadd.f32 %v509, 1.0
        %v526 = vadd.f32 %v510, 1.0
        %v527 = vadd.f32 %v511, 1.0
        %v528 = vadd.f32 %v512, 1.0
        %v529 = vadd.f32 %v513, 1.0
        %v530 = vadd.f32 %v514, 1.0
        %v531 = vadd.f32 %v515, 1.0
        %v532 = vadd.f32 %v516, 1.0
        %v533 = vadd.f32 %v517, 1.0
        %v534 = vadd.f32 %v518, 1.0
        %v535 = vadd.f32 %v519, 1.0
        %v536 = vadd.f32 %v520, 1.0
        %v537 = vadd.f32 %v521, 1.0
        %v538 = vmul.f32 %v410, %v522
        %v539 = vmul.f32 %v411, %v523
        %v540 = vmul.f32 %v412, %v524
        %v541 = vmul.f32 %v413, %v525
        %v542 = vmul.f32 %v414, %v526
        %v543 = vmul.f32 %v415, %v527
        %v544 = vmul.f32 %v416, %v528
        %v545 = vmul.f32 %v417, %v529
        %v546 = vmul.f32 %v418, %v530
        %v547 = vmul.f32 %v419, %v531
        %v548 = vmul.f32 %v420, %v532
        %v549 = vmul.f32 %v421, %v533
        %v550 = vmul.f32 %v422, %v534
        %v551 = vmul.f32 %v423, %v535
        %v552 = vmul.f32 %v424, %v536
        %v553 = vmul.f32 %v425, %v537
        %vm554 = vcmask 146432
        %555 = vst.msk [vmem:[#allocation2] sm:$0xff] %vm554, 0.0
        %556 = vst.msk [vmem:[#allocation2 + $0x8] sm:$0xff] %vm554, 0.0
        %vm557 = vcmask 140288
        %558 = vst.msk [vmem:[#allocation2 + $0x10] sm:$0x3] %vm557, 0.0
        %559 = vst.msk [vmem:[#allocation2 + $0x18] sm:$0xff] %vm554, 0.0
        %560 = vst.msk [vmem:[#allocation2 + $0x20] sm:$0xff] %vm554, 0.0
        %561 = vst.msk [vmem:[#allocation2 + $0x28] sm:$0x3] %vm557, 0.0
        %562 = vst.msk [vmem:[#allocation2 + $0x30] sm:$0xff] %vm554, 0.0
        %563 = vst.msk [vmem:[#allocation2 + $0x38] sm:$0xff] %vm554, 0.0
        %564 = vst.msk [vmem:[#allocation2 + $0x40] sm:$0x3] %vm557, 0.0
        %565 = vst.msk [vmem:[#allocation2 + $0x48] sm:$0xff] %vm554, 0.0
        %566 = vst.msk [vmem:[#allocation2 + $0x50] sm:$0xff] %vm554, 0.0
        %567 = vst.msk [vmem:[#allocation2 + $0x58] sm:$0x3] %vm557, 0.0
        %568 = vst.msk [vmem:[#allocation2 + $0x60] sm:$0xff] %vm554, 0.0
        %569 = vst.msk [vmem:[#allocation2 + $0x68] sm:$0xff] %vm554, 0.0
        %570 = vst.msk [vmem:[#allocation2 + $0x70] sm:$0x3] %vm557, 0.0
        %571 = vst.msk [vmem:[#allocation2 + $0x78] sm:$0xff] %vm554, 0.0
        %572 = vst.msk [vmem:[#allocation2 + $0x80] sm:$0xff] %vm554, 0.0
        %573 = vst.msk [vmem:[#allocation2 + $0x88] sm:$0x3] %vm557, 0.0
        %574 = vst.msk [vmem:[#allocation2 + $0x90] sm:$0xff] %vm554, 0.0
        %575 = vst.msk [vmem:[#allocation2 + $0x98] sm:$0xff] %vm554, 0.0
        %576 = vst.msk [vmem:[#allocation2 + $0xa0] sm:$0x3] %vm557, 0.0
        %577 = vst.msk [vmem:[#allocation2 + $0xa8] sm:$0xff] %vm554, 0.0
        %578 = vst.msk [vmem:[#allocation2 + $0xb0] sm:$0xff] %vm554, 0.0
        %579 = vst.msk [vmem:[#allocation2 + $0xb8] sm:$0x3] %vm557, 0.0
        %596 = vrot.lane.b32.xlu0 %v538, 1
        %v597 = vpop.permute.xlu0 %596
        %598 = vrot.lane.b32.xlu0 %v539, 1
        %v599 = vpop.permute.xlu0 %598
        %600 = vrot.lane.b32.xlu0 %v540, 1
        %v601 = vpop.permute.xlu0 %600
        %602 = vrot.lane.b32.xlu0 %v541, 1
        %v603 = vpop.permute.xlu0 %602
        %604 = vrot.lane.b32.xlu0 %v542, 1
        %v605 = vpop.permute.xlu0 %604
        %606 = vrot.lane.b32.xlu0 %v543, 1
        %v607 = vpop.permute.xlu0 %606
        %608 = vrot.lane.b32.xlu0 %v544, 1
        %v609 = vpop.permute.xlu0 %608
        %610 = vrot.lane.b32.xlu0 %v545, 1
        %v611 = vpop.permute.xlu0 %610
        %612 = vrot.lane.b32.xlu0 %v546, 1
        %v613 = vpop.permute.xlu0 %612
        %614 = vrot.lane.b32.xlu0 %v547, 1
        %v615 = vpop.permute.xlu0 %614
        %616 = vrot.lane.b32.xlu0 %v548, 1
        %v617 = vpop.permute.xlu0 %616
        %618 = vrot.lane.b32.xlu0 %v549, 1
        %v619 = vpop.permute.xlu0 %618
        %620 = vrot.lane.b32.xlu0 %v550, 1
        %v621 = vpop.permute.xlu0 %620
        %622 = vrot.lane.b32.xlu0 %v551, 1
        %v623 = vpop.permute.xlu0 %622
        %624 = vrot.lane.b32.xlu0 %v552, 1
        %v625 = vpop.permute.xlu0 %624
        %626 = vrot.lane.b32.xlu0 %v553, 1
        %v627 = vpop.permute.xlu0 %626
        %vm644 = vcmask 138248
        %645 = vst.msk [vmem:[#allocation2 + $0x1] sm:$0xff] %vm644, %v597
        %646 = vst.msk [vmem:[#allocation2 + $0x9] sm:$0xff] %vm644, %v599
        %647 = vst.msk [vmem:[#allocation2 + $0x19] sm:$0xff] %vm644, %v601
        %648 = vst.msk [vmem:[#allocation2 + $0x21] sm:$0xff] %vm644, %v603
        %649 = vst.msk [vmem:[#allocation2 + $0x31] sm:$0xff] %vm644, %v605
        %650 = vst.msk [vmem:[#allocation2 + $0x39] sm:$0xff] %vm644, %v607
        %651 = vst.msk [vmem:[#allocation2 + $0x49] sm:$0xff] %vm644, %v609
        %652 = vst.msk [vmem:[#allocation2 + $0x51] sm:$0xff] %vm644, %v611
        %653 = vst.msk [vmem:[#allocation2 + $0x61] sm:$0xff] %vm644, %v613
        %654 = vst.msk [vmem:[#allocation2 + $0x69] sm:$0xff] %vm644, %v615
        %655 = vst.msk [vmem:[#allocation2 + $0x79] sm:$0xff] %vm644, %v617
        %656 = vst.msk [vmem:[#allocation2 + $0x81] sm:$0xff] %vm644, %v619
        %657 = vst.msk [vmem:[#allocation2 + $0x91] sm:$0xff] %vm644, %v621
        %658 = vst.msk [vmem:[#allocation2 + $0x99] sm:$0xff] %vm644, %v623
        %659 = vst.msk [vmem:[#allocation2 + $0xa9] sm:$0xff] %vm644, %v625
        %660 = vst.msk [vmem:[#allocation2 + $0xb1] sm:$0xff] %vm644, %v627
        %v661 = vld [vmem:[#allocation2] sm:$0xff]
        %v662 = vld [vmem:[#allocation2 + $0x8] sm:$0xff]
        %v663 = vld [vmem:[#allocation2 + $0x10] sm:$0x3]
        %v664 = vld [vmem:[#allocation2 + $0x18] sm:$0xff]
        %v665 = vld [vmem:[#allocation2 + $0x20] sm:$0xff]
        %v666 = vld [vmem:[#allocation2 + $0x28] sm:$0x3]
        %v667 = vld [vmem:[#allocation2 + $0x30] sm:$0xff]
        %v668 = vld [vmem:[#allocation2 + $0x38] sm:$0xff]
        %v669 = vld [vmem:[#allocation2 + $0x40] sm:$0x3]
        %v670 = vld [vmem:[#allocation2 + $0x48] sm:$0xff]
        %v671 = vld [vmem:[#allocation2 + $0x50] sm:$0xff]
        %v672 = vld [vmem:[#allocation2 + $0x58] sm:$0x3]
        %v673 = vld [vmem:[#allocation2 + $0x60] sm:$0xff]
        %v674 = vld [vmem:[#allocation2 + $0x68] sm:$0xff]
        %v675 = vld [vmem:[#allocation2 + $0x70] sm:$0x3]
        %v676 = vld [vmem:[#allocation2 + $0x78] sm:$0xff]
        %v677 = vld [vmem:[#allocation2 + $0x80] sm:$0xff]
        %v678 = vld [vmem:[#allocation2 + $0x88] sm:$0x3]
        %v679 = vld [vmem:[#allocation2 + $0x90] sm:$0xff]
        %v680 = vld [vmem:[#allocation2 + $0x98] sm:$0xff]
        %v681 = vld [vmem:[#allocation2 + $0xa0] sm:$0x3]
        %v682 = vld [vmem:[#allocation2 + $0xa8] sm:$0xff]
        %v683 = vld [vmem:[#allocation2 + $0xb0] sm:$0xff]
        %v684 = vld [vmem:[#allocation2 + $0xb8] sm:$0x3]
        %v685 = vcombine.low %v661, %v667
        %v686 = vcombine.high %v661, %v667
        %v688 = vunpack.c.l.s4 1983009808
        %v689 = vunpack.c.0.s8 %v688
        %v690 = vlaneseq
        %v691 = vshrl.u32 %v690, 7
        %v692 = vsub.s32 %v689, %v691
        %v693 = vrot.slane %v685, %v692
        %v695 = vunpack.c.l.s4 1983009808
        %v696 = vunpack.c.0.s8 %v695
        %v697 = vlaneseq
        %v698 = vshrl.u32 %v697, 7
        %v699 = vsub.s32 %v696, %v698
        %v700 = vrot.slane %v686, %v699
        %v701 = vcombine.low %v664, %v670
        %v702 = vcombine.high %v664, %v670
        %v704 = vunpack.c.l.s4 1983009808
        %v705 = vunpack.c.0.s8 %v704
        %v706 = vlaneseq
        %v707 = vshrl.u32 %v706, 7
        %v708 = vsub.s32 %v705, %v707
        %v709 = vrot.slane %v701, %v708
        %v711 = vunpack.c.l.s4 1983009808
        %v712 = vunpack.c.0.s8 %v711
        %v713 = vlaneseq
        %v714 = vshrl.u32 %v713, 7
        %v715 = vsub.s32 %v712, %v714
        %v716 = vrot.slane %v702, %v715
        %v717 = vcombine.low %v673, %v679
        %v718 = vcombine.high %v673, %v679
        %v720 = vunpack.c.l.s4 1983009808
        %v721 = vunpack.c.0.s8 %v720
        %v722 = vlaneseq
        %v723 = vshrl.u32 %v722, 7
        %v724 = vsub.s32 %v721, %v723
        %v725 = vrot.slane %v717, %v724
        %v727 = vunpack.c.l.s4 1983009808
        %v728 = vunpack.c.0.s8 %v727
        %v729 = vlaneseq
        %v730 = vshrl.u32 %v729, 7
        %v731 = vsub.s32 %v728, %v730
        %v732 = vrot.slane %v718, %v731
        %v733 = vcombine.low %v676, %v682
        %v734 = vcombine.high %v676, %v682
        %v736 = vunpack.c.l.s4 1983009808
        %v737 = vunpack.c.0.s8 %v736
        %v738 = vlaneseq
        %v739 = vshrl.u32 %v738, 7
        %v740 = vsub.s32 %v737, %v739
        %v741 = vrot.slane %v733, %v740
        %v743 = vunpack.c.l.s4 1983009808
        %v744 = vunpack.c.0.s8 %v743
        %v745 = vlaneseq
        %v746 = vshrl.u32 %v745, 7
        %v747 = vsub.s32 %v744, %v746
        %v748 = vrot.slane %v734, %v747
        %v749 = vcombine.low %v693, %v709
        %v750 = vcombine.high %v693, %v709
        %v752 = vunpack.c.l.s4 1934713408
        %v753 = vunpack.c.0.s8 %v752
        %v754 = vlaneseq
        %v755 = vshrl.u32 %v754, 7
        %v756 = vsub.s32 %v753, %v755
        %v757 = vrot.slane %v749, %v756
        %v759 = vunpack.c.l.s4 1934713408
        %v760 = vunpack.c.0.s8 %v759
        %v761 = vlaneseq
        %v762 = vshrl.u32 %v761, 7
        %v763 = vsub.s32 %v760, %v762
        %v764 = vrot.slane %v750, %v763
        %v765 = vcombine.low %v700, %v716
        %v766 = vcombine.high %v700, %v716
        %v768 = vunpack.c.l.s4 1934713408
        %v769 = vunpack.c.0.s8 %v768
        %v770 = vlaneseq
        %v771 = vshrl.u32 %v770, 7
        %v772 = vsub.s32 %v769, %v771
        %v773 = vrot.slane %v765, %v772
        %v775 = vunpack.c.l.s4 1934713408
        %v776 = vunpack.c.0.s8 %v775
        %v777 = vlaneseq
        %v778 = vshrl.u32 %v777, 7
        %v779 = vsub.s32 %v776, %v778
        %v780 = vrot.slane %v766, %v779
        %v781 = vcombine.low %v725, %v741
        %v782 = vcombine.high %v725, %v741
        %v784 = vunpack.c.l.s4 1934713408
        %v785 = vunpack.c.0.s8 %v784
        %v786 = vlaneseq
        %v787 = vshrl.u32 %v786, 7
        %v788 = vsub.s32 %v785, %v787
        %v789 = vrot.slane %v781, %v788
        %v791 = vunpack.c.l.s4 1934713408
        %v792 = vunpack.c.0.s8 %v791
        %v793 = vlaneseq
        %v794 = vshrl.u32 %v793, 7
        %v795 = vsub.s32 %v792, %v794
        %v796 = vrot.slane %v782, %v795
        %v797 = vcombine.low %v732, %v748
        %v798 = vcombine.high %v732, %v748
        %v800 = vunpack.c.l.s4 1934713408
        %v801 = vunpack.c.0.s8 %v800
        %v802 = vlaneseq
        %v803 = vshrl.u32 %v802, 7
        %v804 = vsub.s32 %v801, %v803
        %v805 = vrot.slane %v797, %v804
        %v807 = vunpack.c.l.s4 1934713408
        %v808 = vunpack.c.0.s8 %v807
        %v809 = vlaneseq
        %v810 = vshrl.u32 %v809, 7
        %v811 = vsub.s32 %v808, %v810
        %v812 = vrot.slane %v798, %v811
        %v813 = vcombine.low %v757, %v789
        %v814 = vcombine.high %v757, %v789
        %v815 = vcombine.low %v764, %v796
        %v816 = vcombine.high %v764, %v796
        %v817 = vcombine.low %v773, %v805
        %v818 = vcombine.high %v773, %v805
        %v819 = vcombine.low %v780, %v812
        %v820 = vcombine.high %v780, %v812
        %v821 = vcombine.low %v662, %v668
        %v822 = vcombine.high %v662, %v668
        %v824 = vunpack.c.l.s4 1983009808
        %v825 = vunpack.c.0.s8 %v824
        %v826 = vlaneseq
        %v827 = vshrl.u32 %v826, 7
        %v828 = vsub.s32 %v825, %v827
        %v829 = vrot.slane %v821, %v828
        %v831 = vunpack.c.l.s4 1983009808
        %v832 = vunpack.c.0.s8 %v831
        %v833 = vlaneseq
        %v834 = vshrl.u32 %v833, 7
        %v835 = vsub.s32 %v832, %v834
        %v836 = vrot.slane %v822, %v835
        %v837 = vcombine.low %v665, %v671
        %v838 = vcombine.high %v665, %v671
        %v840 = vunpack.c.l.s4 1983009808
        %v841 = vunpack.c.0.s8 %v840
        %v842 = vlaneseq
        %v843 = vshrl.u32 %v842, 7
        %v844 = vsub.s32 %v841, %v843
        %v845 = vrot.slane %v837, %v844
        %v847 = vunpack.c.l.s4 1983009808
        %v848 = vunpack.c.0.s8 %v847
        %v849 = vlaneseq
        %v850 = vshrl.u32 %v849, 7
        %v851 = vsub.s32 %v848, %v850
        %v852 = vrot.slane %v838, %v851
        %v853 = vcombine.low %v674, %v680
        %v854 = vcombine.high %v674, %v680
        %v856 = vunpack.c.l.s4 1983009808
        %v857 = vunpack.c.0.s8 %v856
        %v858 = vlaneseq
        %v859 = vshrl.u32 %v858, 7
        %v860 = vsub.s32 %v857, %v859
        %v861 = vrot.slane %v853, %v860
        %v863 = vunpack.c.l.s4 1983009808
        %v864 = vunpack.c.0.s8 %v863
        %v865 = vlaneseq
        %v866 = vshrl.u32 %v865, 7
        %v867 = vsub.s32 %v864, %v866
        %v868 = vrot.slane %v854, %v867
        %v869 = vcombine.low %v677, %v683
        %v870 = vcombine.high %v677, %v683
        %v872 = vunpack.c.l.s4 1983009808
        %v873 = vunpack.c.0.s8 %v872
        %v874 = vlaneseq
        %v875 = vshrl.u32 %v874, 7
        %v876 = vsub.s32 %v873, %v875
        %v877 = vrot.slane %v869, %v876
        %v879 = vunpack.c.l.s4 1983009808
        %v880 = vunpack.c.0.s8 %v879
        %v881 = vlaneseq
        %v882 = vshrl.u32 %v881, 7
        %v883 = vsub.s32 %v880, %v882
        %v884 = vrot.slane %v870, %v883
        %v885 = vcombine.low %v829, %v845
        %v886 = vcombine.high %v829, %v845
        %v888 = vunpack.c.l.s4 1934713408
        %v889 = vunpack.c.0.s8 %v888
        %v890 = vlaneseq
        %v891 = vshrl.u32 %v890, 7
        %v892 = vsub.s32 %v889, %v891
        %v893 = vrot.slane %v885, %v892
        %v895 = vunpack.c.l.s4 1934713408
        %v896 = vunpack.c.0.s8 %v895
        %v897 = vlaneseq
        %v898 = vshrl.u32 %v897, 7
        %v899 = vsub.s32 %v896, %v898
        %v900 = vrot.slane %v886, %v899
        %v901 = vcombine.low %v836, %v852
        %v902 = vcombine.high %v836, %v852
        %v904 = vunpack.c.l.s4 1934713408
        %v905 = vunpack.c.0.s8 %v904
        %v906 = vlaneseq
        %v907 = vshrl.u32 %v906, 7
        %v908 = vsub.s32 %v905, %v907
        %v909 = vrot.slane %v901, %v908
        %v911 = vunpack.c.l.s4 1934713408
        %v912 = vunpack.c.0.s8 %v911
        %v913 = vlaneseq
        %v914 = vshrl.u32 %v913, 7
        %v915 = vsub.s32 %v912, %v914
        %v916 = vrot.slane %v902, %v915
        %v917 = vcombine.low %v861, %v877
        %v918 = vcombine.high %v861, %v877
        %v920 = vunpack.c.l.s4 1934713408
        %v921 = vunpack.c.0.s8 %v920
        %v922 = vlaneseq
        %v923 = vshrl.u32 %v922, 7
        %v924 = vsub.s32 %v921, %v923
        %v925 = vrot.slane %v917, %v924
        %v927 = vunpack.c.l.s4 1934713408
        %v928 = vunpack.c.0.s8 %v927
        %v929 = vlaneseq
        %v930 = vshrl.u32 %v929, 7
        %v931 = vsub.s32 %v928, %v930
        %v932 = vrot.slane %v918, %v931
        %v933 = vcombine.low %v868, %v884
        %v934 = vcombine.high %v868, %v884
        %v936 = vunpack.c.l.s4 1934713408
        %v937 = vunpack.c.0.s8 %v936
        %v938 = vlaneseq
        %v939 = vshrl.u32 %v938, 7
        %v940 = vsub.s32 %v937, %v939
        %v941 = vrot.slane %v933, %v940
        %v943 = vunpack.c.l.s4 1934713408
        %v944 = vunpack.c.0.s8 %v943
        %v945 = vlaneseq
        %v946 = vshrl.u32 %v945, 7
        %v947 = vsub.s32 %v944, %v946
        %v948 = vrot.slane %v934, %v947
        %v949 = vcombine.low %v893, %v925
        %v950 = vcombine.high %v893, %v925
        %v951 = vcombine.low %v900, %v932
        %v952 = vcombine.high %v900, %v932
        %v953 = vcombine.low %v909, %v941
        %v954 = vcombine.high %v909, %v941
        %v955 = vcombine.low %v916, %v948
        %v956 = vcombine.high %v916, %v948
        %958 = vrot.lane.b32.xlu0 %v814, 16
        %v959 = vpop.permute.xlu0 %958
        %962 = vrot.lane.b32.xlu0 %v815, 32
        %v963 = vpop.permute.xlu0 %962
        %966 = vrot.lane.b32.xlu0 %v816, 48
        %v967 = vpop.permute.xlu0 %966
        %970 = vrot.lane.b32.xlu0 %v817, 64
        %v971 = vpop.permute.xlu0 %970
        %974 = vrot.lane.b32.xlu0 %v818, 80
        %v975 = vpop.permute.xlu0 %974
        %978 = vrot.lane.b32.xlu0 %v819, 96
        %v979 = vpop.permute.xlu0 %978
        %982 = vrot.lane.b32.xlu0 %v820, 112
        %v983 = vpop.permute.xlu0 %982
        %986 = vrot.lane.b32.xlu0 %v950, 16
        %v987 = vpop.permute.xlu0 %986
        %990 = vrot.lane.b32.xlu0 %v951, 32
        %v991 = vpop.permute.xlu0 %990
        %994 = vrot.lane.b32.xlu0 %v952, 48
        %v995 = vpop.permute.xlu0 %994
        %998 = vrot.lane.b32.xlu0 %v953, 64
        %v999 = vpop.permute.xlu0 %998
        %1002 = vrot.lane.b32.xlu0 %v954, 80
        %v1003 = vpop.permute.xlu0 %1002
        %1006 = vrot.lane.b32.xlu0 %v955, 96
        %v1007 = vpop.permute.xlu0 %1006
        %1010 = vrot.lane.b32.xlu0 %v956, 112
        %v1011 = vpop.permute.xlu0 %1010
        %vm1013 = vcmask 130048
        %v1014 = vsel %vm1013, %v813, %v959
        %vm1015 = vcmask 261120
        %v1016 = vsel %vm1015, %v1014, %v963
        %vm1017 = vcmask 392192
        %v1018 = vsel %vm1017, %v1016, %v967
        %vm1019 = vcmask 523264
        %v1020 = vsel %vm1019, %v1018, %v971
        %vm1021 = vcmask 654336
        %v1022 = vsel %vm1021, %v1020, %v975
        %vm1023 = vcmask 785408
        %v1024 = vsel %vm1023, %v1022, %v979
        %vm1025 = vcmask 916480
        %v1026 = vsel %vm1025, %v1024, %v983
        %v1027 = vsel %vm1013, %v949, %v987
        %v1028 = vsel %vm1015, %v1027, %v991
        %v1029 = vsel %vm1017, %v1028, %v995
        %v1030 = vsel %vm1019, %v1029, %v999
        %v1031 = vsel %vm1021, %v1030, %v1003
        %v1032 = vsel %vm1023, %v1031, %v1007
        %v1033 = vsel %vm1025, %v1032, %v1011
        %1050 = vrot.lane.b32.xlu0 %v661, 127
        %v1051 = vpop.permute.xlu0 %1050
        %1052 = vrot.lane.b32.xlu0 %v662, 127
        %v1053 = vpop.permute.xlu0 %1052
        %1054 = vrot.lane.b32.xlu0 %v664, 127
        %v1055 = vpop.permute.xlu0 %1054
        %1056 = vrot.lane.b32.xlu0 %v665, 127
        %v1057 = vpop.permute.xlu0 %1056
        %1058 = vrot.lane.b32.xlu0 %v667, 127
        %v1059 = vpop.permute.xlu0 %1058
        %1060 = vrot.lane.b32.xlu0 %v668, 127
        %v1061 = vpop.permute.xlu0 %1060
        %1062 = vrot.lane.b32.xlu0 %v670, 127
        %v1063 = vpop.permute.xlu0 %1062
        %1064 = vrot.lane.b32.xlu0 %v671, 127
        %v1065 = vpop.permute.xlu0 %1064
        %1066 = vrot.lane.b32.xlu0 %v673, 127
        %v1067 = vpop.permute.xlu0 %1066
        %1068 = vrot.lane.b32.xlu0 %v674, 127
        %v1069 = vpop.permute.xlu0 %1068
        %1070 = vrot.lane.b32.xlu0 %v676, 127
        %v1071 = vpop.permute.xlu0 %1070
        %1072 = vrot.lane.b32.xlu0 %v677, 127
        %v1073 = vpop.permute.xlu0 %1072
        %1074 = vrot.lane.b32.xlu0 %v679, 127
        %v1075 = vpop.permute.xlu0 %1074
        %1076 = vrot.lane.b32.xlu0 %v680, 127
        %v1077 = vpop.permute.xlu0 %1076
        %1078 = vrot.lane.b32.xlu0 %v682, 127
        %v1079 = vpop.permute.xlu0 %1078
        %1080 = vrot.lane.b32.xlu0 %v683, 127
        %v1081 = vpop.permute.xlu0 %1080
        %v1098 = vcombine.low %v1051, %v1059
        %v1099 = vcombine.high %v1051, %v1059
        %v1101 = vunpack.c.l.s4 1983009808
        %v1102 = vunpack.c.0.s8 %v1101
        %v1103 = vlaneseq
        %v1104 = vshrl.u32 %v1103, 7
        %v1105 = vsub.s32 %v1102, %v1104
        %v1106 = vrot.slane %v1098, %v1105
        %v1108 = vunpack.c.l.s4 1983009808
        %v1109 = vunpack.c.0.s8 %v1108
        %v1110 = vlaneseq
        %v1111 = vshrl.u32 %v1110, 7
        %v1112 = vsub.s32 %v1109, %v1111
        %v1113 = vrot.slane %v1099, %v1112
        %v1114 = vcombine.low %v1055, %v1063
        %v1115 = vcombine.high %v1055, %v1063
        %v1117 = vunpack.c.l.s4 1983009808
        %v1118 = vunpack.c.0.s8 %v1117
        %v1119 = vlaneseq
        %v1120 = vshrl.u32 %v1119, 7
        %v1121 = vsub.s32 %v1118, %v1120
        %v1122 = vrot.slane %v1114, %v1121
        %v1124 = vunpack.c.l.s4 1983009808
        %v1125 = vunpack.c.0.s8 %v1124
        %v1126 = vlaneseq
        %v1127 = vshrl.u32 %v1126, 7
        %v1128 = vsub.s32 %v1125, %v1127
        %v1129 = vrot.slane %v1115, %v1128
        %v1130 = vcombine.low %v1067, %v1075
        %v1131 = vcombine.high %v1067, %v1075
        %v1133 = vunpack.c.l.s4 1983009808
        %v1134 = vunpack.c.0.s8 %v1133
        %v1135 = vlaneseq
        %v1136 = vshrl.u32 %v1135, 7
        %v1137 = vsub.s32 %v1134, %v1136
        %v1138 = vrot.slane %v1130, %v1137
        %v1140 = vunpack.c.l.s4 1983009808
        %v1141 = vunpack.c.0.s8 %v1140
        %v1142 = vlaneseq
        %v1143 = vshrl.u32 %v1142, 7
        %v1144 = vsub.s32 %v1141, %v1143
        %v1145 = vrot.slane %v1131, %v1144
        %v1146 = vcombine.low %v1071, %v1079
        %v1147 = vcombine.high %v1071, %v1079
        %v1149 = vunpack.c.l.s4 1983009808
        %v1150 = vunpack.c.0.s8 %v1149
        %v1151 = vlaneseq
        %v1152 = vshrl.u32 %v1151, 7
        %v1153 = vsub.s32 %v1150, %v1152
        %v1154 = vrot.slane %v1146, %v1153
        %v1156 = vunpack.c.l.s4 1983009808
        %v1157 = vunpack.c.0.s8 %v1156
        %v1158 = vlaneseq
        %v1159 = vshrl.u32 %v1158, 7
        %v1160 = vsub.s32 %v1157, %v1159
        %v1161 = vrot.slane %v1147, %v1160
        %v1162 = vcombine.low %v1106, %v1122
        %v1163 = vcombine.high %v1106, %v1122
        %v1165 = vunpack.c.l.s4 1934713408
        %v1166 = vunpack.c.0.s8 %v1165
        %v1167 = vlaneseq
        %v1168 = vshrl.u32 %v1167, 7
        %v1169 = vsub.s32 %v1166, %v1168
        %v1170 = vrot.slane %v1162, %v1169
        %v1172 = vunpack.c.l.s4 1934713408
        %v1173 = vunpack.c.0.s8 %v1172
        %v1174 = vlaneseq
        %v1175 = vshrl.u32 %v1174, 7
        %v1176 = vsub.s32 %v1173, %v1175
        %v1177 = vrot.slane %v1163, %v1176
        %v1178 = vcombine.low %v1113, %v1129
        %v1179 = vcombine.high %v1113, %v1129
        %v1181 = vunpack.c.l.s4 1934713408
        %v1182 = vunpack.c.0.s8 %v1181
        %v1183 = vlaneseq
        %v1184 = vshrl.u32 %v1183, 7
        %v1185 = vsub.s32 %v1182, %v1184
        %v1186 = vrot.slane %v1178, %v1185
        %v1188 = vunpack.c.l.s4 1934713408
        %v1189 = vunpack.c.0.s8 %v1188
        %v1190 = vlaneseq
        %v1191 = vshrl.u32 %v1190, 7
        %v1192 = vsub.s32 %v1189, %v1191
        %v1193 = vrot.slane %v1179, %v1192
        %v1194 = vcombine.low %v1138, %v1154
        %v1195 = vcombine.high %v1138, %v1154
        %v1197 = vunpack.c.l.s4 1934713408
        %v1198 = vunpack.c.0.s8 %v1197
        %v1199 = vlaneseq
        %v1200 = vshrl.u32 %v1199, 7
        %v1201 = vsub.s32 %v1198, %v1200
        %v1202 = vrot.slane %v1194, %v1201
        %v1204 = vunpack.c.l.s4 1934713408
        %v1205 = vunpack.c.0.s8 %v1204
        %v1206 = vlaneseq
        %v1207 = vshrl.u32 %v1206, 7
        %v1208 = vsub.s32 %v1205, %v1207
        %v1209 = vrot.slane %v1195, %v1208
        %v1210 = vcombine.low %v1145, %v1161
        %v1211 = vcombine.high %v1145, %v1161
        %v1213 = vunpack.c.l.s4 1934713408
        %v1214 = vunpack.c.0.s8 %v1213
        %v1215 = vlaneseq
        %v1216 = vshrl.u32 %v1215, 7
        %v1217 = vsub.s32 %v1214, %v1216
        %v1218 = vrot.slane %v1210, %v1217
        %v1220 = vunpack.c.l.s4 1934713408
        %v1221 = vunpack.c.0.s8 %v1220
        %v1222 = vlaneseq
        %v1223 = vshrl.u32 %v1222, 7
        %v1224 = vsub.s32 %v1221, %v1223
        %v1225 = vrot.slane %v1211, %v1224
        %v1226 = vcombine.low %v1170, %v1202
        %v1227 = vcombine.high %v1170, %v1202
        %v1228 = vcombine.low %v1177, %v1209
        %v1229 = vcombine.high %v1177, %v1209
        %v1230 = vcombine.low %v1186, %v1218
        %v1231 = vcombine.high %v1186, %v1218
        %v1232 = vcombine.low %v1193, %v1225
        %v1233 = vcombine.high %v1193, %v1225
        %v1234 = vcombine.low %v1053, %v1061
        %v1235 = vcombine.high %v1053, %v1061
        %v1237 = vunpack.c.l.s4 1983009808
        %v1238 = vunpack.c.0.s8 %v1237
        %v1239 = vlaneseq
        %v1240 = vshrl.u32 %v1239, 7
        %v1241 = vsub.s32 %v1238, %v1240
        %v1242 = vrot.slane %v1234, %v1241
        %v1244 = vunpack.c.l.s4 1983009808
        %v1245 = vunpack.c.0.s8 %v1244
        %v1246 = vlaneseq
        %v1247 = vshrl.u32 %v1246, 7
        %v1248 = vsub.s32 %v1245, %v1247
        %v1249 = vrot.slane %v1235, %v1248
        %v1250 = vcombine.low %v1057, %v1065
        %v1251 = vcombine.high %v1057, %v1065
        %v1253 = vunpack.c.l.s4 1983009808
        %v1254 = vunpack.c.0.s8 %v1253
        %v1255 = vlaneseq
        %v1256 = vshrl.u32 %v1255, 7
        %v1257 = vsub.s32 %v1254, %v1256
        %v1258 = vrot.slane %v1250, %v1257
        %v1260 = vunpack.c.l.s4 1983009808
        %v1261 = vunpack.c.0.s8 %v1260
        %v1262 = vlaneseq
        %v1263 = vshrl.u32 %v1262, 7
        %v1264 = vsub.s32 %v1261, %v1263
        %v1265 = vrot.slane %v1251, %v1264
        %v1266 = vcombine.low %v1069, %v1077
        %v1267 = vcombine.high %v1069, %v1077
        %v1269 = vunpack.c.l.s4 1983009808
        %v1270 = vunpack.c.0.s8 %v1269
        %v1271 = vlaneseq
        %v1272 = vshrl.u32 %v1271, 7
        %v1273 = vsub.s32 %v1270, %v1272
        %v1274 = vrot.slane %v1266, %v1273
        %v1276 = vunpack.c.l.s4 1983009808
        %v1277 = vunpack.c.0.s8 %v1276
        %v1278 = vlaneseq
        %v1279 = vshrl.u32 %v1278, 7
        %v1280 = vsub.s32 %v1277, %v1279
        %v1281 = vrot.slane %v1267, %v1280
        %v1282 = vcombine.low %v1073, %v1081
        %v1283 = vcombine.high %v1073, %v1081
        %v1285 = vunpack.c.l.s4 1983009808
        %v1286 = vunpack.c.0.s8 %v1285
        %v1287 = vlaneseq
        %v1288 = vshrl.u32 %v1287, 7
        %v1289 = vsub.s32 %v1286, %v1288
        %v1290 = vrot.slane %v1282, %v1289
        %v1292 = vunpack.c.l.s4 1983009808
        %v1293 = vunpack.c.0.s8 %v1292
        %v1294 = vlaneseq
        %v1295 = vshrl.u32 %v1294, 7
        %v1296 = vsub.s32 %v1293, %v1295
        %v1297 = vrot.slane %v1283, %v1296
        %v1298 = vcombine.low %v1242, %v1258
        %v1299 = vcombine.high %v1242, %v1258
        %v1301 = vunpack.c.l.s4 1934713408
        %v1302 = vunpack.c.0.s8 %v1301
        %v1303 = vlaneseq
        %v1304 = vshrl.u32 %v1303, 7
        %v1305 = vsub.s32 %v1302, %v1304
        %v1306 = vrot.slane %v1298, %v1305
        %v1308 = vunpack.c.l.s4 1934713408
        %v1309 = vunpack.c.0.s8 %v1308
        %v1310 = vlaneseq
        %v1311 = vshrl.u32 %v1310, 7
        %v1312 = vsub.s32 %v1309, %v1311
        %v1313 = vrot.slane %v1299, %v1312
        %v1314 = vcombine.low %v1249, %v1265
        %v1315 = vcombine.high %v1249, %v1265
        %v1317 = vunpack.c.l.s4 1934713408
        %v1318 = vunpack.c.0.s8 %v1317
        %v1319 = vlaneseq
        %v1320 = vshrl.u32 %v1319, 7
        %v1321 = vsub.s32 %v1318, %v1320
        %v1322 = vrot.slane %v1314, %v1321
        %v1324 = vunpack.c.l.s4 1934713408
        %v1325 = vunpack.c.0.s8 %v1324
        %v1326 = vlaneseq
        %v1327 = vshrl.u32 %v1326, 7
        %v1328 = vsub.s32 %v1325, %v1327
        %v1329 = vrot.slane %v1315, %v1328
        %v1330 = vcombine.low %v1274, %v1290
        %v1331 = vcombine.high %v1274, %v1290
        %v1333 = vunpack.c.l.s4 1934713408
        %v1334 = vunpack.c.0.s8 %v1333
        %v1335 = vlaneseq
        %v1336 = vshrl.u32 %v1335, 7
        %v1337 = vsub.s32 %v1334, %v1336
        %v1338 = vrot.slane %v1330, %v1337
        %v1340 = vunpack.c.l.s4 1934713408
        %v1341 = vunpack.c.0.s8 %v1340
        %v1342 = vlaneseq
        %v1343 = vshrl.u32 %v1342, 7
        %v1344 = vsub.s32 %v1341, %v1343
        %v1345 = vrot.slane %v1331, %v1344
        %v1346 = vcombine.low %v1281, %v1297
        %v1347 = vcombine.high %v1281, %v1297
        %v1349 = vunpack.c.l.s4 1934713408
        %v1350 = vunpack.c.0.s8 %v1349
        %v1351 = vlaneseq
        %v1352 = vshrl.u32 %v1351, 7
        %v1353 = vsub.s32 %v1350, %v1352
        %v1354 = vrot.slane %v1346, %v1353
        %v1356 = vunpack.c.l.s4 1934713408
        %v1357 = vunpack.c.0.s8 %v1356
        %v1358 = vlaneseq
        %v1359 = vshrl.u32 %v1358, 7
        %v1360 = vsub.s32 %v1357, %v1359
        %v1361 = vrot.slane %v1347, %v1360
        %v1362 = vcombine.low %v1306, %v1338
        %v1363 = vcombine.high %v1306, %v1338
        %v1364 = vcombine.low %v1313, %v1345
        %v1365 = vcombine.high %v1313, %v1345
        %v1366 = vcombine.low %v1322, %v1354
        %v1367 = vcombine.high %v1322, %v1354
        %v1368 = vcombine.low %v1329, %v1361
        %v1369 = vcombine.high %v1329, %v1361
        %1371 = vrot.lane.b32.xlu0 %v1227, 16
        %v1372 = vpop.permute.xlu0 %1371
        %1375 = vrot.lane.b32.xlu0 %v1228, 32
        %v1376 = vpop.permute.xlu0 %1375
        %1379 = vrot.lane.b32.xlu0 %v1229, 48
        %v1380 = vpop.permute.xlu0 %1379
        %1383 = vrot.lane.b32.xlu0 %v1230, 64
        %v1384 = vpop.permute.xlu0 %1383
        %1387 = vrot.lane.b32.xlu0 %v1231, 80
        %v1388 = vpop.permute.xlu0 %1387
        %1391 = vrot.lane.b32.xlu0 %v1232, 96
        %v1392 = vpop.permute.xlu0 %1391
        %1395 = vrot.lane.b32.xlu0 %v1233, 112
        %v1396 = vpop.permute.xlu0 %1395
        %1399 = vrot.lane.b32.xlu0 %v1363, 16
        %v1400 = vpop.permute.xlu0 %1399
        %1403 = vrot.lane.b32.xlu0 %v1364, 32
        %v1404 = vpop.permute.xlu0 %1403
        %1407 = vrot.lane.b32.xlu0 %v1365, 48
        %v1408 = vpop.permute.xlu0 %1407
        %1411 = vrot.lane.b32.xlu0 %v1366, 64
        %v1412 = vpop.permute.xlu0 %1411
        %1415 = vrot.lane.b32.xlu0 %v1367, 80
        %v1416 = vpop.permute.xlu0 %1415
        %1419 = vrot.lane.b32.xlu0 %v1368, 96
        %v1420 = vpop.permute.xlu0 %1419
        %1423 = vrot.lane.b32.xlu0 %v1369, 112
        %v1424 = vpop.permute.xlu0 %1423
        %v1426 = vsel %vm1013, %v1226, %v1372
        %v1427 = vsel %vm1015, %v1426, %v1376
        %v1428 = vsel %vm1017, %v1427, %v1380
        %v1429 = vsel %vm1019, %v1428, %v1384
        %v1430 = vsel %vm1021, %v1429, %v1388
        %v1431 = vsel %vm1023, %v1430, %v1392
        %v1432 = vsel %vm1025, %v1431, %v1396
        %v1433 = vsel %vm1013, %v1362, %v1400
        %v1434 = vsel %vm1015, %v1433, %v1404
        %v1435 = vsel %vm1017, %v1434, %v1408
        %v1436 = vsel %vm1019, %v1435, %v1412
        %v1437 = vsel %vm1021, %v1436, %v1416
        %v1438 = vsel %vm1023, %v1437, %v1420
        %v1439 = vsel %vm1025, %v1438, %v1424
        %1440 = vrot.lane.b32.xlu0 %v661, 126
        %v1441 = vpop.permute.xlu0 %1440
        %1442 = vrot.lane.b32.xlu0 %v662, 126
        %v1443 = vpop.permute.xlu0 %1442
        %1444 = vrot.lane.b32.xlu0 %v664, 126
        %v1445 = vpop.permute.xlu0 %1444
        %1446 = vrot.lane.b32.xlu0 %v665, 126
        %v1447 = vpop.permute.xlu0 %1446
        %1448 = vrot.lane.b32.xlu0 %v667, 126
        %v1449 = vpop.permute.xlu0 %1448
        %1450 = vrot.lane.b32.xlu0 %v668, 126
        %v1451 = vpop.permute.xlu0 %1450
        %1452 = vrot.lane.b32.xlu0 %v670, 126
        %v1453 = vpop.permute.xlu0 %1452
        %1454 = vrot.lane.b32.xlu0 %v671, 126
        %v1455 = vpop.permute.xlu0 %1454
        %1456 = vrot.lane.b32.xlu0 %v673, 126
        %v1457 = vpop.permute.xlu0 %1456
        %1458 = vrot.lane.b32.xlu0 %v674, 126
        %v1459 = vpop.permute.xlu0 %1458
        %1460 = vrot.lane.b32.xlu0 %v676, 126
        %v1461 = vpop.permute.xlu0 %1460
        %1462 = vrot.lane.b32.xlu0 %v677, 126
        %v1463 = vpop.permute.xlu0 %1462
        %1464 = vrot.lane.b32.xlu0 %v679, 126
        %v1465 = vpop.permute.xlu0 %1464
        %1466 = vrot.lane.b32.xlu0 %v680, 126
        %v1467 = vpop.permute.xlu0 %1466
        %1468 = vrot.lane.b32.xlu0 %v682, 126
        %v1469 = vpop.permute.xlu0 %1468
        %1470 = vrot.lane.b32.xlu0 %v683, 126
        %v1471 = vpop.permute.xlu0 %1470
        %v1488 = vcombine.low %v1441, %v1449
        %v1489 = vcombine.high %v1441, %v1449
        %v1491 = vunpack.c.l.s4 1983009808
        %v1492 = vunpack.c.0.s8 %v1491
        %v1493 = vlaneseq
        %v1494 = vshrl.u32 %v1493, 7
        %v1495 = vsub.s32 %v1492, %v1494
        %v1496 = vrot.slane %v1488, %v1495
        %v1498 = vunpack.c.l.s4 1983009808
        %v1499 = vunpack.c.0.s8 %v1498
        %v1500 = vlaneseq
        %v1501 = vshrl.u32 %v1500, 7
        %v1502 = vsub.s32 %v1499, %v1501
        %v1503 = vrot.slane %v1489, %v1502
        %v1504 = vcombine.low %v1445, %v1453
        %v1505 = vcombine.high %v1445, %v1453
        %v1507 = vunpack.c.l.s4 1983009808
        %v1508 = vunpack.c.0.s8 %v1507
        %v1509 = vlaneseq
        %v1510 = vshrl.u32 %v1509, 7
        %v1511 = vsub.s32 %v1508, %v1510
        %v1512 = vrot.slane %v1504, %v1511
        %v1514 = vunpack.c.l.s4 1983009808
        %v1515 = vunpack.c.0.s8 %v1514
        %v1516 = vlaneseq
        %v1517 = vshrl.u32 %v1516, 7
        %v1518 = vsub.s32 %v1515, %v1517
        %v1519 = vrot.slane %v1505, %v1518
        %v1520 = vcombine.low %v1457, %v1465
        %v1521 = vcombine.high %v1457, %v1465
        %v1523 = vunpack.c.l.s4 1983009808
        %v1524 = vunpack.c.0.s8 %v1523
        %v1525 = vlaneseq
        %v1526 = vshrl.u32 %v1525, 7
        %v1527 = vsub.s32 %v1524, %v1526
        %v1528 = vrot.slane %v1520, %v1527
        %v1530 = vunpack.c.l.s4 1983009808
        %v1531 = vunpack.c.0.s8 %v1530
        %v1532 = vlaneseq
        %v1533 = vshrl.u32 %v1532, 7
        %v1534 = vsub.s32 %v1531, %v1533
        %v1535 = vrot.slane %v1521, %v1534
        %v1536 = vcombine.low %v1461, %v1469
        %v1537 = vcombine.high %v1461, %v1469
        %v1539 = vunpack.c.l.s4 1983009808
        %v1540 = vunpack.c.0.s8 %v1539
        %v1541 = vlaneseq
        %v1542 = vshrl.u32 %v1541, 7
        %v1543 = vsub.s32 %v1540, %v1542
        %v1544 = vrot.slane %v1536, %v1543
        %v1546 = vunpack.c.l.s4 1983009808
        %v1547 = vunpack.c.0.s8 %v1546
        %v1548 = vlaneseq
        %v1549 = vshrl.u32 %v1548, 7
        %v1550 = vsub.s32 %v1547, %v1549
        %v1551 = vrot.slane %v1537, %v1550
        %v1552 = vcombine.low %v1496, %v1512
        %v1553 = vcombine.high %v1496, %v1512
        %v1555 = vunpack.c.l.s4 1934713408
        %v1556 = vunpack.c.0.s8 %v1555
        %v1557 = vlaneseq
        %v1558 = vshrl.u32 %v1557, 7
        %v1559 = vsub.s32 %v1556, %v1558
        %v1560 = vrot.slane %v1552, %v1559
        %v1562 = vunpack.c.l.s4 1934713408
        %v1563 = vunpack.c.0.s8 %v1562
        %v1564 = vlaneseq
        %v1565 = vshrl.u32 %v1564, 7
        %v1566 = vsub.s32 %v1563, %v1565
        %v1567 = vrot.slane %v1553, %v1566
        %v1568 = vcombine.low %v1503, %v1519
        %v1569 = vcombine.high %v1503, %v1519
        %v1571 = vunpack.c.l.s4 1934713408
        %v1572 = vunpack.c.0.s8 %v1571
        %v1573 = vlaneseq
        %v1574 = vshrl.u32 %v1573, 7
        %v1575 = vsub.s32 %v1572, %v1574
        %v1576 = vrot.slane %v1568, %v1575
        %v1578 = vunpack.c.l.s4 1934713408
        %v1579 = vunpack.c.0.s8 %v1578
        %v1580 = vlaneseq
        %v1581 = vshrl.u32 %v1580, 7
        %v1582 = vsub.s32 %v1579, %v1581
        %v1583 = vrot.slane %v1569, %v1582
        %v1584 = vcombine.low %v1528, %v1544
        %v1585 = vcombine.high %v1528, %v1544
        %v1587 = vunpack.c.l.s4 1934713408
        %v1588 = vunpack.c.0.s8 %v1587
        %v1589 = vlaneseq
        %v1590 = vshrl.u32 %v1589, 7
        %v1591 = vsub.s32 %v1588, %v1590
        %v1592 = vrot.slane %v1584, %v1591
        %v1594 = vunpack.c.l.s4 1934713408
        %v1595 = vunpack.c.0.s8 %v1594
        %v1596 = vlaneseq
        %v1597 = vshrl.u32 %v1596, 7
        %v1598 = vsub.s32 %v1595, %v1597
        %v1599 = vrot.slane %v1585, %v1598
        %v1600 = vcombine.low %v1535, %v1551
        %v1601 = vcombine.high %v1535, %v1551
        %v1603 = vunpack.c.l.s4 1934713408
        %v1604 = vunpack.c.0.s8 %v1603
        %v1605 = vlaneseq
        %v1606 = vshrl.u32 %v1605, 7
        %v1607 = vsub.s32 %v1604, %v1606
        %v1608 = vrot.slane %v1600, %v1607
        %v1610 = vunpack.c.l.s4 1934713408
        %v1611 = vunpack.c.0.s8 %v1610
        %v1612 = vlaneseq
        %v1613 = vshrl.u32 %v1612, 7
        %v1614 = vsub.s32 %v1611, %v1613
        %v1615 = vrot.slane %v1601, %v1614
        %v1616 = vcombine.low %v1560, %v1592
        %v1617 = vcombine.high %v1560, %v1592
        %v1618 = vcombine.low %v1567, %v1599
        %v1619 = vcombine.high %v1567, %v1599
        %v1620 = vcombine.low %v1576, %v1608
        %v1621 = vcombine.high %v1576, %v1608
        %v1622 = vcombine.low %v1583, %v1615
        %v1623 = vcombine.high %v1583, %v1615
        %v1624 = vcombine.low %v1443, %v1451
        %v1625 = vcombine.high %v1443, %v1451
        %v1627 = vunpack.c.l.s4 1983009808
        %v1628 = vunpack.c.0.s8 %v1627
        %v1629 = vlaneseq
        %v1630 = vshrl.u32 %v1629, 7
        %v1631 = vsub.s32 %v1628, %v1630
        %v1632 = vrot.slane %v1624, %v1631
        %v1634 = vunpack.c.l.s4 1983009808
        %v1635 = vunpack.c.0.s8 %v1634
        %v1636 = vlaneseq
        %v1637 = vshrl.u32 %v1636, 7
        %v1638 = vsub.s32 %v1635, %v1637
        %v1639 = vrot.slane %v1625, %v1638
        %v1640 = vcombine.low %v1447, %v1455
        %v1641 = vcombine.high %v1447, %v1455
        %v1643 = vunpack.c.l.s4 1983009808
        %v1644 = vunpack.c.0.s8 %v1643
        %v1645 = vlaneseq
        %v1646 = vshrl.u32 %v1645, 7
        %v1647 = vsub.s32 %v1644, %v1646
        %v1648 = vrot.slane %v1640, %v1647
        %v1650 = vunpack.c.l.s4 1983009808
        %v1651 = vunpack.c.0.s8 %v1650
        %v1652 = vlaneseq
        %v1653 = vshrl.u32 %v1652, 7
        %v1654 = vsub.s32 %v1651, %v1653
        %v1655 = vrot.slane %v1641, %v1654
        %v1656 = vcombine.low %v1459, %v1467
        %v1657 = vcombine.high %v1459, %v1467
        %v1659 = vunpack.c.l.s4 1983009808
        %v1660 = vunpack.c.0.s8 %v1659
        %v1661 = vlaneseq
        %v1662 = vshrl.u32 %v1661, 7
        %v1663 = vsub.s32 %v1660, %v1662
        %v1664 = vrot.slane %v1656, %v1663
        %v1666 = vunpack.c.l.s4 1983009808
        %v1667 = vunpack.c.0.s8 %v1666
        %v1668 = vlaneseq
        %v1669 = vshrl.u32 %v1668, 7
        %v1670 = vsub.s32 %v1667, %v1669
        %v1671 = vrot.slane %v1657, %v1670
        %v1672 = vcombine.low %v1463, %v1471
        %v1673 = vcombine.high %v1463, %v1471
        %v1675 = vunpack.c.l.s4 1983009808
        %v1676 = vunpack.c.0.s8 %v1675
        %v1677 = vlaneseq
        %v1678 = vshrl.u32 %v1677, 7
        %v1679 = vsub.s32 %v1676, %v1678
        %v1680 = vrot.slane %v1672, %v1679
        %v1682 = vunpack.c.l.s4 1983009808
        %v1683 = vunpack.c.0.s8 %v1682
        %v1684 = vlaneseq
        %v1685 = vshrl.u32 %v1684, 7
        %v1686 = vsub.s32 %v1683, %v1685
        %v1687 = vrot.slane %v1673, %v1686
        %v1688 = vcombine.low %v1632, %v1648
        %v1689 = vcombine.high %v1632, %v1648
        %v1691 = vunpack.c.l.s4 1934713408
        %v1692 = vunpack.c.0.s8 %v1691
        %v1693 = vlaneseq
        %v1694 = vshrl.u32 %v1693, 7
        %v1695 = vsub.s32 %v1692, %v1694
        %v1696 = vrot.slane %v1688, %v1695
        %v1698 = vunpack.c.l.s4 1934713408
        %v1699 = vunpack.c.0.s8 %v1698
        %v1700 = vlaneseq
        %v1701 = vshrl.u32 %v1700, 7
        %v1702 = vsub.s32 %v1699, %v1701
        %v1703 = vrot.slane %v1689, %v1702
        %v1704 = vcombine.low %v1639, %v1655
        %v1705 = vcombine.high %v1639, %v1655
        %v1707 = vunpack.c.l.s4 1934713408
        %v1708 = vunpack.c.0.s8 %v1707
        %v1709 = vlaneseq
        %v1710 = vshrl.u32 %v1709, 7
        %v1711 = vsub.s32 %v1708, %v1710
        %v1712 = vrot.slane %v1704, %v1711
        %v1714 = vunpack.c.l.s4 1934713408
        %v1715 = vunpack.c.0.s8 %v1714
        %v1716 = vlaneseq
        %v1717 = vshrl.u32 %v1716, 7
        %v1718 = vsub.s32 %v1715, %v1717
        %v1719 = vrot.slane %v1705, %v1718
        %v1720 = vcombine.low %v1664, %v1680
        %v1721 = vcombine.high %v1664, %v1680
        %v1723 = vunpack.c.l.s4 1934713408
        %v1724 = vunpack.c.0.s8 %v1723
        %v1725 = vlaneseq
        %v1726 = vshrl.u32 %v1725, 7
        %v1727 = vsub.s32 %v1724, %v1726
        %v1728 = vrot.slane %v1720, %v1727
        %v1730 = vunpack.c.l.s4 1934713408
        %v1731 = vunpack.c.0.s8 %v1730
        %v1732 = vlaneseq
        %v1733 = vshrl.u32 %v1732, 7
        %v1734 = vsub.s32 %v1731, %v1733
        %v1735 = vrot.slane %v1721, %v1734
        %v1736 = vcombine.low %v1671, %v1687
        %v1737 = vcombine.high %v1671, %v1687
        %v1739 = vunpack.c.l.s4 1934713408
        %v1740 = vunpack.c.0.s8 %v1739
        %v1741 = vlaneseq
        %v1742 = vshrl.u32 %v1741, 7
        %v1743 = vsub.s32 %v1740, %v1742
        %v1744 = vrot.slane %v1736, %v1743
        %v1746 = vunpack.c.l.s4 1934713408
        %v1747 = vunpack.c.0.s8 %v1746
        %v1748 = vlaneseq
        %v1749 = vshrl.u32 %v1748, 7
        %v1750 = vsub.s32 %v1747, %v1749
        %v1751 = vrot.slane %v1737, %v1750
        %v1752 = vcombine.low %v1696, %v1728
        %v1753 = vcombine.high %v1696, %v1728
        %v1754 = vcombine.low %v1703, %v1735
        %v1755 = vcombine.high %v1703, %v1735
        %v1756 = vcombine.low %v1712, %v1744
        %v1757 = vcombine.high %v1712, %v1744
        %v1758 = vcombine.low %v1719, %v1751
        %v1759 = vcombine.high %v1719, %v1751
        %1761 = vrot.lane.b32.xlu0 %v1617, 16
        %v1762 = vpop.permute.xlu0 %1761
        %1765 = vrot.lane.b32.xlu0 %v1618, 32
        %v1766 = vpop.permute.xlu0 %1765
        %1769 = vrot.lane.b32.xlu0 %v1619, 48
        %v1770 = vpop.permute.xlu0 %1769
        %1773 = vrot.lane.b32.xlu0 %v1620, 64
        %v1774 = vpop.permute.xlu0 %1773
        %1777 = vrot.lane.b32.xlu0 %v1621, 80
        %v1778 = vpop.permute.xlu0 %1777
        %1781 = vrot.lane.b32.xlu0 %v1622, 96
        %v1782 = vpop.permute.xlu0 %1781
        %1785 = vrot.lane.b32.xlu0 %v1623, 112
        %v1786 = vpop.permute.xlu0 %1785
        %1789 = vrot.lane.b32.xlu0 %v1753, 16
        %v1790 = vpop.permute.xlu0 %1789
        %1793 = vrot.lane.b32.xlu0 %v1754, 32
        %v1794 = vpop.permute.xlu0 %1793
        %1797 = vrot.lane.b32.xlu0 %v1755, 48
        %v1798 = vpop.permute.xlu0 %1797
        %1801 = vrot.lane.b32.xlu0 %v1756, 64
        %v1802 = vpop.permute.xlu0 %1801
        %1805 = vrot.lane.b32.xlu0 %v1757, 80
        %v1806 = vpop.permute.xlu0 %1805
        %1809 = vrot.lane.b32.xlu0 %v1758, 96
        %v1810 = vpop.permute.xlu0 %1809
        %1813 = vrot.lane.b32.xlu0 %v1759, 112
        %v1814 = vpop.permute.xlu0 %1813
        %v1816 = vsel %vm1013, %v1616, %v1762
        %v1817 = vsel %vm1015, %v1816, %v1766
        %v1818 = vsel %vm1017, %v1817, %v1770
        %v1819 = vsel %vm1019, %v1818, %v1774
        %v1820 = vsel %vm1021, %v1819, %v1778
        %v1821 = vsel %vm1023, %v1820, %v1782
        %v1822 = vsel %vm1025, %v1821, %v1786
        %v1823 = vsel %vm1013, %v1752, %v1790
        %v1824 = vsel %vm1015, %v1823, %v1794
        %v1825 = vsel %vm1017, %v1824, %v1798
        %v1826 = vsel %vm1019, %v1825, %v1802
        %v1827 = vsel %vm1021, %v1826, %v1806
        %v1828 = vsel %vm1023, %v1827, %v1810
        %v1829 = vsel %vm1025, %v1828, %v1814
        %vm1838 = vcmask 1046528
        %v1839 = vrot.slane %v661, 1
        %v1840 = vrot.slane %v662, 1
        %v1841 = vsel %vm1838, %v1839, %v1840
        %v1842 = vrot.slane %v663, 1
        %v1843 = vsel %vm1838, %v1840, %v1842
        %v1844 = vrot.slane %v664, 1
        %v1845 = vrot.slane %v665, 1
        %v1846 = vsel %vm1838, %v1844, %v1845
        %v1847 = vrot.slane %v666, 1
        %v1848 = vsel %vm1838, %v1845, %v1847
        %v1849 = vrot.slane %v667, 1
        %v1850 = vrot.slane %v668, 1
        %v1851 = vsel %vm1838, %v1849, %v1850
        %v1852 = vrot.slane %v669, 1
        %v1853 = vsel %vm1838, %v1850, %v1852
        %v1854 = vrot.slane %v670, 1
        %v1855 = vrot.slane %v671, 1
        %v1856 = vsel %vm1838, %v1854, %v1855
        %v1857 = vrot.slane %v672, 1
        %v1858 = vsel %vm1838, %v1855, %v1857
        %v1859 = vrot.slane %v673, 1
        %v1860 = vrot.slane %v674, 1
        %v1861 = vsel %vm1838, %v1859, %v1860
        %v1862 = vrot.slane %v675, 1
        %v1863 = vsel %vm1838, %v1860, %v1862
        %v1864 = vrot.slane %v676, 1
        %v1865 = vrot.slane %v677, 1
        %v1866 = vsel %vm1838, %v1864, %v1865
        %v1867 = vrot.slane %v678, 1
        %v1868 = vsel %vm1838, %v1865, %v1867
        %v1869 = vrot.slane %v679, 1
        %v1870 = vrot.slane %v680, 1
        %v1871 = vsel %vm1838, %v1869, %v1870
        %v1872 = vrot.slane %v681, 1
        %v1873 = vsel %vm1838, %v1870, %v1872
        %v1874 = vrot.slane %v682, 1
        %v1875 = vrot.slane %v683, 1
        %v1876 = vsel %vm1838, %v1874, %v1875
        %v1877 = vrot.slane %v684, 1
        %v1878 = vsel %vm1838, %v1875, %v1877
        %v1895 = vcombine.low %v1841, %v1851
        %v1896 = vcombine.high %v1841, %v1851
        %v1898 = vunpack.c.l.s4 1983009808
        %v1899 = vunpack.c.0.s8 %v1898
        %v1900 = vlaneseq
        %v1901 = vshrl.u32 %v1900, 7
        %v1902 = vsub.s32 %v1899, %v1901
        %v1903 = vrot.slane %v1895, %v1902
        %v1905 = vunpack.c.l.s4 1983009808
        %v1906 = vunpack.c.0.s8 %v1905
        %v1907 = vlaneseq
        %v1908 = vshrl.u32 %v1907, 7
        %v1909 = vsub.s32 %v1906, %v1908
        %v1910 = vrot.slane %v1896, %v1909
        %v1911 = vcombine.low %v1846, %v1856
        %v1912 = vcombine.high %v1846, %v1856
        %v1914 = vunpack.c.l.s4 1983009808
        %v1915 = vunpack.c.0.s8 %v1914
        %v1916 = vlaneseq
        %v1917 = vshrl.u32 %v1916, 7
        %v1918 = vsub.s32 %v1915, %v1917
        %v1919 = vrot.slane %v1911, %v1918
        %v1921 = vunpack.c.l.s4 1983009808
        %v1922 = vunpack.c.0.s8 %v1921
        %v1923 = vlaneseq
        %v1924 = vshrl.u32 %v1923, 7
        %v1925 = vsub.s32 %v1922, %v1924
        %v1926 = vrot.slane %v1912, %v1925
        %v1927 = vcombine.low %v1861, %v1871
        %v1928 = vcombine.high %v1861, %v1871
        %v1930 = vunpack.c.l.s4 1983009808
        %v1931 = vunpack.c.0.s8 %v1930
        %v1932 = vlaneseq
        %v1933 = vshrl.u32 %v1932, 7
        %v1934 = vsub.s32 %v1931, %v1933
        %v1935 = vrot.slane %v1927, %v1934
        %v1937 = vunpack.c.l.s4 1983009808
        %v1938 = vunpack.c.0.s8 %v1937
        %v1939 = vlaneseq
        %v1940 = vshrl.u32 %v1939, 7
        %v1941 = vsub.s32 %v1938, %v1940
        %v1942 = vrot.slane %v1928, %v1941
        %v1943 = vcombine.low %v1866, %v1876
        %v1944 = vcombine.high %v1866, %v1876
        %v1946 = vunpack.c.l.s4 1983009808
        %v1947 = vunpack.c.0.s8 %v1946
        %v1948 = vlaneseq
        %v1949 = vshrl.u32 %v1948, 7
        %v1950 = vsub.s32 %v1947, %v1949
        %v1951 = vrot.slane %v1943, %v1950
        %v1953 = vunpack.c.l.s4 1983009808
        %v1954 = vunpack.c.0.s8 %v1953
        %v1955 = vlaneseq
        %v1956 = vshrl.u32 %v1955, 7
        %v1957 = vsub.s32 %v1954, %v1956
        %v1958 = vrot.slane %v1944, %v1957
        %v1959 = vcombine.low %v1903, %v1919
        %v1960 = vcombine.high %v1903, %v1919
        %v1962 = vunpack.c.l.s4 1934713408
        %v1963 = vunpack.c.0.s8 %v1962
        %v1964 = vlaneseq
        %v1965 = vshrl.u32 %v1964, 7
        %v1966 = vsub.s32 %v1963, %v1965
        %v1967 = vrot.slane %v1959, %v1966
        %v1969 = vunpack.c.l.s4 1934713408
        %v1970 = vunpack.c.0.s8 %v1969
        %v1971 = vlaneseq
        %v1972 = vshrl.u32 %v1971, 7
        %v1973 = vsub.s32 %v1970, %v1972
        %v1974 = vrot.slane %v1960, %v1973
        %v1975 = vcombine.low %v1910, %v1926
        %v1976 = vcombine.high %v1910, %v1926
        %v1978 = vunpack.c.l.s4 1934713408
        %v1979 = vunpack.c.0.s8 %v1978
        %v1980 = vlaneseq
        %v1981 = vshrl.u32 %v1980, 7
        %v1982 = vsub.s32 %v1979, %v1981
        %v1983 = vrot.slane %v1975, %v1982
        %v1985 = vunpack.c.l.s4 1934713408
        %v1986 = vunpack.c.0.s8 %v1985
        %v1987 = vlaneseq
        %v1988 = vshrl.u32 %v1987, 7
        %v1989 = vsub.s32 %v1986, %v1988
        %v1990 = vrot.slane %v1976, %v1989
        %v1991 = vcombine.low %v1935, %v1951
        %v1992 = vcombine.high %v1935, %v1951
        %v1994 = vunpack.c.l.s4 1934713408
        %v1995 = vunpack.c.0.s8 %v1994
        %v1996 = vlaneseq
        %v1997 = vshrl.u32 %v1996, 7
        %v1998 = vsub.s32 %v1995, %v1997
        %v1999 = vrot.slane %v1991, %v1998
        %v2001 = vunpack.c.l.s4 1934713408
        %v2002 = vunpack.c.0.s8 %v2001
        %v2003 = vlaneseq
        %v2004 = vshrl.u32 %v2003, 7
        %v2005 = vsub.s32 %v2002, %v2004
        %v2006 = vrot.slane %v1992, %v2005
        %v2007 = vcombine.low %v1942, %v1958
        %v2008 = vcombine.high %v1942, %v1958
        %v2010 = vunpack.c.l.s4 1934713408
        %v2011 = vunpack.c.0.s8 %v2010
        %v2012 = vlaneseq
        %v2013 = vshrl.u32 %v2012, 7
        %v2014 = vsub.s32 %v2011, %v2013
        %v2015 = vrot.slane %v2007, %v2014
        %v2017 = vunpack.c.l.s4 1934713408
        %v2018 = vunpack.c.0.s8 %v2017
        %v2019 = vlaneseq
        %v2020 = vshrl.u32 %v2019, 7
        %v2021 = vsub.s32 %v2018, %v2020
        %v2022 = vrot.slane %v2008, %v2021
        %v2023 = vcombine.low %v1967, %v1999
        %v2024 = vcombine.high %v1967, %v1999
        %v2025 = vcombine.low %v1974, %v2006
        %v2026 = vcombine.high %v1974, %v2006
        %v2027 = vcombine.low %v1983, %v2015
        %v2028 = vcombine.high %v1983, %v2015
        %v2029 = vcombine.low %v1990, %v2022
        %v2030 = vcombine.high %v1990, %v2022
        %v2031 = vcombine.low %v1843, %v1853
        %v2032 = vcombine.high %v1843, %v1853
        %v2034 = vunpack.c.l.s4 1983009808
        %v2035 = vunpack.c.0.s8 %v2034
        %v2036 = vlaneseq
        %v2037 = vshrl.u32 %v2036, 7
        %v2038 = vsub.s32 %v2035, %v2037
        %v2039 = vrot.slane %v2031, %v2038
        %v2041 = vunpack.c.l.s4 1983009808
        %v2042 = vunpack.c.0.s8 %v2041
        %v2043 = vlaneseq
        %v2044 = vshrl.u32 %v2043, 7
        %v2045 = vsub.s32 %v2042, %v2044
        %v2046 = vrot.slane %v2032, %v2045
        %v2047 = vcombine.low %v1848, %v1858
        %v2048 = vcombine.high %v1848, %v1858
        %v2050 = vunpack.c.l.s4 1983009808
        %v2051 = vunpack.c.0.s8 %v2050
        %v2052 = vlaneseq
        %v2053 = vshrl.u32 %v2052, 7
        %v2054 = vsub.s32 %v2051, %v2053
        %v2055 = vrot.slane %v2047, %v2054
        %v2057 = vunpack.c.l.s4 1983009808
        %v2058 = vunpack.c.0.s8 %v2057
        %v2059 = vlaneseq
        %v2060 = vshrl.u32 %v2059, 7
        %v2061 = vsub.s32 %v2058, %v2060
        %v2062 = vrot.slane %v2048, %v2061
        %v2063 = vcombine.low %v1863, %v1873
        %v2064 = vcombine.high %v1863, %v1873
        %v2066 = vunpack.c.l.s4 1983009808
        %v2067 = vunpack.c.0.s8 %v2066
        %v2068 = vlaneseq
        %v2069 = vshrl.u32 %v2068, 7
        %v2070 = vsub.s32 %v2067, %v2069
        %v2071 = vrot.slane %v2063, %v2070
        %v2073 = vunpack.c.l.s4 1983009808
        %v2074 = vunpack.c.0.s8 %v2073
        %v2075 = vlaneseq
        %v2076 = vshrl.u32 %v2075, 7
        %v2077 = vsub.s32 %v2074, %v2076
        %v2078 = vrot.slane %v2064, %v2077
        %v2079 = vcombine.low %v1868, %v1878
        %v2080 = vcombine.high %v1868, %v1878
        %v2082 = vunpack.c.l.s4 1983009808
        %v2083 = vunpack.c.0.s8 %v2082
        %v2084 = vlaneseq
        %v2085 = vshrl.u32 %v2084, 7
        %v2086 = vsub.s32 %v2083, %v2085
        %v2087 = vrot.slane %v2079, %v2086
        %v2089 = vunpack.c.l.s4 1983009808
        %v2090 = vunpack.c.0.s8 %v2089
        %v2091 = vlaneseq
        %v2092 = vshrl.u32 %v2091, 7
        %v2093 = vsub.s32 %v2090, %v2092
        %v2094 = vrot.slane %v2080, %v2093
        %v2095 = vcombine.low %v2039, %v2055
        %v2096 = vcombine.high %v2039, %v2055
        %v2098 = vunpack.c.l.s4 1934713408
        %v2099 = vunpack.c.0.s8 %v2098
        %v2100 = vlaneseq
        %v2101 = vshrl.u32 %v2100, 7
        %v2102 = vsub.s32 %v2099, %v2101
        %v2103 = vrot.slane %v2095, %v2102
        %v2105 = vunpack.c.l.s4 1934713408
        %v2106 = vunpack.c.0.s8 %v2105
        %v2107 = vlaneseq
        %v2108 = vshrl.u32 %v2107, 7
        %v2109 = vsub.s32 %v2106, %v2108
        %v2110 = vrot.slane %v2096, %v2109
        %v2111 = vcombine.low %v2046, %v2062
        %v2112 = vcombine.high %v2046, %v2062
        %v2114 = vunpack.c.l.s4 1934713408
        %v2115 = vunpack.c.0.s8 %v2114
        %v2116 = vlaneseq
        %v2117 = vshrl.u32 %v2116, 7
        %v2118 = vsub.s32 %v2115, %v2117
        %v2119 = vrot.slane %v2111, %v2118
        %v2121 = vunpack.c.l.s4 1934713408
        %v2122 = vunpack.c.0.s8 %v2121
        %v2123 = vlaneseq
        %v2124 = vshrl.u32 %v2123, 7
        %v2125 = vsub.s32 %v2122, %v2124
        %v2126 = vrot.slane %v2112, %v2125
        %v2127 = vcombine.low %v2071, %v2087
        %v2128 = vcombine.high %v2071, %v2087
        %v2130 = vunpack.c.l.s4 1934713408
        %v2131 = vunpack.c.0.s8 %v2130
        %v2132 = vlaneseq
        %v2133 = vshrl.u32 %v2132, 7
        %v2134 = vsub.s32 %v2131, %v2133
        %v2135 = vrot.slane %v2127, %v2134
        %v2137 = vunpack.c.l.s4 1934713408
        %v2138 = vunpack.c.0.s8 %v2137
        %v2139 = vlaneseq
        %v2140 = vshrl.u32 %v2139, 7
        %v2141 = vsub.s32 %v2138, %v2140
        %v2142 = vrot.slane %v2128, %v2141
        %v2143 = vcombine.low %v2078, %v2094
        %v2144 = vcombine.high %v2078, %v2094
        %v2146 = vunpack.c.l.s4 1934713408
        %v2147 = vunpack.c.0.s8 %v2146
        %v2148 = vlaneseq
        %v2149 = vshrl.u32 %v2148, 7
        %v2150 = vsub.s32 %v2147, %v2149
        %v2151 = vrot.slane %v2143, %v2150
        %v2153 = vunpack.c.l.s4 1934713408
        %v2154 = vunpack.c.0.s8 %v2153
        %v2155 = vlaneseq
        %v2156 = vshrl.u32 %v2155, 7
        %v2157 = vsub.s32 %v2154, %v2156
        %v2158 = vrot.slane %v2144, %v2157
        %v2159 = vcombine.low %v2103, %v2135
        %v2160 = vcombine.high %v2103, %v2135
        %v2161 = vcombine.low %v2110, %v2142
        %v2162 = vcombine.high %v2110, %v2142
        %v2163 = vcombine.low %v2119, %v2151
        %v2164 = vcombine.high %v2119, %v2151
        %v2165 = vcombine.low %v2126, %v2158
        %v2166 = vcombine.high %v2126, %v2158
        %2168 = vrot.lane.b32.xlu0 %v2024, 16
        %v2169 = vpop.permute.xlu0 %2168
        %2172 = vrot.lane.b32.xlu0 %v2025, 32
        %v2173 = vpop.permute.xlu0 %2172
        %2176 = vrot.lane.b32.xlu0 %v2026, 48
        %v2177 = vpop.permute.xlu0 %2176
        %2180 = vrot.lane.b32.xlu0 %v2027, 64
        %v2181 = vpop.permute.xlu0 %2180
        %2184 = vrot.lane.b32.xlu0 %v2028, 80
        %v2185 = vpop.permute.xlu0 %2184
        %2188 = vrot.lane.b32.xlu0 %v2029, 96
        %v2189 = vpop.permute.xlu0 %2188
        %2192 = vrot.lane.b32.xlu0 %v2030, 112
        %v2193 = vpop.permute.xlu0 %2192
        %2196 = vrot.lane.b32.xlu0 %v2160, 16
        %v2197 = vpop.permute.xlu0 %2196
        %2200 = vrot.lane.b32.xlu0 %v2161, 32
        %v2201 = vpop.permute.xlu0 %2200
        %2204 = vrot.lane.b32.xlu0 %v2162, 48
        %v2205 = vpop.permute.xlu0 %2204
        %2208 = vrot.lane.b32.xlu0 %v2163, 64
        %v2209 = vpop.permute.xlu0 %2208
        %2212 = vrot.lane.b32.xlu0 %v2164, 80
        %v2213 = vpop.permute.xlu0 %2212
        %2216 = vrot.lane.b32.xlu0 %v2165, 96
        %v2217 = vpop.permute.xlu0 %2216
        %2220 = vrot.lane.b32.xlu0 %v2166, 112
        %v2221 = vpop.permute.xlu0 %2220
        %v2223 = vsel %vm1013, %v2023, %v2169
        %v2224 = vsel %vm1015, %v2223, %v2173
        %v2225 = vsel %vm1017, %v2224, %v2177
        %v2226 = vsel %vm1019, %v2225, %v2181
        %v2227 = vsel %vm1021, %v2226, %v2185
        %v2228 = vsel %vm1023, %v2227, %v2189
        %v2229 = vsel %vm1025, %v2228, %v2193
        %v2230 = vsel %vm1013, %v2159, %v2197
        %v2231 = vsel %vm1015, %v2230, %v2201
        %v2232 = vsel %vm1017, %v2231, %v2205
        %v2233 = vsel %vm1019, %v2232, %v2209
        %v2234 = vsel %vm1021, %v2233, %v2213
        %v2235 = vsel %vm1023, %v2234, %v2217
        %v2236 = vsel %vm1025, %v2235, %v2221
        %2237 = vrot.lane.b32.xlu0 %v1841, 127
        %v2238 = vpop.permute.xlu0 %2237
        %2239 = vrot.lane.b32.xlu0 %v1843, 127
        %v2240 = vpop.permute.xlu0 %2239
        %2241 = vrot.lane.b32.xlu0 %v1846, 127
        %v2242 = vpop.permute.xlu0 %2241
        %2243 = vrot.lane.b32.xlu0 %v1848, 127
        %v2244 = vpop.permute.xlu0 %2243
        %2245 = vrot.lane.b32.xlu0 %v1851, 127
        %v2246 = vpop.permute.xlu0 %2245
        %2247 = vrot.lane.b32.xlu0 %v1853, 127
        %v2248 = vpop.permute.xlu0 %2247
        %2249 = vrot.lane.b32.xlu0 %v1856, 127
        %v2250 = vpop.permute.xlu0 %2249
        %2251 = vrot.lane.b32.xlu0 %v1858, 127
        %v2252 = vpop.permute.xlu0 %2251
        %2253 = vrot.lane.b32.xlu0 %v1861, 127
        %v2254 = vpop.permute.xlu0 %2253
        %2255 = vrot.lane.b32.xlu0 %v1863, 127
        %v2256 = vpop.permute.xlu0 %2255
        %2257 = vrot.lane.b32.xlu0 %v1866, 127
        %v2258 = vpop.permute.xlu0 %2257
        %2259 = vrot.lane.b32.xlu0 %v1868, 127
        %v2260 = vpop.permute.xlu0 %2259
        %2261 = vrot.lane.b32.xlu0 %v1871, 127
        %v2262 = vpop.permute.xlu0 %2261
        %2263 = vrot.lane.b32.xlu0 %v1873, 127
        %v2264 = vpop.permute.xlu0 %2263
        %2265 = vrot.lane.b32.xlu0 %v1876, 127
        %v2266 = vpop.permute.xlu0 %2265
        %2267 = vrot.lane.b32.xlu0 %v1878, 127
        %v2268 = vpop.permute.xlu0 %2267
        %v2285 = vcombine.low %v2238, %v2246
        %v2286 = vcombine.high %v2238, %v2246
        %v2288 = vunpack.c.l.s4 1983009808
        %v2289 = vunpack.c.0.s8 %v2288
        %v2290 = vlaneseq
        %v2291 = vshrl.u32 %v2290, 7
        %v2292 = vsub.s32 %v2289, %v2291
        %v2293 = vrot.slane %v2285, %v2292
        %v2295 = vunpack.c.l.s4 1983009808
        %v2296 = vunpack.c.0.s8 %v2295
        %v2297 = vlaneseq
        %v2298 = vshrl.u32 %v2297, 7
        %v2299 = vsub.s32 %v2296, %v2298
        %v2300 = vrot.slane %v2286, %v2299
        %v2301 = vcombine.low %v2242, %v2250
        %v2302 = vcombine.high %v2242, %v2250
        %v2304 = vunpack.c.l.s4 1983009808
        %v2305 = vunpack.c.0.s8 %v2304
        %v2306 = vlaneseq
        %v2307 = vshrl.u32 %v2306, 7
        %v2308 = vsub.s32 %v2305, %v2307
        %v2309 = vrot.slane %v2301, %v2308
        %v2311 = vunpack.c.l.s4 1983009808
        %v2312 = vunpack.c.0.s8 %v2311
        %v2313 = vlaneseq
        %v2314 = vshrl.u32 %v2313, 7
        %v2315 = vsub.s32 %v2312, %v2314
        %v2316 = vrot.slane %v2302, %v2315
        %v2317 = vcombine.low %v2254, %v2262
        %v2318 = vcombine.high %v2254, %v2262
        %v2320 = vunpack.c.l.s4 1983009808
        %v2321 = vunpack.c.0.s8 %v2320
        %v2322 = vlaneseq
        %v2323 = vshrl.u32 %v2322, 7
        %v2324 = vsub.s32 %v2321, %v2323
        %v2325 = vrot.slane %v2317, %v2324
        %v2327 = vunpack.c.l.s4 1983009808
        %v2328 = vunpack.c.0.s8 %v2327
        %v2329 = vlaneseq
        %v2330 = vshrl.u32 %v2329, 7
        %v2331 = vsub.s32 %v2328, %v2330
        %v2332 = vrot.slane %v2318, %v2331
        %v2333 = vcombine.low %v2258, %v2266
        %v2334 = vcombine.high %v2258, %v2266
        %v2336 = vunpack.c.l.s4 1983009808
        %v2337 = vunpack.c.0.s8 %v2336
        %v2338 = vlaneseq
        %v2339 = vshrl.u32 %v2338, 7
        %v2340 = vsub.s32 %v2337, %v2339
        %v2341 = vrot.slane %v2333, %v2340
        %v2343 = vunpack.c.l.s4 1983009808
        %v2344 = vunpack.c.0.s8 %v2343
        %v2345 = vlaneseq
        %v2346 = vshrl.u32 %v2345, 7
        %v2347 = vsub.s32 %v2344, %v2346
        %v2348 = vrot.slane %v2334, %v2347
        %v2349 = vcombine.low %v2293, %v2309
        %v2350 = vcombine.high %v2293, %v2309
        %v2352 = vunpack.c.l.s4 1934713408
        %v2353 = vunpack.c.0.s8 %v2352
        %v2354 = vlaneseq
        %v2355 = vshrl.u32 %v2354, 7
        %v2356 = vsub.s32 %v2353, %v2355
        %v2357 = vrot.slane %v2349, %v2356
        %v2359 = vunpack.c.l.s4 1934713408
        %v2360 = vunpack.c.0.s8 %v2359
        %v2361 = vlaneseq
        %v2362 = vshrl.u32 %v2361, 7
        %v2363 = vsub.s32 %v2360, %v2362
        %v2364 = vrot.slane %v2350, %v2363
        %v2365 = vcombine.low %v2300, %v2316
        %v2366 = vcombine.high %v2300, %v2316
        %v2368 = vunpack.c.l.s4 1934713408
        %v2369 = vunpack.c.0.s8 %v2368
        %v2370 = vlaneseq
        %v2371 = vshrl.u32 %v2370, 7
        %v2372 = vsub.s32 %v2369, %v2371
        %v2373 = vrot.slane %v2365, %v2372
        %v2375 = vunpack.c.l.s4 1934713408
        %v2376 = vunpack.c.0.s8 %v2375
        %v2377 = vlaneseq
        %v2378 = vshrl.u32 %v2377, 7
        %v2379 = vsub.s32 %v2376, %v2378
        %v2380 = vrot.slane %v2366, %v2379
        %v2381 = vcombine.low %v2325, %v2341
        %v2382 = vcombine.high %v2325, %v2341
        %v2384 = vunpack.c.l.s4 1934713408
        %v2385 = vunpack.c.0.s8 %v2384
        %v2386 = vlaneseq
        %v2387 = vshrl.u32 %v2386, 7
        %v2388 = vsub.s32 %v2385, %v2387
        %v2389 = vrot.slane %v2381, %v2388
        %v2391 = vunpack.c.l.s4 1934713408
        %v2392 = vunpack.c.0.s8 %v2391
        %v2393 = vlaneseq
        %v2394 = vshrl.u32 %v2393, 7
        %v2395 = vsub.s32 %v2392, %v2394
        %v2396 = vrot.slane %v2382, %v2395
        %v2397 = vcombine.low %v2332, %v2348
        %v2398 = vcombine.high %v2332, %v2348
        %v2400 = vunpack.c.l.s4 1934713408
        %v2401 = vunpack.c.0.s8 %v2400
        %v2402 = vlaneseq
        %v2403 = vshrl.u32 %v2402, 7
        %v2404 = vsub.s32 %v2401, %v2403
        %v2405 = vrot.slane %v2397, %v2404
        %v2407 = vunpack.c.l.s4 1934713408
        %v2408 = vunpack.c.0.s8 %v2407
        %v2409 = vlaneseq
        %v2410 = vshrl.u32 %v2409, 7
        %v2411 = vsub.s32 %v2408, %v2410
        %v2412 = vrot.slane %v2398, %v2411
        %v2413 = vcombine.low %v2357, %v2389
        %v2414 = vcombine.high %v2357, %v2389
        %v2415 = vcombine.low %v2364, %v2396
        %v2416 = vcombine.high %v2364, %v2396
        %v2417 = vcombine.low %v2373, %v2405
        %v2418 = vcombine.high %v2373, %v2405
        %v2419 = vcombine.low %v2380, %v2412
        %v2420 = vcombine.high %v2380, %v2412
        %v2421 = vcombine.low %v2240, %v2248
        %v2422 = vcombine.high %v2240, %v2248
        %v2424 = vunpack.c.l.s4 1983009808
        %v2425 = vunpack.c.0.s8 %v2424
        %v2426 = vlaneseq
        %v2427 = vshrl.u32 %v2426, 7
        %v2428 = vsub.s32 %v2425, %v2427
        %v2429 = vrot.slane %v2421, %v2428
        %v2431 = vunpack.c.l.s4 1983009808
        %v2432 = vunpack.c.0.s8 %v2431
        %v2433 = vlaneseq
        %v2434 = vshrl.u32 %v2433, 7
        %v2435 = vsub.s32 %v2432, %v2434
        %v2436 = vrot.slane %v2422, %v2435
        %v2437 = vcombine.low %v2244, %v2252
        %v2438 = vcombine.high %v2244, %v2252
        %v2440 = vunpack.c.l.s4 1983009808
        %v2441 = vunpack.c.0.s8 %v2440
        %v2442 = vlaneseq
        %v2443 = vshrl.u32 %v2442, 7
        %v2444 = vsub.s32 %v2441, %v2443
        %v2445 = vrot.slane %v2437, %v2444
        %v2447 = vunpack.c.l.s4 1983009808
        %v2448 = vunpack.c.0.s8 %v2447
        %v2449 = vlaneseq
        %v2450 = vshrl.u32 %v2449, 7
        %v2451 = vsub.s32 %v2448, %v2450
        %v2452 = vrot.slane %v2438, %v2451
        %v2453 = vcombine.low %v2256, %v2264
        %v2454 = vcombine.high %v2256, %v2264
        %v2456 = vunpack.c.l.s4 1983009808
        %v2457 = vunpack.c.0.s8 %v2456
        %v2458 = vlaneseq
        %v2459 = vshrl.u32 %v2458, 7
        %v2460 = vsub.s32 %v2457, %v2459
        %v2461 = vrot.slane %v2453, %v2460
        %v2463 = vunpack.c.l.s4 1983009808
        %v2464 = vunpack.c.0.s8 %v2463
        %v2465 = vlaneseq
        %v2466 = vshrl.u32 %v2465, 7
        %v2467 = vsub.s32 %v2464, %v2466
        %v2468 = vrot.slane %v2454, %v2467
        %v2469 = vcombine.low %v2260, %v2268
        %v2470 = vcombine.high %v2260, %v2268
        %v2472 = vunpack.c.l.s4 1983009808
        %v2473 = vunpack.c.0.s8 %v2472
        %v2474 = vlaneseq
        %v2475 = vshrl.u32 %v2474, 7
        %v2476 = vsub.s32 %v2473, %v2475
        %v2477 = vrot.slane %v2469, %v2476
        %v2479 = vunpack.c.l.s4 1983009808
        %v2480 = vunpack.c.0.s8 %v2479
        %v2481 = vlaneseq
        %v2482 = vshrl.u32 %v2481, 7
        %v2483 = vsub.s32 %v2480, %v2482
        %v2484 = vrot.slane %v2470, %v2483
        %v2485 = vcombine.low %v2429, %v2445
        %v2486 = vcombine.high %v2429, %v2445
        %v2488 = vunpack.c.l.s4 1934713408
        %v2489 = vunpack.c.0.s8 %v2488
        %v2490 = vlaneseq
        %v2491 = vshrl.u32 %v2490, 7
        %v2492 = vsub.s32 %v2489, %v2491
        %v2493 = vrot.slane %v2485, %v2492
        %v2495 = vunpack.c.l.s4 1934713408
        %v2496 = vunpack.c.0.s8 %v2495
        %v2497 = vlaneseq
        %v2498 = vshrl.u32 %v2497, 7
        %v2499 = vsub.s32 %v2496, %v2498
        %v2500 = vrot.slane %v2486, %v2499
        %v2501 = vcombine.low %v2436, %v2452
        %v2502 = vcombine.high %v2436, %v2452
        %v2504 = vunpack.c.l.s4 1934713408
        %v2505 = vunpack.c.0.s8 %v2504
        %v2506 = vlaneseq
        %v2507 = vshrl.u32 %v2506, 7
        %v2508 = vsub.s32 %v2505, %v2507
        %v2509 = vrot.slane %v2501, %v2508
        %v2511 = vunpack.c.l.s4 1934713408
        %v2512 = vunpack.c.0.s8 %v2511
        %v2513 = vlaneseq
        %v2514 = vshrl.u32 %v2513, 7
        %v2515 = vsub.s32 %v2512, %v2514
        %v2516 = vrot.slane %v2502, %v2515
        %v2517 = vcombine.low %v2461, %v2477
        %v2518 = vcombine.high %v2461, %v2477
        %v2520 = vunpack.c.l.s4 1934713408
        %v2521 = vunpack.c.0.s8 %v2520
        %v2522 = vlaneseq
        %v2523 = vshrl.u32 %v2522, 7
        %v2524 = vsub.s32 %v2521, %v2523
        %v2525 = vrot.slane %v2517, %v2524
        %v2527 = vunpack.c.l.s4 1934713408
        %v2528 = vunpack.c.0.s8 %v2527
        %v2529 = vlaneseq
        %v2530 = vshrl.u32 %v2529, 7
        %v2531 = vsub.s32 %v2528, %v2530
        %v2532 = vrot.slane %v2518, %v2531
        %v2533 = vcombine.low %v2468, %v2484
        %v2534 = vcombine.high %v2468, %v2484
        %v2536 = vunpack.c.l.s4 1934713408
        %v2537 = vunpack.c.0.s8 %v2536
        %v2538 = vlaneseq
        %v2539 = vshrl.u32 %v2538, 7
        %v2540 = vsub.s32 %v2537, %v2539
        %v2541 = vrot.slane %v2533, %v2540
        %v2543 = vunpack.c.l.s4 1934713408
        %v2544 = vunpack.c.0.s8 %v2543
        %v2545 = vlaneseq
        %v2546 = vshrl.u32 %v2545, 7
        %v2547 = vsub.s32 %v2544, %v2546
        %v2548 = vrot.slane %v2534, %v2547
        %v2549 = vcombine.low %v2493, %v2525
        %v2550 = vcombine.high %v2493, %v2525
        %v2551 = vcombine.low %v2500, %v2532
        %v2552 = vcombine.high %v2500, %v2532
        %v2553 = vcombine.low %v2509, %v2541
        %v2554 = vcombine.high %v2509, %v2541
        %v2555 = vcombine.low %v2516, %v2548
        %v2556 = vcombine.high %v2516, %v2548
        %2558 = vrot.lane.b32.xlu0 %v2414, 16
        %v2559 = vpop.permute.xlu0 %2558
        %2562 = vrot.lane.b32.xlu0 %v2415, 32
        %v2563 = vpop.permute.xlu0 %2562
        %2566 = vrot.lane.b32.xlu0 %v2416, 48
        %v2567 = vpop.permute.xlu0 %2566
        %2570 = vrot.lane.b32.xlu0 %v2417, 64
        %v2571 = vpop.permute.xlu0 %2570
        %2574 = vrot.lane.b32.xlu0 %v2418, 80
        %v2575 = vpop.permute.xlu0 %2574
        %2578 = vrot.lane.b32.xlu0 %v2419, 96
        %v2579 = vpop.permute.xlu0 %2578
        %2582 = vrot.lane.b32.xlu0 %v2420, 112
        %v2583 = vpop.permute.xlu0 %2582
        %2586 = vrot.lane.b32.xlu0 %v2550, 16
        %v2587 = vpop.permute.xlu0 %2586
        %2590 = vrot.lane.b32.xlu0 %v2551, 32
        %v2591 = vpop.permute.xlu0 %2590
        %2594 = vrot.lane.b32.xlu0 %v2552, 48
        %v2595 = vpop.permute.xlu0 %2594
        %2598 = vrot.lane.b32.xlu0 %v2553, 64
        %v2599 = vpop.permute.xlu0 %2598
        %2602 = vrot.lane.b32.xlu0 %v2554, 80
        %v2603 = vpop.permute.xlu0 %2602
        %2606 = vrot.lane.b32.xlu0 %v2555, 96
        %v2607 = vpop.permute.xlu0 %2606
        %2610 = vrot.lane.b32.xlu0 %v2556, 112
        %v2611 = vpop.permute.xlu0 %2610
        %v2613 = vsel %vm1013, %v2413, %v2559
        %v2614 = vsel %vm1015, %v2613, %v2563
        %v2615 = vsel %vm1017, %v2614, %v2567
        %v2616 = vsel %vm1019, %v2615, %v2571
        %v2617 = vsel %vm1021, %v2616, %v2575
        %v2618 = vsel %vm1023, %v2617, %v2579
        %v2619 = vsel %vm1025, %v2618, %v2583
        %v2620 = vsel %vm1013, %v2549, %v2587
        %v2621 = vsel %vm1015, %v2620, %v2591
        %v2622 = vsel %vm1017, %v2621, %v2595
        %v2623 = vsel %vm1019, %v2622, %v2599
        %v2624 = vsel %vm1021, %v2623, %v2603
        %v2625 = vsel %vm1023, %v2624, %v2607
        %v2626 = vsel %vm1025, %v2625, %v2611
        %2627 = vrot.lane.b32.xlu0 %v1841, 126
        %v2628 = vpop.permute.xlu0 %2627
        %2629 = vrot.lane.b32.xlu0 %v1843, 126
        %v2630 = vpop.permute.xlu0 %2629
        %2631 = vrot.lane.b32.xlu0 %v1846, 126
        %v2632 = vpop.permute.xlu0 %2631
        %2633 = vrot.lane.b32.xlu0 %v1848, 126
        %v2634 = vpop.permute.xlu0 %2633
        %2635 = vrot.lane.b32.xlu0 %v1851, 126
        %v2636 = vpop.permute.xlu0 %2635
        %2637 = vrot.lane.b32.xlu0 %v1853, 126
        %v2638 = vpop.permute.xlu0 %2637
        %2639 = vrot.lane.b32.xlu0 %v1856, 126
        %v2640 = vpop.permute.xlu0 %2639
        %2641 = vrot.lane.b32.xlu0 %v1858, 126
        %v2642 = vpop.permute.xlu0 %2641
        %2643 = vrot.lane.b32.xlu0 %v1861, 126
        %v2644 = vpop.permute.xlu0 %2643
        %2645 = vrot.lane.b32.xlu0 %v1863, 126
        %v2646 = vpop.permute.xlu0 %2645
        %2647 = vrot.lane.b32.xlu0 %v1866, 126
        %v2648 = vpop.permute.xlu0 %2647
        %2649 = vrot.lane.b32.xlu0 %v1868, 126
        %v2650 = vpop.permute.xlu0 %2649
        %2651 = vrot.lane.b32.xlu0 %v1871, 126
        %v2652 = vpop.permute.xlu0 %2651
        %2653 = vrot.lane.b32.xlu0 %v1873, 126
        %v2654 = vpop.permute.xlu0 %2653
        %2655 = vrot.lane.b32.xlu0 %v1876, 126
        %v2656 = vpop.permute.xlu0 %2655
        %2657 = vrot.lane.b32.xlu0 %v1878, 126
        %v2658 = vpop.permute.xlu0 %2657
        %v2675 = vcombine.low %v2628, %v2636
        %v2676 = vcombine.high %v2628, %v2636
        %v2678 = vunpack.c.l.s4 1983009808
        %v2679 = vunpack.c.0.s8 %v2678
        %v2680 = vlaneseq
        %v2681 = vshrl.u32 %v2680, 7
        %v2682 = vsub.s32 %v2679, %v2681
        %v2683 = vrot.slane %v2675, %v2682
        %v2685 = vunpack.c.l.s4 1983009808
        %v2686 = vunpack.c.0.s8 %v2685
        %v2687 = vlaneseq
        %v2688 = vshrl.u32 %v2687, 7
        %v2689 = vsub.s32 %v2686, %v2688
        %v2690 = vrot.slane %v2676, %v2689
        %v2691 = vcombine.low %v2632, %v2640
        %v2692 = vcombine.high %v2632, %v2640
        %v2694 = vunpack.c.l.s4 1983009808
        %v2695 = vunpack.c.0.s8 %v2694
        %v2696 = vlaneseq
        %v2697 = vshrl.u32 %v2696, 7
        %v2698 = vsub.s32 %v2695, %v2697
        %v2699 = vrot.slane %v2691, %v2698
        %v2701 = vunpack.c.l.s4 1983009808
        %v2702 = vunpack.c.0.s8 %v2701
        %v2703 = vlaneseq
        %v2704 = vshrl.u32 %v2703, 7
        %v2705 = vsub.s32 %v2702, %v2704
        %v2706 = vrot.slane %v2692, %v2705
        %v2707 = vcombine.low %v2644, %v2652
        %v2708 = vcombine.high %v2644, %v2652
        %v2710 = vunpack.c.l.s4 1983009808
        %v2711 = vunpack.c.0.s8 %v2710
        %v2712 = vlaneseq
        %v2713 = vshrl.u32 %v2712, 7
        %v2714 = vsub.s32 %v2711, %v2713
        %v2715 = vrot.slane %v2707, %v2714
        %v2717 = vunpack.c.l.s4 1983009808
        %v2718 = vunpack.c.0.s8 %v2717
        %v2719 = vlaneseq
        %v2720 = vshrl.u32 %v2719, 7
        %v2721 = vsub.s32 %v2718, %v2720
        %v2722 = vrot.slane %v2708, %v2721
        %v2723 = vcombine.low %v2648, %v2656
        %v2724 = vcombine.high %v2648, %v2656
        %v2726 = vunpack.c.l.s4 1983009808
        %v2727 = vunpack.c.0.s8 %v2726
        %v2728 = vlaneseq
        %v2729 = vshrl.u32 %v2728, 7
        %v2730 = vsub.s32 %v2727, %v2729
        %v2731 = vrot.slane %v2723, %v2730
        %v2733 = vunpack.c.l.s4 1983009808
        %v2734 = vunpack.c.0.s8 %v2733
        %v2735 = vlaneseq
        %v2736 = vshrl.u32 %v2735, 7
        %v2737 = vsub.s32 %v2734, %v2736
        %v2738 = vrot.slane %v2724, %v2737
        %v2739 = vcombine.low %v2683, %v2699
        %v2740 = vcombine.high %v2683, %v2699
        %v2742 = vunpack.c.l.s4 1934713408
        %v2743 = vunpack.c.0.s8 %v2742
        %v2744 = vlaneseq
        %v2745 = vshrl.u32 %v2744, 7
        %v2746 = vsub.s32 %v2743, %v2745
        %v2747 = vrot.slane %v2739, %v2746
        %v2749 = vunpack.c.l.s4 1934713408
        %v2750 = vunpack.c.0.s8 %v2749
        %v2751 = vlaneseq
        %v2752 = vshrl.u32 %v2751, 7
        %v2753 = vsub.s32 %v2750, %v2752
        %v2754 = vrot.slane %v2740, %v2753
        %v2755 = vcombine.low %v2690, %v2706
        %v2756 = vcombine.high %v2690, %v2706
        %v2758 = vunpack.c.l.s4 1934713408
        %v2759 = vunpack.c.0.s8 %v2758
        %v2760 = vlaneseq
        %v2761 = vshrl.u32 %v2760, 7
        %v2762 = vsub.s32 %v2759, %v2761
        %v2763 = vrot.slane %v2755, %v2762
        %v2765 = vunpack.c.l.s4 1934713408
        %v2766 = vunpack.c.0.s8 %v2765
        %v2767 = vlaneseq
        %v2768 = vshrl.u32 %v2767, 7
        %v2769 = vsub.s32 %v2766, %v2768
        %v2770 = vrot.slane %v2756, %v2769
        %v2771 = vcombine.low %v2715, %v2731
        %v2772 = vcombine.high %v2715, %v2731
        %v2774 = vunpack.c.l.s4 1934713408
        %v2775 = vunpack.c.0.s8 %v2774
        %v2776 = vlaneseq
        %v2777 = vshrl.u32 %v2776, 7
        %v2778 = vsub.s32 %v2775, %v2777
        %v2779 = vrot.slane %v2771, %v2778
        %v2781 = vunpack.c.l.s4 1934713408
        %v2782 = vunpack.c.0.s8 %v2781
        %v2783 = vlaneseq
        %v2784 = vshrl.u32 %v2783, 7
        %v2785 = vsub.s32 %v2782, %v2784
        %v2786 = vrot.slane %v2772, %v2785
        %v2787 = vcombine.low %v2722, %v2738
        %v2788 = vcombine.high %v2722, %v2738
        %v2790 = vunpack.c.l.s4 1934713408
        %v2791 = vunpack.c.0.s8 %v2790
        %v2792 = vlaneseq
        %v2793 = vshrl.u32 %v2792, 7
        %v2794 = vsub.s32 %v2791, %v2793
        %v2795 = vrot.slane %v2787, %v2794
        %v2797 = vunpack.c.l.s4 1934713408
        %v2798 = vunpack.c.0.s8 %v2797
        %v2799 = vlaneseq
        %v2800 = vshrl.u32 %v2799, 7
        %v2801 = vsub.s32 %v2798, %v2800
        %v2802 = vrot.slane %v2788, %v2801
        %v2803 = vcombine.low %v2747, %v2779
        %v2804 = vcombine.high %v2747, %v2779
        %v2805 = vcombine.low %v2754, %v2786
        %v2806 = vcombine.high %v2754, %v2786
        %v2807 = vcombine.low %v2763, %v2795
        %v2808 = vcombine.high %v2763, %v2795
        %v2809 = vcombine.low %v2770, %v2802
        %v2810 = vcombine.high %v2770, %v2802
        %v2811 = vcombine.low %v2630, %v2638
        %v2812 = vcombine.high %v2630, %v2638
        %v2814 = vunpack.c.l.s4 1983009808
        %v2815 = vunpack.c.0.s8 %v2814
        %v2816 = vlaneseq
        %v2817 = vshrl.u32 %v2816, 7
        %v2818 = vsub.s32 %v2815, %v2817
        %v2819 = vrot.slane %v2811, %v2818
        %v2821 = vunpack.c.l.s4 1983009808
        %v2822 = vunpack.c.0.s8 %v2821
        %v2823 = vlaneseq
        %v2824 = vshrl.u32 %v2823, 7
        %v2825 = vsub.s32 %v2822, %v2824
        %v2826 = vrot.slane %v2812, %v2825
        %v2827 = vcombine.low %v2634, %v2642
        %v2828 = vcombine.high %v2634, %v2642
        %v2830 = vunpack.c.l.s4 1983009808
        %v2831 = vunpack.c.0.s8 %v2830
        %v2832 = vlaneseq
        %v2833 = vshrl.u32 %v2832, 7
        %v2834 = vsub.s32 %v2831, %v2833
        %v2835 = vrot.slane %v2827, %v2834
        %v2837 = vunpack.c.l.s4 1983009808
        %v2838 = vunpack.c.0.s8 %v2837
        %v2839 = vlaneseq
        %v2840 = vshrl.u32 %v2839, 7
        %v2841 = vsub.s32 %v2838, %v2840
        %v2842 = vrot.slane %v2828, %v2841
        %v2843 = vcombine.low %v2646, %v2654
        %v2844 = vcombine.high %v2646, %v2654
        %v2846 = vunpack.c.l.s4 1983009808
        %v2847 = vunpack.c.0.s8 %v2846
        %v2848 = vlaneseq
        %v2849 = vshrl.u32 %v2848, 7
        %v2850 = vsub.s32 %v2847, %v2849
        %v2851 = vrot.slane %v2843, %v2850
        %v2853 = vunpack.c.l.s4 1983009808
        %v2854 = vunpack.c.0.s8 %v2853
        %v2855 = vlaneseq
        %v2856 = vshrl.u32 %v2855, 7
        %v2857 = vsub.s32 %v2854, %v2856
        %v2858 = vrot.slane %v2844, %v2857
        %v2859 = vcombine.low %v2650, %v2658
        %v2860 = vcombine.high %v2650, %v2658
        %v2862 = vunpack.c.l.s4 1983009808
        %v2863 = vunpack.c.0.s8 %v2862
        %v2864 = vlaneseq
        %v2865 = vshrl.u32 %v2864, 7
        %v2866 = vsub.s32 %v2863, %v2865
        %v2867 = vrot.slane %v2859, %v2866
        %v2869 = vunpack.c.l.s4 1983009808
        %v2870 = vunpack.c.0.s8 %v2869
        %v2871 = vlaneseq
        %v2872 = vshrl.u32 %v2871, 7
        %v2873 = vsub.s32 %v2870, %v2872
        %v2874 = vrot.slane %v2860, %v2873
        %v2875 = vcombine.low %v2819, %v2835
        %v2876 = vcombine.high %v2819, %v2835
        %v2878 = vunpack.c.l.s4 1934713408
        %v2879 = vunpack.c.0.s8 %v2878
        %v2880 = vlaneseq
        %v2881 = vshrl.u32 %v2880, 7
        %v2882 = vsub.s32 %v2879, %v2881
        %v2883 = vrot.slane %v2875, %v2882
        %v2885 = vunpack.c.l.s4 1934713408
        %v2886 = vunpack.c.0.s8 %v2885
        %v2887 = vlaneseq
        %v2888 = vshrl.u32 %v2887, 7
        %v2889 = vsub.s32 %v2886, %v2888
        %v2890 = vrot.slane %v2876, %v2889
        %v2891 = vcombine.low %v2826, %v2842
        %v2892 = vcombine.high %v2826, %v2842
        %v2894 = vunpack.c.l.s4 1934713408
        %v2895 = vunpack.c.0.s8 %v2894
        %v2896 = vlaneseq
        %v2897 = vshrl.u32 %v2896, 7
        %v2898 = vsub.s32 %v2895, %v2897
        %v2899 = vrot.slane %v2891, %v2898
        %v2901 = vunpack.c.l.s4 1934713408
        %v2902 = vunpack.c.0.s8 %v2901
        %v2903 = vlaneseq
        %v2904 = vshrl.u32 %v2903, 7
        %v2905 = vsub.s32 %v2902, %v2904
        %v2906 = vrot.slane %v2892, %v2905
        %v2907 = vcombine.low %v2851, %v2867
        %v2908 = vcombine.high %v2851, %v2867
        %v2910 = vunpack.c.l.s4 1934713408
        %v2911 = vunpack.c.0.s8 %v2910
        %v2912 = vlaneseq
        %v2913 = vshrl.u32 %v2912, 7
        %v2914 = vsub.s32 %v2911, %v2913
        %v2915 = vrot.slane %v2907, %v2914
        %v2917 = vunpack.c.l.s4 1934713408
        %v2918 = vunpack.c.0.s8 %v2917
        %v2919 = vlaneseq
        %v2920 = vshrl.u32 %v2919, 7
        %v2921 = vsub.s32 %v2918, %v2920
        %v2922 = vrot.slane %v2908, %v2921
        %v2923 = vcombine.low %v2858, %v2874
        %v2924 = vcombine.high %v2858, %v2874
        %v2926 = vunpack.c.l.s4 1934713408
        %v2927 = vunpack.c.0.s8 %v2926
        %v2928 = vlaneseq
        %v2929 = vshrl.u32 %v2928, 7
        %v2930 = vsub.s32 %v2927, %v2929
        %v2931 = vrot.slane %v2923, %v2930
        %v2933 = vunpack.c.l.s4 1934713408
        %v2934 = vunpack.c.0.s8 %v2933
        %v2935 = vlaneseq
        %v2936 = vshrl.u32 %v2935, 7
        %v2937 = vsub.s32 %v2934, %v2936
        %v2938 = vrot.slane %v2924, %v2937
        %v2939 = vcombine.low %v2883, %v2915
        %v2940 = vcombine.high %v2883, %v2915
        %v2941 = vcombine.low %v2890, %v2922
        %v2942 = vcombine.high %v2890, %v2922
        %v2943 = vcombine.low %v2899, %v2931
        %v2944 = vcombine.high %v2899, %v2931
        %v2945 = vcombine.low %v2906, %v2938
        %v2946 = vcombine.high %v2906, %v2938
        %2948 = vrot.lane.b32.xlu0 %v2804, 16
        %v2949 = vpop.permute.xlu0 %2948
        %2952 = vrot.lane.b32.xlu0 %v2805, 32
        %v2953 = vpop.permute.xlu0 %2952
        %2956 = vrot.lane.b32.xlu0 %v2806, 48
        %v2957 = vpop.permute.xlu0 %2956
        %2960 = vrot.lane.b32.xlu0 %v2807, 64
        %v2961 = vpop.permute.xlu0 %2960
        %2964 = vrot.lane.b32.xlu0 %v2808, 80
        %v2965 = vpop.permute.xlu0 %2964
        %2968 = vrot.lane.b32.xlu0 %v2809, 96
        %v2969 = vpop.permute.xlu0 %2968
        %2972 = vrot.lane.b32.xlu0 %v2810, 112
        %v2973 = vpop.permute.xlu0 %2972
        %2976 = vrot.lane.b32.xlu0 %v2940, 16
        %v2977 = vpop.permute.xlu0 %2976
        %2980 = vrot.lane.b32.xlu0 %v2941, 32
        %v2981 = vpop.permute.xlu0 %2980
        %2984 = vrot.lane.b32.xlu0 %v2942, 48
        %v2985 = vpop.permute.xlu0 %2984
        %2988 = vrot.lane.b32.xlu0 %v2943, 64
        %v2989 = vpop.permute.xlu0 %2988
        %2992 = vrot.lane.b32.xlu0 %v2944, 80
        %v2993 = vpop.permute.xlu0 %2992
        %2996 = vrot.lane.b32.xlu0 %v2945, 96
        %v2997 = vpop.permute.xlu0 %2996
        %3000 = vrot.lane.b32.xlu0 %v2946, 112
        %v3001 = vpop.permute.xlu0 %3000
        %v3003 = vsel %vm1013, %v2803, %v2949
        %v3004 = vsel %vm1015, %v3003, %v2953
        %v3005 = vsel %vm1017, %v3004, %v2957
        %v3006 = vsel %vm1019, %v3005, %v2961
        %v3007 = vsel %vm1021, %v3006, %v2965
        %v3008 = vsel %vm1023, %v3007, %v2969
        %v3009 = vsel %vm1025, %v3008, %v2973
        %v3010 = vsel %vm1013, %v2939, %v2977
        %v3011 = vsel %vm1015, %v3010, %v2981
        %v3012 = vsel %vm1017, %v3011, %v2985
        %v3013 = vsel %vm1019, %v3012, %v2989
        %v3014 = vsel %vm1021, %v3013, %v2993
        %v3015 = vsel %vm1023, %v3014, %v2997
        %v3016 = vsel %vm1025, %v3015, %v3001
        %vm3017 = vcmask 1045504
        %v3018 = vrot.slane %v661, 2
        %v3019 = vrot.slane %v662, 2
        %v3020 = vsel %vm3017, %v3018, %v3019
        %v3021 = vrot.slane %v663, 2
        %v3022 = vsel %vm3017, %v3019, %v3021
        %v3023 = vrot.slane %v664, 2
        %v3024 = vrot.slane %v665, 2
        %v3025 = vsel %vm3017, %v3023, %v3024
        %v3026 = vrot.slane %v666, 2
        %v3027 = vsel %vm3017, %v3024, %v3026
        %v3028 = vrot.slane %v667, 2
        %v3029 = vrot.slane %v668, 2
        %v3030 = vsel %vm3017, %v3028, %v3029
        %v3031 = vrot.slane %v669, 2
        %v3032 = vsel %vm3017, %v3029, %v3031
        %v3033 = vrot.slane %v670, 2
        %v3034 = vrot.slane %v671, 2
        %v3035 = vsel %vm3017, %v3033, %v3034
        %v3036 = vrot.slane %v672, 2
        %v3037 = vsel %vm3017, %v3034, %v3036
        %v3038 = vrot.slane %v673, 2
        %v3039 = vrot.slane %v674, 2
        %v3040 = vsel %vm3017, %v3038, %v3039
        %v3041 = vrot.slane %v675, 2
        %v3042 = vsel %vm3017, %v3039, %v3041
        %v3043 = vrot.slane %v676, 2
        %v3044 = vrot.slane %v677, 2
        %v3045 = vsel %vm3017, %v3043, %v3044
        %v3046 = vrot.slane %v678, 2
        %v3047 = vsel %vm3017, %v3044, %v3046
        %v3048 = vrot.slane %v679, 2
        %v3049 = vrot.slane %v680, 2
        %v3050 = vsel %vm3017, %v3048, %v3049
        %v3051 = vrot.slane %v681, 2
        %v3052 = vsel %vm3017, %v3049, %v3051
        %v3053 = vrot.slane %v682, 2
        %v3054 = vrot.slane %v683, 2
        %v3055 = vsel %vm3017, %v3053, %v3054
        %v3056 = vrot.slane %v684, 2
        %v3057 = vsel %vm3017, %v3054, %v3056
        %v3074 = vcombine.low %v3020, %v3030
        %v3075 = vcombine.high %v3020, %v3030
        %v3077 = vunpack.c.l.s4 1983009808
        %v3078 = vunpack.c.0.s8 %v3077
        %v3079 = vlaneseq
        %v3080 = vshrl.u32 %v3079, 7
        %v3081 = vsub.s32 %v3078, %v3080
        %v3082 = vrot.slane %v3074, %v3081
        %v3084 = vunpack.c.l.s4 1983009808
        %v3085 = vunpack.c.0.s8 %v3084
        %v3086 = vlaneseq
        %v3087 = vshrl.u32 %v3086, 7
        %v3088 = vsub.s32 %v3085, %v3087
        %v3089 = vrot.slane %v3075, %v3088
        %v3090 = vcombine.low %v3025, %v3035
        %v3091 = vcombine.high %v3025, %v3035
        %v3093 = vunpack.c.l.s4 1983009808
        %v3094 = vunpack.c.0.s8 %v3093
        %v3095 = vlaneseq
        %v3096 = vshrl.u32 %v3095, 7
        %v3097 = vsub.s32 %v3094, %v3096
        %v3098 = vrot.slane %v3090, %v3097
        %v3100 = vunpack.c.l.s4 1983009808
        %v3101 = vunpack.c.0.s8 %v3100
        %v3102 = vlaneseq
        %v3103 = vshrl.u32 %v3102, 7
        %v3104 = vsub.s32 %v3101, %v3103
        %v3105 = vrot.slane %v3091, %v3104
        %v3106 = vcombine.low %v3040, %v3050
        %v3107 = vcombine.high %v3040, %v3050
        %v3109 = vunpack.c.l.s4 1983009808
        %v3110 = vunpack.c.0.s8 %v3109
        %v3111 = vlaneseq
        %v3112 = vshrl.u32 %v3111, 7
        %v3113 = vsub.s32 %v3110, %v3112
        %v3114 = vrot.slane %v3106, %v3113
        %v3116 = vunpack.c.l.s4 1983009808
        %v3117 = vunpack.c.0.s8 %v3116
        %v3118 = vlaneseq
        %v3119 = vshrl.u32 %v3118, 7
        %v3120 = vsub.s32 %v3117, %v3119
        %v3121 = vrot.slane %v3107, %v3120
        %v3122 = vcombine.low %v3045, %v3055
        %v3123 = vcombine.high %v3045, %v3055
        %v3125 = vunpack.c.l.s4 1983009808
        %v3126 = vunpack.c.0.s8 %v3125
        %v3127 = vlaneseq
        %v3128 = vshrl.u32 %v3127, 7
        %v3129 = vsub.s32 %v3126, %v3128
        %v3130 = vrot.slane %v3122, %v3129
        %v3132 = vunpack.c.l.s4 1983009808
        %v3133 = vunpack.c.0.s8 %v3132
        %v3134 = vlaneseq
        %v3135 = vshrl.u32 %v3134, 7
        %v3136 = vsub.s32 %v3133, %v3135
        %v3137 = vrot.slane %v3123, %v3136
        %v3138 = vcombine.low %v3082, %v3098
        %v3139 = vcombine.high %v3082, %v3098
        %v3141 = vunpack.c.l.s4 1934713408
        %v3142 = vunpack.c.0.s8 %v3141
        %v3143 = vlaneseq
        %v3144 = vshrl.u32 %v3143, 7
        %v3145 = vsub.s32 %v3142, %v3144
        %v3146 = vrot.slane %v3138, %v3145
        %v3148 = vunpack.c.l.s4 1934713408
        %v3149 = vunpack.c.0.s8 %v3148
        %v3150 = vlaneseq
        %v3151 = vshrl.u32 %v3150, 7
        %v3152 = vsub.s32 %v3149, %v3151
        %v3153 = vrot.slane %v3139, %v3152
        %v3154 = vcombine.low %v3089, %v3105
        %v3155 = vcombine.high %v3089, %v3105
        %v3157 = vunpack.c.l.s4 1934713408
        %v3158 = vunpack.c.0.s8 %v3157
        %v3159 = vlaneseq
        %v3160 = vshrl.u32 %v3159, 7
        %v3161 = vsub.s32 %v3158, %v3160
        %v3162 = vrot.slane %v3154, %v3161
        %v3164 = vunpack.c.l.s4 1934713408
        %v3165 = vunpack.c.0.s8 %v3164
        %v3166 = vlaneseq
        %v3167 = vshrl.u32 %v3166, 7
        %v3168 = vsub.s32 %v3165, %v3167
        %v3169 = vrot.slane %v3155, %v3168
        %v3170 = vcombine.low %v3114, %v3130
        %v3171 = vcombine.high %v3114, %v3130
        %v3173 = vunpack.c.l.s4 1934713408
        %v3174 = vunpack.c.0.s8 %v3173
        %v3175 = vlaneseq
        %v3176 = vshrl.u32 %v3175, 7
        %v3177 = vsub.s32 %v3174, %v3176
        %v3178 = vrot.slane %v3170, %v3177
        %v3180 = vunpack.c.l.s4 1934713408
        %v3181 = vunpack.c.0.s8 %v3180
        %v3182 = vlaneseq
        %v3183 = vshrl.u32 %v3182, 7
        %v3184 = vsub.s32 %v3181, %v3183
        %v3185 = vrot.slane %v3171, %v3184
        %v3186 = vcombine.low %v3121, %v3137
        %v3187 = vcombine.high %v3121, %v3137
        %v3189 = vunpack.c.l.s4 1934713408
        %v3190 = vunpack.c.0.s8 %v3189
        %v3191 = vlaneseq
        %v3192 = vshrl.u32 %v3191, 7
        %v3193 = vsub.s32 %v3190, %v3192
        %v3194 = vrot.slane %v3186, %v3193
        %v3196 = vunpack.c.l.s4 1934713408
        %v3197 = vunpack.c.0.s8 %v3196
        %v3198 = vlaneseq
        %v3199 = vshrl.u32 %v3198, 7
        %v3200 = vsub.s32 %v3197, %v3199
        %v3201 = vrot.slane %v3187, %v3200
        %v3202 = vcombine.low %v3146, %v3178
        %v3203 = vcombine.high %v3146, %v3178
        %v3204 = vcombine.low %v3153, %v3185
        %v3205 = vcombine.high %v3153, %v3185
        %v3206 = vcombine.low %v3162, %v3194
        %v3207 = vcombine.high %v3162, %v3194
        %v3208 = vcombine.low %v3169, %v3201
        %v3209 = vcombine.high %v3169, %v3201
        %v3210 = vcombine.low %v3022, %v3032
        %v3211 = vcombine.high %v3022, %v3032
        %v3213 = vunpack.c.l.s4 1983009808
        %v3214 = vunpack.c.0.s8 %v3213
        %v3215 = vlaneseq
        %v3216 = vshrl.u32 %v3215, 7
        %v3217 = vsub.s32 %v3214, %v3216
        %v3218 = vrot.slane %v3210, %v3217
        %v3220 = vunpack.c.l.s4 1983009808
        %v3221 = vunpack.c.0.s8 %v3220
        %v3222 = vlaneseq
        %v3223 = vshrl.u32 %v3222, 7
        %v3224 = vsub.s32 %v3221, %v3223
        %v3225 = vrot.slane %v3211, %v3224
        %v3226 = vcombine.low %v3027, %v3037
        %v3227 = vcombine.high %v3027, %v3037
        %v3229 = vunpack.c.l.s4 1983009808
        %v3230 = vunpack.c.0.s8 %v3229
        %v3231 = vlaneseq
        %v3232 = vshrl.u32 %v3231, 7
        %v3233 = vsub.s32 %v3230, %v3232
        %v3234 = vrot.slane %v3226, %v3233
        %v3236 = vunpack.c.l.s4 1983009808
        %v3237 = vunpack.c.0.s8 %v3236
        %v3238 = vlaneseq
        %v3239 = vshrl.u32 %v3238, 7
        %v3240 = vsub.s32 %v3237, %v3239
        %v3241 = vrot.slane %v3227, %v3240
        %v3242 = vcombine.low %v3042, %v3052
        %v3243 = vcombine.high %v3042, %v3052
        %v3245 = vunpack.c.l.s4 1983009808
        %v3246 = vunpack.c.0.s8 %v3245
        %v3247 = vlaneseq
        %v3248 = vshrl.u32 %v3247, 7
        %v3249 = vsub.s32 %v3246, %v3248
        %v3250 = vrot.slane %v3242, %v3249
        %v3252 = vunpack.c.l.s4 1983009808
        %v3253 = vunpack.c.0.s8 %v3252
        %v3254 = vlaneseq
        %v3255 = vshrl.u32 %v3254, 7
        %v3256 = vsub.s32 %v3253, %v3255
        %v3257 = vrot.slane %v3243, %v3256
        %v3258 = vcombine.low %v3047, %v3057
        %v3259 = vcombine.high %v3047, %v3057
        %v3261 = vunpack.c.l.s4 1983009808
        %v3262 = vunpack.c.0.s8 %v3261
        %v3263 = vlaneseq
        %v3264 = vshrl.u32 %v3263, 7
        %v3265 = vsub.s32 %v3262, %v3264
        %v3266 = vrot.slane %v3258, %v3265
        %v3268 = vunpack.c.l.s4 1983009808
        %v3269 = vunpack.c.0.s8 %v3268
        %v3270 = vlaneseq
        %v3271 = vshrl.u32 %v3270, 7
        %v3272 = vsub.s32 %v3269, %v3271
        %v3273 = vrot.slane %v3259, %v3272
        %v3274 = vcombine.low %v3218, %v3234
        %v3275 = vcombine.high %v3218, %v3234
        %v3277 = vunpack.c.l.s4 1934713408
        %v3278 = vunpack.c.0.s8 %v3277
        %v3279 = vlaneseq
        %v3280 = vshrl.u32 %v3279, 7
        %v3281 = vsub.s32 %v3278, %v3280
        %v3282 = vrot.slane %v3274, %v3281
        %v3284 = vunpack.c.l.s4 1934713408
        %v3285 = vunpack.c.0.s8 %v3284
        %v3286 = vlaneseq
        %v3287 = vshrl.u32 %v3286, 7
        %v3288 = vsub.s32 %v3285, %v3287
        %v3289 = vrot.slane %v3275, %v3288
        %v3290 = vcombine.low %v3225, %v3241
        %v3291 = vcombine.high %v3225, %v3241
        %v3293 = vunpack.c.l.s4 1934713408
        %v3294 = vunpack.c.0.s8 %v3293
        %v3295 = vlaneseq
        %v3296 = vshrl.u32 %v3295, 7
        %v3297 = vsub.s32 %v3294, %v3296
        %v3298 = vrot.slane %v3290, %v3297
        %v3300 = vunpack.c.l.s4 1934713408
        %v3301 = vunpack.c.0.s8 %v3300
        %v3302 = vlaneseq
        %v3303 = vshrl.u32 %v3302, 7
        %v3304 = vsub.s32 %v3301, %v3303
        %v3305 = vrot.slane %v3291, %v3304
        %v3306 = vcombine.low %v3250, %v3266
        %v3307 = vcombine.high %v3250, %v3266
        %v3309 = vunpack.c.l.s4 1934713408
        %v3310 = vunpack.c.0.s8 %v3309
        %v3311 = vlaneseq
        %v3312 = vshrl.u32 %v3311, 7
        %v3313 = vsub.s32 %v3310, %v3312
        %v3314 = vrot.slane %v3306, %v3313
        %v3316 = vunpack.c.l.s4 1934713408
        %v3317 = vunpack.c.0.s8 %v3316
        %v3318 = vlaneseq
        %v3319 = vshrl.u32 %v3318, 7
        %v3320 = vsub.s32 %v3317, %v3319
        %v3321 = vrot.slane %v3307, %v3320
        %v3322 = vcombine.low %v3257, %v3273
        %v3323 = vcombine.high %v3257, %v3273
        %v3325 = vunpack.c.l.s4 1934713408
        %v3326 = vunpack.c.0.s8 %v3325
        %v3327 = vlaneseq
        %v3328 = vshrl.u32 %v3327, 7
        %v3329 = vsub.s32 %v3326, %v3328
        %v3330 = vrot.slane %v3322, %v3329
        %v3332 = vunpack.c.l.s4 1934713408
        %v3333 = vunpack.c.0.s8 %v3332
        %v3334 = vlaneseq
        %v3335 = vshrl.u32 %v3334, 7
        %v3336 = vsub.s32 %v3333, %v3335
        %v3337 = vrot.slane %v3323, %v3336
        %v3338 = vcombine.low %v3282, %v3314
        %v3339 = vcombine.high %v3282, %v3314
        %v3340 = vcombine.low %v3289, %v3321
        %v3341 = vcombine.high %v3289, %v3321
        %v3342 = vcombine.low %v3298, %v3330
        %v3343 = vcombine.high %v3298, %v3330
        %v3344 = vcombine.low %v3305, %v3337
        %v3345 = vcombine.high %v3305, %v3337
        %3347 = vrot.lane.b32.xlu0 %v3203, 16
        %v3348 = vpop.permute.xlu0 %3347
        %3351 = vrot.lane.b32.xlu0 %v3204, 32
        %v3352 = vpop.permute.xlu0 %3351
        %3355 = vrot.lane.b32.xlu0 %v3205, 48
        %v3356 = vpop.permute.xlu0 %3355
        %3359 = vrot.lane.b32.xlu0 %v3206, 64
        %v3360 = vpop.permute.xlu0 %3359
        %3363 = vrot.lane.b32.xlu0 %v3207, 80
        %v3364 = vpop.permute.xlu0 %3363
        %3367 = vrot.lane.b32.xlu0 %v3208, 96
        %v3368 = vpop.permute.xlu0 %3367
        %3371 = vrot.lane.b32.xlu0 %v3209, 112
        %v3372 = vpop.permute.xlu0 %3371
        %3375 = vrot.lane.b32.xlu0 %v3339, 16
        %v3376 = vpop.permute.xlu0 %3375
        %3379 = vrot.lane.b32.xlu0 %v3340, 32
        %v3380 = vpop.permute.xlu0 %3379
        %3383 = vrot.lane.b32.xlu0 %v3341, 48
        %v3384 = vpop.permute.xlu0 %3383
        %3387 = vrot.lane.b32.xlu0 %v3342, 64
        %v3388 = vpop.permute.xlu0 %3387
        %3391 = vrot.lane.b32.xlu0 %v3343, 80
        %v3392 = vpop.permute.xlu0 %3391
        %3395 = vrot.lane.b32.xlu0 %v3344, 96
        %v3396 = vpop.permute.xlu0 %3395
        %3399 = vrot.lane.b32.xlu0 %v3345, 112
        %v3400 = vpop.permute.xlu0 %3399
        %v3402 = vsel %vm1013, %v3202, %v3348
        %v3403 = vsel %vm1015, %v3402, %v3352
        %v3404 = vsel %vm1017, %v3403, %v3356
        %v3405 = vsel %vm1019, %v3404, %v3360
        %v3406 = vsel %vm1021, %v3405, %v3364
        %v3407 = vsel %vm1023, %v3406, %v3368
        %v3408 = vsel %vm1025, %v3407, %v3372
        %v3409 = vsel %vm1013, %v3338, %v3376
        %v3410 = vsel %vm1015, %v3409, %v3380
        %v3411 = vsel %vm1017, %v3410, %v3384
        %v3412 = vsel %vm1019, %v3411, %v3388
        %v3413 = vsel %vm1021, %v3412, %v3392
        %v3414 = vsel %vm1023, %v3413, %v3396
        %v3415 = vsel %vm1025, %v3414, %v3400
        %3416 = vrot.lane.b32.xlu0 %v3020, 127
        %v3417 = vpop.permute.xlu0 %3416
        %3418 = vrot.lane.b32.xlu0 %v3022, 127
        %v3419 = vpop.permute.xlu0 %3418
        %3420 = vrot.lane.b32.xlu0 %v3025, 127
        %v3421 = vpop.permute.xlu0 %3420
        %3422 = vrot.lane.b32.xlu0 %v3027, 127
        %v3423 = vpop.permute.xlu0 %3422
        %3424 = vrot.lane.b32.xlu0 %v3030, 127
        %v3425 = vpop.permute.xlu0 %3424
        %3426 = vrot.lane.b32.xlu0 %v3032, 127
        %v3427 = vpop.permute.xlu0 %3426
        %3428 = vrot.lane.b32.xlu0 %v3035, 127
        %v3429 = vpop.permute.xlu0 %3428
        %3430 = vrot.lane.b32.xlu0 %v3037, 127
        %v3431 = vpop.permute.xlu0 %3430
        %3432 = vrot.lane.b32.xlu0 %v3040, 127
        %v3433 = vpop.permute.xlu0 %3432
        %3434 = vrot.lane.b32.xlu0 %v3042, 127
        %v3435 = vpop.permute.xlu0 %3434
        %3436 = vrot.lane.b32.xlu0 %v3045, 127
        %v3437 = vpop.permute.xlu0 %3436
        %3438 = vrot.lane.b32.xlu0 %v3047, 127
        %v3439 = vpop.permute.xlu0 %3438
        %3440 = vrot.lane.b32.xlu0 %v3050, 127
        %v3441 = vpop.permute.xlu0 %3440
        %3442 = vrot.lane.b32.xlu0 %v3052, 127
        %v3443 = vpop.permute.xlu0 %3442
        %3444 = vrot.lane.b32.xlu0 %v3055, 127
        %v3445 = vpop.permute.xlu0 %3444
        %3446 = vrot.lane.b32.xlu0 %v3057, 127
        %v3447 = vpop.permute.xlu0 %3446
        %v3464 = vcombine.low %v3417, %v3425
        %v3465 = vcombine.high %v3417, %v3425
        %v3467 = vunpack.c.l.s4 1983009808
        %v3468 = vunpack.c.0.s8 %v3467
        %v3469 = vlaneseq
        %v3470 = vshrl.u32 %v3469, 7
        %v3471 = vsub.s32 %v3468, %v3470
        %v3472 = vrot.slane %v3464, %v3471
        %v3474 = vunpack.c.l.s4 1983009808
        %v3475 = vunpack.c.0.s8 %v3474
        %v3476 = vlaneseq
        %v3477 = vshrl.u32 %v3476, 7
        %v3478 = vsub.s32 %v3475, %v3477
        %v3479 = vrot.slane %v3465, %v3478
        %v3480 = vcombine.low %v3421, %v3429
        %v3481 = vcombine.high %v3421, %v3429
        %v3483 = vunpack.c.l.s4 1983009808
        %v3484 = vunpack.c.0.s8 %v3483
        %v3485 = vlaneseq
        %v3486 = vshrl.u32 %v3485, 7
        %v3487 = vsub.s32 %v3484, %v3486
        %v3488 = vrot.slane %v3480, %v3487
        %v3490 = vunpack.c.l.s4 1983009808
        %v3491 = vunpack.c.0.s8 %v3490
        %v3492 = vlaneseq
        %v3493 = vshrl.u32 %v3492, 7
        %v3494 = vsub.s32 %v3491, %v3493
        %v3495 = vrot.slane %v3481, %v3494
        %v3496 = vcombine.low %v3433, %v3441
        %v3497 = vcombine.high %v3433, %v3441
        %v3499 = vunpack.c.l.s4 1983009808
        %v3500 = vunpack.c.0.s8 %v3499
        %v3501 = vlaneseq
        %v3502 = vshrl.u32 %v3501, 7
        %v3503 = vsub.s32 %v3500, %v3502
        %v3504 = vrot.slane %v3496, %v3503
        %v3506 = vunpack.c.l.s4 1983009808
        %v3507 = vunpack.c.0.s8 %v3506
        %v3508 = vlaneseq
        %v3509 = vshrl.u32 %v3508, 7
        %v3510 = vsub.s32 %v3507, %v3509
        %v3511 = vrot.slane %v3497, %v3510
        %v3512 = vcombine.low %v3437, %v3445
        %v3513 = vcombine.high %v3437, %v3445
        %v3515 = vunpack.c.l.s4 1983009808
        %v3516 = vunpack.c.0.s8 %v3515
        %v3517 = vlaneseq
        %v3518 = vshrl.u32 %v3517, 7
        %v3519 = vsub.s32 %v3516, %v3518
        %v3520 = vrot.slane %v3512, %v3519
        %v3522 = vunpack.c.l.s4 1983009808
        %v3523 = vunpack.c.0.s8 %v3522
        %v3524 = vlaneseq
        %v3525 = vshrl.u32 %v3524, 7
        %v3526 = vsub.s32 %v3523, %v3525
        %v3527 = vrot.slane %v3513, %v3526
        %v3528 = vcombine.low %v3472, %v3488
        %v3529 = vcombine.high %v3472, %v3488
        %v3531 = vunpack.c.l.s4 1934713408
        %v3532 = vunpack.c.0.s8 %v3531
        %v3533 = vlaneseq
        %v3534 = vshrl.u32 %v3533, 7
        %v3535 = vsub.s32 %v3532, %v3534
        %v3536 = vrot.slane %v3528, %v3535
        %v3538 = vunpack.c.l.s4 1934713408
        %v3539 = vunpack.c.0.s8 %v3538
        %v3540 = vlaneseq
        %v3541 = vshrl.u32 %v3540, 7
        %v3542 = vsub.s32 %v3539, %v3541
        %v3543 = vrot.slane %v3529, %v3542
        %v3544 = vcombine.low %v3479, %v3495
        %v3545 = vcombine.high %v3479, %v3495
        %v3547 = vunpack.c.l.s4 1934713408
        %v3548 = vunpack.c.0.s8 %v3547
        %v3549 = vlaneseq
        %v3550 = vshrl.u32 %v3549, 7
        %v3551 = vsub.s32 %v3548, %v3550
        %v3552 = vrot.slane %v3544, %v3551
        %v3554 = vunpack.c.l.s4 1934713408
        %v3555 = vunpack.c.0.s8 %v3554
        %v3556 = vlaneseq
        %v3557 = vshrl.u32 %v3556, 7
        %v3558 = vsub.s32 %v3555, %v3557
        %v3559 = vrot.slane %v3545, %v3558
        %v3560 = vcombine.low %v3504, %v3520
        %v3561 = vcombine.high %v3504, %v3520
        %v3563 = vunpack.c.l.s4 1934713408
        %v3564 = vunpack.c.0.s8 %v3563
        %v3565 = vlaneseq
        %v3566 = vshrl.u32 %v3565, 7
        %v3567 = vsub.s32 %v3564, %v3566
        %v3568 = vrot.slane %v3560, %v3567
        %v3570 = vunpack.c.l.s4 1934713408
        %v3571 = vunpack.c.0.s8 %v3570
        %v3572 = vlaneseq
        %v3573 = vshrl.u32 %v3572, 7
        %v3574 = vsub.s32 %v3571, %v3573
        %v3575 = vrot.slane %v3561, %v3574
        %v3576 = vcombine.low %v3511, %v3527
        %v3577 = vcombine.high %v3511, %v3527
        %v3579 = vunpack.c.l.s4 1934713408
        %v3580 = vunpack.c.0.s8 %v3579
        %v3581 = vlaneseq
        %v3582 = vshrl.u32 %v3581, 7
        %v3583 = vsub.s32 %v3580, %v3582
        %v3584 = vrot.slane %v3576, %v3583
        %v3586 = vunpack.c.l.s4 1934713408
        %v3587 = vunpack.c.0.s8 %v3586
        %v3588 = vlaneseq
        %v3589 = vshrl.u32 %v3588, 7
        %v3590 = vsub.s32 %v3587, %v3589
        %v3591 = vrot.slane %v3577, %v3590
        %v3592 = vcombine.low %v3536, %v3568
        %v3593 = vcombine.high %v3536, %v3568
        %v3594 = vcombine.low %v3543, %v3575
        %v3595 = vcombine.high %v3543, %v3575
        %v3596 = vcombine.low %v3552, %v3584
        %v3597 = vcombine.high %v3552, %v3584
        %v3598 = vcombine.low %v3559, %v3591
        %v3599 = vcombine.high %v3559, %v3591
        %v3600 = vcombine.low %v3419, %v3427
        %v3601 = vcombine.high %v3419, %v3427
        %v3603 = vunpack.c.l.s4 1983009808
        %v3604 = vunpack.c.0.s8 %v3603
        %v3605 = vlaneseq
        %v3606 = vshrl.u32 %v3605, 7
        %v3607 = vsub.s32 %v3604, %v3606
        %v3608 = vrot.slane %v3600, %v3607
        %v3610 = vunpack.c.l.s4 1983009808
        %v3611 = vunpack.c.0.s8 %v3610
        %v3612 = vlaneseq
        %v3613 = vshrl.u32 %v3612, 7
        %v3614 = vsub.s32 %v3611, %v3613
        %v3615 = vrot.slane %v3601, %v3614
        %v3616 = vcombine.low %v3423, %v3431
        %v3617 = vcombine.high %v3423, %v3431
        %v3619 = vunpack.c.l.s4 1983009808
        %v3620 = vunpack.c.0.s8 %v3619
        %v3621 = vlaneseq
        %v3622 = vshrl.u32 %v3621, 7
        %v3623 = vsub.s32 %v3620, %v3622
        %v3624 = vrot.slane %v3616, %v3623
        %v3626 = vunpack.c.l.s4 1983009808
        %v3627 = vunpack.c.0.s8 %v3626
        %v3628 = vlaneseq
        %v3629 = vshrl.u32 %v3628, 7
        %v3630 = vsub.s32 %v3627, %v3629
        %v3631 = vrot.slane %v3617, %v3630
        %v3632 = vcombine.low %v3435, %v3443
        %v3633 = vcombine.high %v3435, %v3443
        %v3635 = vunpack.c.l.s4 1983009808
        %v3636 = vunpack.c.0.s8 %v3635
        %v3637 = vlaneseq
        %v3638 = vshrl.u32 %v3637, 7
        %v3639 = vsub.s32 %v3636, %v3638
        %v3640 = vrot.slane %v3632, %v3639
        %v3642 = vunpack.c.l.s4 1983009808
        %v3643 = vunpack.c.0.s8 %v3642
        %v3644 = vlaneseq
        %v3645 = vshrl.u32 %v3644, 7
        %v3646 = vsub.s32 %v3643, %v3645
        %v3647 = vrot.slane %v3633, %v3646
        %v3648 = vcombine.low %v3439, %v3447
        %v3649 = vcombine.high %v3439, %v3447
        %v3651 = vunpack.c.l.s4 1983009808
        %v3652 = vunpack.c.0.s8 %v3651
        %v3653 = vlaneseq
        %v3654 = vshrl.u32 %v3653, 7
        %v3655 = vsub.s32 %v3652, %v3654
        %v3656 = vrot.slane %v3648, %v3655
        %v3658 = vunpack.c.l.s4 1983009808
        %v3659 = vunpack.c.0.s8 %v3658
        %v3660 = vlaneseq
        %v3661 = vshrl.u32 %v3660, 7
        %v3662 = vsub.s32 %v3659, %v3661
        %v3663 = vrot.slane %v3649, %v3662
        %v3664 = vcombine.low %v3608, %v3624
        %v3665 = vcombine.high %v3608, %v3624
        %v3667 = vunpack.c.l.s4 1934713408
        %v3668 = vunpack.c.0.s8 %v3667
        %v3669 = vlaneseq
        %v3670 = vshrl.u32 %v3669, 7
        %v3671 = vsub.s32 %v3668, %v3670
        %v3672 = vrot.slane %v3664, %v3671
        %v3674 = vunpack.c.l.s4 1934713408
        %v3675 = vunpack.c.0.s8 %v3674
        %v3676 = vlaneseq
        %v3677 = vshrl.u32 %v3676, 7
        %v3678 = vsub.s32 %v3675, %v3677
        %v3679 = vrot.slane %v3665, %v3678
        %v3680 = vcombine.low %v3615, %v3631
        %v3681 = vcombine.high %v3615, %v3631
        %v3683 = vunpack.c.l.s4 1934713408
        %v3684 = vunpack.c.0.s8 %v3683
        %v3685 = vlaneseq
        %v3686 = vshrl.u32 %v3685, 7
        %v3687 = vsub.s32 %v3684, %v3686
        %v3688 = vrot.slane %v3680, %v3687
        %v3690 = vunpack.c.l.s4 1934713408
        %v3691 = vunpack.c.0.s8 %v3690
        %v3692 = vlaneseq
        %v3693 = vshrl.u32 %v3692, 7
        %v3694 = vsub.s32 %v3691, %v3693
        %v3695 = vrot.slane %v3681, %v3694
        %v3696 = vcombine.low %v3640, %v3656
        %v3697 = vcombine.high %v3640, %v3656
        %v3699 = vunpack.c.l.s4 1934713408
        %v3700 = vunpack.c.0.s8 %v3699
        %v3701 = vlaneseq
        %v3702 = vshrl.u32 %v3701, 7
        %v3703 = vsub.s32 %v3700, %v3702
        %v3704 = vrot.slane %v3696, %v3703
        %v3706 = vunpack.c.l.s4 1934713408
        %v3707 = vunpack.c.0.s8 %v3706
        %v3708 = vlaneseq
        %v3709 = vshrl.u32 %v3708, 7
        %v3710 = vsub.s32 %v3707, %v3709
        %v3711 = vrot.slane %v3697, %v3710
        %v3712 = vcombine.low %v3647, %v3663
        %v3713 = vcombine.high %v3647, %v3663
        %v3715 = vunpack.c.l.s4 1934713408
        %v3716 = vunpack.c.0.s8 %v3715
        %v3717 = vlaneseq
        %v3718 = vshrl.u32 %v3717, 7
        %v3719 = vsub.s32 %v3716, %v3718
        %v3720 = vrot.slane %v3712, %v3719
        %v3722 = vunpack.c.l.s4 1934713408
        %v3723 = vunpack.c.0.s8 %v3722
        %v3724 = vlaneseq
        %v3725 = vshrl.u32 %v3724, 7
        %v3726 = vsub.s32 %v3723, %v3725
        %v3727 = vrot.slane %v3713, %v3726
        %v3728 = vcombine.low %v3672, %v3704
        %v3729 = vcombine.high %v3672, %v3704
        %v3730 = vcombine.low %v3679, %v3711
        %v3731 = vcombine.high %v3679, %v3711
        %v3732 = vcombine.low %v3688, %v3720
        %v3733 = vcombine.high %v3688, %v3720
        %v3734 = vcombine.low %v3695, %v3727
        %v3735 = vcombine.high %v3695, %v3727
        %3737 = vrot.lane.b32.xlu0 %v3593, 16
        %v3738 = vpop.permute.xlu0 %3737
        %3741 = vrot.lane.b32.xlu0 %v3594, 32
        %v3742 = vpop.permute.xlu0 %3741
        %3745 = vrot.lane.b32.xlu0 %v3595, 48
        %v3746 = vpop.permute.xlu0 %3745
        %3749 = vrot.lane.b32.xlu0 %v3596, 64
        %v3750 = vpop.permute.xlu0 %3749
        %3753 = vrot.lane.b32.xlu0 %v3597, 80
        %v3754 = vpop.permute.xlu0 %3753
        %3757 = vrot.lane.b32.xlu0 %v3598, 96
        %v3758 = vpop.permute.xlu0 %3757
        %3761 = vrot.lane.b32.xlu0 %v3599, 112
        %v3762 = vpop.permute.xlu0 %3761
        %3765 = vrot.lane.b32.xlu0 %v3729, 16
        %v3766 = vpop.permute.xlu0 %3765
        %3769 = vrot.lane.b32.xlu0 %v3730, 32
        %v3770 = vpop.permute.xlu0 %3769
        %3773 = vrot.lane.b32.xlu0 %v3731, 48
        %v3774 = vpop.permute.xlu0 %3773
        %3777 = vrot.lane.b32.xlu0 %v3732, 64
        %v3778 = vpop.permute.xlu0 %3777
        %3781 = vrot.lane.b32.xlu0 %v3733, 80
        %v3782 = vpop.permute.xlu0 %3781
        %3785 = vrot.lane.b32.xlu0 %v3734, 96
        %v3786 = vpop.permute.xlu0 %3785
        %3789 = vrot.lane.b32.xlu0 %v3735, 112
        %v3790 = vpop.permute.xlu0 %3789
        %v3792 = vsel %vm1013, %v3592, %v3738
        %v3793 = vsel %vm1015, %v3792, %v3742
        %v3794 = vsel %vm1017, %v3793, %v3746
        %v3795 = vsel %vm1019, %v3794, %v3750
        %v3796 = vsel %vm1021, %v3795, %v3754
        %v3797 = vsel %vm1023, %v3796, %v3758
        %v3798 = vsel %vm1025, %v3797, %v3762
        %v3799 = vsel %vm1013, %v3728, %v3766
        %v3800 = vsel %vm1015, %v3799, %v3770
        %v3801 = vsel %vm1017, %v3800, %v3774
        %v3802 = vsel %vm1019, %v3801, %v3778
        %v3803 = vsel %vm1021, %v3802, %v3782
        %v3804 = vsel %vm1023, %v3803, %v3786
        %v3805 = vsel %vm1025, %v3804, %v3790
        %3806 = vrot.lane.b32.xlu0 %v3020, 126
        %v3807 = vpop.permute.xlu0 %3806
        %3808 = vrot.lane.b32.xlu0 %v3022, 126
        %v3809 = vpop.permute.xlu0 %3808
        %3810 = vrot.lane.b32.xlu0 %v3025, 126
        %v3811 = vpop.permute.xlu0 %3810
        %3812 = vrot.lane.b32.xlu0 %v3027, 126
        %v3813 = vpop.permute.xlu0 %3812
        %3814 = vrot.lane.b32.xlu0 %v3030, 126
        %v3815 = vpop.permute.xlu0 %3814
        %3816 = vrot.lane.b32.xlu0 %v3032, 126
        %v3817 = vpop.permute.xlu0 %3816
        %3818 = vrot.lane.b32.xlu0 %v3035, 126
        %v3819 = vpop.permute.xlu0 %3818
        %3820 = vrot.lane.b32.xlu0 %v3037, 126
        %v3821 = vpop.permute.xlu0 %3820
        %3822 = vrot.lane.b32.xlu0 %v3040, 126
        %v3823 = vpop.permute.xlu0 %3822
        %3824 = vrot.lane.b32.xlu0 %v3042, 126
        %v3825 = vpop.permute.xlu0 %3824
        %3826 = vrot.lane.b32.xlu0 %v3045, 126
        %v3827 = vpop.permute.xlu0 %3826
        %3828 = vrot.lane.b32.xlu0 %v3047, 126
        %v3829 = vpop.permute.xlu0 %3828
        %3830 = vrot.lane.b32.xlu0 %v3050, 126
        %v3831 = vpop.permute.xlu0 %3830
        %3832 = vrot.lane.b32.xlu0 %v3052, 126
        %v3833 = vpop.permute.xlu0 %3832
        %3834 = vrot.lane.b32.xlu0 %v3055, 126
        %v3835 = vpop.permute.xlu0 %3834
        %3836 = vrot.lane.b32.xlu0 %v3057, 126
        %v3837 = vpop.permute.xlu0 %3836
        %v3854 = vcombine.low %v3807, %v3815
        %v3855 = vcombine.high %v3807, %v3815
        %v3857 = vunpack.c.l.s4 1983009808
        %v3858 = vunpack.c.0.s8 %v3857
        %v3859 = vlaneseq
        %v3860 = vshrl.u32 %v3859, 7
        %v3861 = vsub.s32 %v3858, %v3860
        %v3862 = vrot.slane %v3854, %v3861
        %v3864 = vunpack.c.l.s4 1983009808
        %v3865 = vunpack.c.0.s8 %v3864
        %v3866 = vlaneseq
        %v3867 = vshrl.u32 %v3866, 7
        %v3868 = vsub.s32 %v3865, %v3867
        %v3869 = vrot.slane %v3855, %v3868
        %v3870 = vcombine.low %v3811, %v3819
        %v3871 = vcombine.high %v3811, %v3819
        %v3873 = vunpack.c.l.s4 1983009808
        %v3874 = vunpack.c.0.s8 %v3873
        %v3875 = vlaneseq
        %v3876 = vshrl.u32 %v3875, 7
        %v3877 = vsub.s32 %v3874, %v3876
        %v3878 = vrot.slane %v3870, %v3877
        %v3880 = vunpack.c.l.s4 1983009808
        %v3881 = vunpack.c.0.s8 %v3880
        %v3882 = vlaneseq
        %v3883 = vshrl.u32 %v3882, 7
        %v3884 = vsub.s32 %v3881, %v3883
        %v3885 = vrot.slane %v3871, %v3884
        %v3886 = vcombine.low %v3823, %v3831
        %v3887 = vcombine.high %v3823, %v3831
        %v3889 = vunpack.c.l.s4 1983009808
        %v3890 = vunpack.c.0.s8 %v3889
        %v3891 = vlaneseq
        %v3892 = vshrl.u32 %v3891, 7
        %v3893 = vsub.s32 %v3890, %v3892
        %v3894 = vrot.slane %v3886, %v3893
        %v3896 = vunpack.c.l.s4 1983009808
        %v3897 = vunpack.c.0.s8 %v3896
        %v3898 = vlaneseq
        %v3899 = vshrl.u32 %v3898, 7
        %v3900 = vsub.s32 %v3897, %v3899
        %v3901 = vrot.slane %v3887, %v3900
        %v3902 = vcombine.low %v3827, %v3835
        %v3903 = vcombine.high %v3827, %v3835
        %v3905 = vunpack.c.l.s4 1983009808
        %v3906 = vunpack.c.0.s8 %v3905
        %v3907 = vlaneseq
        %v3908 = vshrl.u32 %v3907, 7
        %v3909 = vsub.s32 %v3906, %v3908
        %v3910 = vrot.slane %v3902, %v3909
        %v3912 = vunpack.c.l.s4 1983009808
        %v3913 = vunpack.c.0.s8 %v3912
        %v3914 = vlaneseq
        %v3915 = vshrl.u32 %v3914, 7
        %v3916 = vsub.s32 %v3913, %v3915
        %v3917 = vrot.slane %v3903, %v3916
        %v3918 = vcombine.low %v3862, %v3878
        %v3919 = vcombine.high %v3862, %v3878
        %v3921 = vunpack.c.l.s4 1934713408
        %v3922 = vunpack.c.0.s8 %v3921
        %v3923 = vlaneseq
        %v3924 = vshrl.u32 %v3923, 7
        %v3925 = vsub.s32 %v3922, %v3924
        %v3926 = vrot.slane %v3918, %v3925
        %v3928 = vunpack.c.l.s4 1934713408
        %v3929 = vunpack.c.0.s8 %v3928
        %v3930 = vlaneseq
        %v3931 = vshrl.u32 %v3930, 7
        %v3932 = vsub.s32 %v3929, %v3931
        %v3933 = vrot.slane %v3919, %v3932
        %v3934 = vcombine.low %v3869, %v3885
        %v3935 = vcombine.high %v3869, %v3885
        %v3937 = vunpack.c.l.s4 1934713408
        %v3938 = vunpack.c.0.s8 %v3937
        %v3939 = vlaneseq
        %v3940 = vshrl.u32 %v3939, 7
        %v3941 = vsub.s32 %v3938, %v3940
        %v3942 = vrot.slane %v3934, %v3941
        %v3944 = vunpack.c.l.s4 1934713408
        %v3945 = vunpack.c.0.s8 %v3944
        %v3946 = vlaneseq
        %v3947 = vshrl.u32 %v3946, 7
        %v3948 = vsub.s32 %v3945, %v3947
        %v3949 = vrot.slane %v3935, %v3948
        %v3950 = vcombine.low %v3894, %v3910
        %v3951 = vcombine.high %v3894, %v3910
        %v3953 = vunpack.c.l.s4 1934713408
        %v3954 = vunpack.c.0.s8 %v3953
        %v3955 = vlaneseq
        %v3956 = vshrl.u32 %v3955, 7
        %v3957 = vsub.s32 %v3954, %v3956
        %v3958 = vrot.slane %v3950, %v3957
        %v3960 = vunpack.c.l.s4 1934713408
        %v3961 = vunpack.c.0.s8 %v3960
        %v3962 = vlaneseq
        %v3963 = vshrl.u32 %v3962, 7
        %v3964 = vsub.s32 %v3961, %v3963
        %v3965 = vrot.slane %v3951, %v3964
        %v3966 = vcombine.low %v3901, %v3917
        %v3967 = vcombine.high %v3901, %v3917
        %v3969 = vunpack.c.l.s4 1934713408
        %v3970 = vunpack.c.0.s8 %v3969
        %v3971 = vlaneseq
        %v3972 = vshrl.u32 %v3971, 7
        %v3973 = vsub.s32 %v3970, %v3972
        %v3974 = vrot.slane %v3966, %v3973
        %v3976 = vunpack.c.l.s4 1934713408
        %v3977 = vunpack.c.0.s8 %v3976
        %v3978 = vlaneseq
        %v3979 = vshrl.u32 %v3978, 7
        %v3980 = vsub.s32 %v3977, %v3979
        %v3981 = vrot.slane %v3967, %v3980
        %v3982 = vcombine.low %v3926, %v3958
        %v3983 = vcombine.high %v3926, %v3958
        %v3984 = vcombine.low %v3933, %v3965
        %v3985 = vcombine.high %v3933, %v3965
        %v3986 = vcombine.low %v3942, %v3974
        %v3987 = vcombine.high %v3942, %v3974
        %v3988 = vcombine.low %v3949, %v3981
        %v3989 = vcombine.high %v3949, %v3981
        %v3990 = vcombine.low %v3809, %v3817
        %v3991 = vcombine.high %v3809, %v3817
        %v3993 = vunpack.c.l.s4 1983009808
        %v3994 = vunpack.c.0.s8 %v3993
        %v3995 = vlaneseq
        %v3996 = vshrl.u32 %v3995, 7
        %v3997 = vsub.s32 %v3994, %v3996
        %v3998 = vrot.slane %v3990, %v3997
        %v4000 = vunpack.c.l.s4 1983009808
        %v4001 = vunpack.c.0.s8 %v4000
        %v4002 = vlaneseq
        %v4003 = vshrl.u32 %v4002, 7
        %v4004 = vsub.s32 %v4001, %v4003
        %v4005 = vrot.slane %v3991, %v4004
        %v4006 = vcombine.low %v3813, %v3821
        %v4007 = vcombine.high %v3813, %v3821
        %v4009 = vunpack.c.l.s4 1983009808
        %v4010 = vunpack.c.0.s8 %v4009
        %v4011 = vlaneseq
        %v4012 = vshrl.u32 %v4011, 7
        %v4013 = vsub.s32 %v4010, %v4012
        %v4014 = vrot.slane %v4006, %v4013
        %v4016 = vunpack.c.l.s4 1983009808
        %v4017 = vunpack.c.0.s8 %v4016
        %v4018 = vlaneseq
        %v4019 = vshrl.u32 %v4018, 7
        %v4020 = vsub.s32 %v4017, %v4019
        %v4021 = vrot.slane %v4007, %v4020
        %v4022 = vcombine.low %v3825, %v3833
        %v4023 = vcombine.high %v3825, %v3833
        %v4025 = vunpack.c.l.s4 1983009808
        %v4026 = vunpack.c.0.s8 %v4025
        %v4027 = vlaneseq
        %v4028 = vshrl.u32 %v4027, 7
        %v4029 = vsub.s32 %v4026, %v4028
        %v4030 = vrot.slane %v4022, %v4029
        %v4032 = vunpack.c.l.s4 1983009808
        %v4033 = vunpack.c.0.s8 %v4032
        %v4034 = vlaneseq
        %v4035 = vshrl.u32 %v4034, 7
        %v4036 = vsub.s32 %v4033, %v4035
        %v4037 = vrot.slane %v4023, %v4036
        %v4038 = vcombine.low %v3829, %v3837
        %v4039 = vcombine.high %v3829, %v3837
        %v4041 = vunpack.c.l.s4 1983009808
        %v4042 = vunpack.c.0.s8 %v4041
        %v4043 = vlaneseq
        %v4044 = vshrl.u32 %v4043, 7
        %v4045 = vsub.s32 %v4042, %v4044
        %v4046 = vrot.slane %v4038, %v4045
        %v4048 = vunpack.c.l.s4 1983009808
        %v4049 = vunpack.c.0.s8 %v4048
        %v4050 = vlaneseq
        %v4051 = vshrl.u32 %v4050, 7
        %v4052 = vsub.s32 %v4049, %v4051
        %v4053 = vrot.slane %v4039, %v4052
        %v4054 = vcombine.low %v3998, %v4014
        %v4055 = vcombine.high %v3998, %v4014
        %v4057 = vunpack.c.l.s4 1934713408
        %v4058 = vunpack.c.0.s8 %v4057
        %v4059 = vlaneseq
        %v4060 = vshrl.u32 %v4059, 7
        %v4061 = vsub.s32 %v4058, %v4060
        %v4062 = vrot.slane %v4054, %v4061
        %v4064 = vunpack.c.l.s4 1934713408
        %v4065 = vunpack.c.0.s8 %v4064
        %v4066 = vlaneseq
        %v4067 = vshrl.u32 %v4066, 7
        %v4068 = vsub.s32 %v4065, %v4067
        %v4069 = vrot.slane %v4055, %v4068
        %v4070 = vcombine.low %v4005, %v4021
        %v4071 = vcombine.high %v4005, %v4021
        %v4073 = vunpack.c.l.s4 1934713408
        %v4074 = vunpack.c.0.s8 %v4073
        %v4075 = vlaneseq
        %v4076 = vshrl.u32 %v4075, 7
        %v4077 = vsub.s32 %v4074, %v4076
        %v4078 = vrot.slane %v4070, %v4077
        %v4080 = vunpack.c.l.s4 1934713408
        %v4081 = vunpack.c.0.s8 %v4080
        %v4082 = vlaneseq
        %v4083 = vshrl.u32 %v4082, 7
        %v4084 = vsub.s32 %v4081, %v4083
        %v4085 = vrot.slane %v4071, %v4084
        %v4086 = vcombine.low %v4030, %v4046
        %v4087 = vcombine.high %v4030, %v4046
        %v4089 = vunpack.c.l.s4 1934713408
        %v4090 = vunpack.c.0.s8 %v4089
        %v4091 = vlaneseq
        %v4092 = vshrl.u32 %v4091, 7
        %v4093 = vsub.s32 %v4090, %v4092
        %v4094 = vrot.slane %v4086, %v4093
        %v4096 = vunpack.c.l.s4 1934713408
        %v4097 = vunpack.c.0.s8 %v4096
        %v4098 = vlaneseq
        %v4099 = vshrl.u32 %v4098, 7
        %v4100 = vsub.s32 %v4097, %v4099
        %v4101 = vrot.slane %v4087, %v4100
        %v4102 = vcombine.low %v4037, %v4053
        %v4103 = vcombine.high %v4037, %v4053
        %v4105 = vunpack.c.l.s4 1934713408
        %v4106 = vunpack.c.0.s8 %v4105
        %v4107 = vlaneseq
        %v4108 = vshrl.u32 %v4107, 7
        %v4109 = vsub.s32 %v4106, %v4108
        %v4110 = vrot.slane %v4102, %v4109
        %v4112 = vunpack.c.l.s4 1934713408
        %v4113 = vunpack.c.0.s8 %v4112
        %v4114 = vlaneseq
        %v4115 = vshrl.u32 %v4114, 7
        %v4116 = vsub.s32 %v4113, %v4115
        %v4117 = vrot.slane %v4103, %v4116
        %v4118 = vcombine.low %v4062, %v4094
        %v4119 = vcombine.high %v4062, %v4094
        %v4120 = vcombine.low %v4069, %v4101
        %v4121 = vcombine.high %v4069, %v4101
        %v4122 = vcombine.low %v4078, %v4110
        %v4123 = vcombine.high %v4078, %v4110
        %v4124 = vcombine.low %v4085, %v4117
        %v4125 = vcombine.high %v4085, %v4117
        %4127 = vrot.lane.b32.xlu0 %v3983, 16
        %v4128 = vpop.permute.xlu0 %4127
        %4131 = vrot.lane.b32.xlu0 %v3984, 32
        %v4132 = vpop.permute.xlu0 %4131
        %4135 = vrot.lane.b32.xlu0 %v3985, 48
        %v4136 = vpop.permute.xlu0 %4135
        %4139 = vrot.lane.b32.xlu0 %v3986, 64
        %v4140 = vpop.permute.xlu0 %4139
        %4143 = vrot.lane.b32.xlu0 %v3987, 80
        %v4144 = vpop.permute.xlu0 %4143
        %4147 = vrot.lane.b32.xlu0 %v3988, 96
        %v4148 = vpop.permute.xlu0 %4147
        %4151 = vrot.lane.b32.xlu0 %v3989, 112
        %v4152 = vpop.permute.xlu0 %4151
        %4155 = vrot.lane.b32.xlu0 %v4119, 16
        %v4156 = vpop.permute.xlu0 %4155
        %4159 = vrot.lane.b32.xlu0 %v4120, 32
        %v4160 = vpop.permute.xlu0 %4159
        %4163 = vrot.lane.b32.xlu0 %v4121, 48
        %v4164 = vpop.permute.xlu0 %4163
        %4167 = vrot.lane.b32.xlu0 %v4122, 64
        %v4168 = vpop.permute.xlu0 %4167
        %4171 = vrot.lane.b32.xlu0 %v4123, 80
        %v4172 = vpop.permute.xlu0 %4171
        %4175 = vrot.lane.b32.xlu0 %v4124, 96
        %v4176 = vpop.permute.xlu0 %4175
        %4179 = vrot.lane.b32.xlu0 %v4125, 112
        %v4180 = vpop.permute.xlu0 %4179
        %v4182 = vsel %vm1013, %v3982, %v4128
        %v4183 = vsel %vm1015, %v4182, %v4132
        %v4184 = vsel %vm1017, %v4183, %v4136
        %v4185 = vsel %vm1019, %v4184, %v4140
        %v4186 = vsel %vm1021, %v4185, %v4144
        %v4187 = vsel %vm1023, %v4186, %v4148
        %v4188 = vsel %vm1025, %v4187, %v4152
        %v4189 = vsel %vm1013, %v4118, %v4156
        %v4190 = vsel %vm1015, %v4189, %v4160
        %v4191 = vsel %vm1017, %v4190, %v4164
        %v4192 = vsel %vm1019, %v4191, %v4168
        %v4193 = vsel %vm1021, %v4192, %v4172
        %v4194 = vsel %vm1023, %v4193, %v4176
        %v4195 = vsel %vm1025, %v4194, %v4180
        %v4196 = vld [vmem:[%s2] sm:$0xf]
        %v4197 = vld [vmem:[%s388] sm:$0x1]
        %v4198 = vld [vmem:[%s4] sm:$0xf]
        %v4200 = vlaneseq
        %v4201 = vshrl.u32 %v4200, 7
        %v4202 = vsub.s32 0, %v4201
        %v4203 = vrot.slane %v4197, %v4202
        %v4205 = vmul.f32 %v4198, %v4203
        %vm4206 = vcmask 257024
        %v4207 = vsel %vm4206, %v4205, 0.0
        %4208 = vadd.xlane.f32.xlu0 %v4207
        %v4209 = vpop.xlane.xlu0 %4208
        %v4210 = vld [vmem:[%s5] sm:$0xf]
        %v4211 = vadd.f32 %v4209, %v4210
        %v4212 = vld [vmem:[%s3] sm:$0xf]
        %4214 = vset.pattern.permute.xlu0 0
        %4215 = vperm.xlu0 %4214, %v4212
        %v4216 = vpop.permute.xlu0 %4215
        %vm4218 = vcmask 588800
        %v4220 = vsel %vm4218, %v4196, 0
        %4222 = vmatprep.subr.mxu0 0.0
        %4223 = vmatpush1.msra.mxu0 0.0
        %4224 = vmatprep.subr.mxu0 0.0
        %4225 = vmatpush1.msra.mxu0 0.0
        %4226 = vmatprep.subr.mxu0 0.0
        %4227 = vmatpush1.msra.mxu0 0.0
        %4228 = vmatprep.subr.mxu0 0.0
        %4229 = vmatpush1.msra.mxu0 0.0
        %4230 = vmatprep.subr.mxu0 0.0
        %4231 = vmatpush1.msra.mxu0 0.0
        %4232 = vmatprep.subr.mxu0 0.0
        %4233 = vmatpush1.msra.mxu0 0.0
        %4234 = vmatprep.subr.mxu0 0.0
        %4235 = vmatpush1.msra.mxu0 0.0
        %4236 = vmatprep.subr.mxu0 %v4195
        %4237 = vmatpush1.msra.mxu0 %v4188
        %4238 = vmatprep.subr.mxu0 %v3805
        %4239 = vmatpush1.msra.mxu0 %v3798
        %4240 = vmatprep.subr.mxu0 %v3415
        %4241 = vmatpush1.msra.mxu0 %v3408
        %4242 = vmatprep.subr.mxu0 %v3016
        %4243 = vmatpush1.msra.mxu0 %v3009
        %4244 = vmatprep.subr.mxu0 %v2626
        %4245 = vmatpush1.msra.mxu0 %v2619
        %4246 = vmatprep.subr.mxu0 %v2236
        %4247 = vmatpush1.msra.mxu0 %v2229
        %4248 = vmatprep.subr.mxu0 %v1829
        %4249 = vmatpush1.msra.mxu0 %v1822
        %4250 = vmatprep.subr.mxu0 %v1439
        %4251 = vmatpush1.msra.mxu0 %v1432
        %4252 = vmatprep.subr.mxu0 %v1033
        %4253 = vmatpush1.msra.mxu0 %v1026
        %4254 = vmatprep.subr.mxu0 0.0
        %4255 = vmatpush2.msra.mxu0 0.0
        %4256 = vmatprep.subr.mxu0 0.0
        %4257 = vmatpush2.msra.mxu0 0.0
        %4258 = vmatprep.subr.mxu0 0.0
        %4259 = vmatpush2.msra.mxu0 0.0
        %4260 = vmatprep.subr.mxu0 0.0
        %4261 = vmatpush2.msra.mxu0 0.0
        %4262 = vmatprep.subr.mxu0 0.0
        %4263 = vmatpush2.msra.mxu0 0.0
        %4264 = vmatprep.subr.mxu0 0.0
        %4265 = vmatpush2.msra.mxu0 0.0
        %4266 = vmatprep.subr.mxu0 0.0
        %4267 = vmatpush2.msra.mxu0 0.0
        %4268 = vmatprep.subr.mxu0 0.0
        %4269 = vmatpush2.msra.mxu0 0.0
        %4270 = vmatprep.subr.mxu0 0.0
        %4271 = vmatpush2.msra.mxu0 0.0
        %4272 = vmatprep.subr.mxu0 0.0
        %4273 = vmatpush2.msra.mxu0 0.0
        %4274 = vmatprep.subr.mxu0 0.0
        %4275 = vmatpush2.msra.mxu0 0.0
        %4276 = vmatprep.subr.mxu0 0.0
        %4277 = vmatpush2.msra.mxu0 0.0
        %4278 = vmatprep.subr.mxu0 0.0
        %4279 = vmatpush2.msra.mxu0 0.0
        %4280 = vmatprep.subr.mxu0 0.0
        %4281 = vmatpush2.msra.mxu0 0.0
        %4282 = vmatprep.subr.mxu0 0.0
        %4283 = vmatpush2.msra.mxu0 0.0
        %4284 = vmatprep.subr.mxu0 0.0
        %4285 = vmatpush2.msra.mxu0 0.0
        %4286 = vmatprep.mubr.f32.mxu0 0.0
        %4287 = vmatmul.mubr.f32.gmra.mxu0 %v4220
        %v4288 = vpop.f32.mrf.mxu0
        %v4289 = vadd.f32 %v4216, %v4288
        %v4290 = vpop.f32.mrf.mxu0
        %v4291 = vadd.f32 %v4216, %v4290
        %4292 = vdwg.mxu0
        %4294 = vset.pattern.permute.xlu0 0
        %4295 = vperm.xlu0 %4294, %v4211
        %v4296 = vpop.permute.xlu0 %4295
        %v4298 = vadd.f32 %v4289, %v4296
        %v4299 = vadd.f32 %v4291, %v4296
        %v4300 = vmul.f32 %v4298, 0.5
        %v4301 = vmul.f32 %v4299, 0.5
        %v4302 = vmul.f32 %v4298, 0.044715
        %v4303 = vmul.f32 %v4299, 0.044715
        %v4304 = vmul.f32 %v4302, %v4298
        %v4305 = vmul.f32 %v4303, %v4299
        %v4306 = vmul.f32 %v4304, %v4298
        %v4307 = vmul.f32 %v4305, %v4299
        %v4308 = vadd.f32 %v4298, %v4306
        %v4309 = vadd.f32 %v4299, %v4307
        %v4310 = vmul.f32 %v4308, 0.7978846
        %v4311 = vmul.f32 %v4309, 0.7978846
        %v4312 = vtanh.pop %v4310
        %v4313 = vtanh.pop %v4311
        %v4314 = vadd.f32 %v4312, 1.0
        %v4315 = vadd.f32 %v4313, 1.0
        %v4316 = vmul.f32 %v4300, %v4314
        %v4317 = vmul.f32 %v4301, %v4315
        %4319 = vrot.lane.b32.xlu0 %v4316, 112
        %v4320 = vpop.permute.xlu0 %4319
        %4322 = vrot.lane.b32.xlu0 %v4316, 96
        %v4323 = vpop.permute.xlu0 %4322
        %4325 = vrot.lane.b32.xlu0 %v4316, 80
        %v4326 = vpop.permute.xlu0 %4325
        %4328 = vrot.lane.b32.xlu0 %v4316, 64
        %v4329 = vpop.permute.xlu0 %4328
        %4331 = vrot.lane.b32.xlu0 %v4316, 48
        %v4332 = vpop.permute.xlu0 %4331
        %4334 = vrot.lane.b32.xlu0 %v4316, 32
        %v4335 = vpop.permute.xlu0 %4334
        %4337 = vrot.lane.b32.xlu0 %v4316, 16
        %v4338 = vpop.permute.xlu0 %4337
        %4341 = vrot.lane.b32.xlu0 %v4317, 112
        %v4342 = vpop.permute.xlu0 %4341
        %4344 = vrot.lane.b32.xlu0 %v4317, 96
        %v4345 = vpop.permute.xlu0 %4344
        %4347 = vrot.lane.b32.xlu0 %v4317, 80
        %v4348 = vpop.permute.xlu0 %4347
        %4350 = vrot.lane.b32.xlu0 %v4317, 64
        %v4351 = vpop.permute.xlu0 %4350
        %4353 = vrot.lane.b32.xlu0 %v4317, 48
        %v4354 = vpop.permute.xlu0 %4353
        %4356 = vrot.lane.b32.xlu0 %v4317, 32
        %v4357 = vpop.permute.xlu0 %4356
        %4359 = vrot.lane.b32.xlu0 %v4317, 16
        %v4360 = vpop.permute.xlu0 %4359
        %v4362 = vcombine.low %v4316, %v4323
        %v4364 = vunpack.c.l.s4 1983009808
        %v4365 = vunpack.c.0.s8 %v4364
        %v4366 = vlaneseq
        %v4367 = vshrl.u32 %v4366, 7
        %v4368 = vsub.s32 %v4365, %v4367
        %v4369 = vrot.slane %v4362, %v4368
        %v4370 = vcombine.low %v4320, %v4326
        %v4372 = vunpack.c.l.s4 1983009808
        %v4373 = vunpack.c.0.s8 %v4372
        %v4374 = vlaneseq
        %v4375 = vshrl.u32 %v4374, 7
        %v4376 = vsub.s32 %v4373, %v4375
        %v4377 = vrot.slane %v4370, %v4376
        %v4378 = vcombine.low %v4329, %v4335
        %v4380 = vunpack.c.l.s4 1983009808
        %v4381 = vunpack.c.0.s8 %v4380
        %v4382 = vlaneseq
        %v4383 = vshrl.u32 %v4382, 7
        %v4384 = vsub.s32 %v4381, %v4383
        %v4385 = vrot.slane %v4378, %v4384
        %v4386 = vcombine.low %v4332, %v4338
        %v4388 = vunpack.c.l.s4 1983009808
        %v4389 = vunpack.c.0.s8 %v4388
        %v4390 = vlaneseq
        %v4391 = vshrl.u32 %v4390, 7
        %v4392 = vsub.s32 %v4389, %v4391
        %v4393 = vrot.slane %v4386, %v4392
        %v4394 = vcombine.low %v4369, %v4377
        %v4395 = vcombine.high %v4369, %v4377
        %v4397 = vunpack.c.l.s4 1934713408
        %v4398 = vunpack.c.0.s8 %v4397
        %v4399 = vlaneseq
        %v4400 = vshrl.u32 %v4399, 7
        %v4401 = vsub.s32 %v4398, %v4400
        %v4402 = vrot.slane %v4394, %v4401
        %v4404 = vunpack.c.l.s4 1934713408
        %v4405 = vunpack.c.0.s8 %v4404
        %v4406 = vlaneseq
        %v4407 = vshrl.u32 %v4406, 7
        %v4408 = vsub.s32 %v4405, %v4407
        %v4409 = vrot.slane %v4395, %v4408
        %v4410 = vcombine.low %v4385, %v4393
        %v4411 = vcombine.high %v4385, %v4393
        %v4413 = vunpack.c.l.s4 1934713408
        %v4414 = vunpack.c.0.s8 %v4413
        %v4415 = vlaneseq
        %v4416 = vshrl.u32 %v4415, 7
        %v4417 = vsub.s32 %v4414, %v4416
        %v4418 = vrot.slane %v4410, %v4417
        %v4420 = vunpack.c.l.s4 1934713408
        %v4421 = vunpack.c.0.s8 %v4420
        %v4422 = vlaneseq
        %v4423 = vshrl.u32 %v4422, 7
        %v4424 = vsub.s32 %v4421, %v4423
        %v4425 = vrot.slane %v4411, %v4424
        %v4426 = vcombine.low %v4402, %v4418
        %v4427 = vcombine.high %v4402, %v4418
        %v4428 = vcombine.low %v4409, %v4425
        %v4429 = vcombine.high %v4409, %v4425
        %v4430 = vcombine.low %v4317, %v4345
        %v4432 = vunpack.c.l.s4 1983009808
        %v4433 = vunpack.c.0.s8 %v4432
        %v4434 = vlaneseq
        %v4435 = vshrl.u32 %v4434, 7
        %v4436 = vsub.s32 %v4433, %v4435
        %v4437 = vrot.slane %v4430, %v4436
        %v4438 = vcombine.low %v4342, %v4348
        %v4440 = vunpack.c.l.s4 1983009808
        %v4441 = vunpack.c.0.s8 %v4440
        %v4442 = vlaneseq
        %v4443 = vshrl.u32 %v4442, 7
        %v4444 = vsub.s32 %v4441, %v4443
        %v4445 = vrot.slane %v4438, %v4444
        %v4446 = vcombine.low %v4351, %v4357
        %v4448 = vunpack.c.l.s4 1983009808
        %v4449 = vunpack.c.0.s8 %v4448
        %v4450 = vlaneseq
        %v4451 = vshrl.u32 %v4450, 7
        %v4452 = vsub.s32 %v4449, %v4451
        %v4453 = vrot.slane %v4446, %v4452
        %v4454 = vcombine.low %v4354, %v4360
        %v4456 = vunpack.c.l.s4 1983009808
        %v4457 = vunpack.c.0.s8 %v4456
        %v4458 = vlaneseq
        %v4459 = vshrl.u32 %v4458, 7
        %v4460 = vsub.s32 %v4457, %v4459
        %v4461 = vrot.slane %v4454, %v4460
        %v4462 = vcombine.low %v4437, %v4445
        %v4463 = vcombine.high %v4437, %v4445
        %v4465 = vunpack.c.l.s4 1934713408
        %v4466 = vunpack.c.0.s8 %v4465
        %v4467 = vlaneseq
        %v4468 = vshrl.u32 %v4467, 7
        %v4469 = vsub.s32 %v4466, %v4468
        %v4470 = vrot.slane %v4462, %v4469
        %v4472 = vunpack.c.l.s4 1934713408
        %v4473 = vunpack.c.0.s8 %v4472
        %v4474 = vlaneseq
        %v4475 = vshrl.u32 %v4474, 7
        %v4476 = vsub.s32 %v4473, %v4475
        %v4477 = vrot.slane %v4463, %v4476
        %v4478 = vcombine.low %v4453, %v4461
        %v4479 = vcombine.high %v4453, %v4461
        %v4481 = vunpack.c.l.s4 1934713408
        %v4482 = vunpack.c.0.s8 %v4481
        %v4483 = vlaneseq
        %v4484 = vshrl.u32 %v4483, 7
        %v4485 = vsub.s32 %v4482, %v4484
        %v4486 = vrot.slane %v4478, %v4485
        %v4488 = vunpack.c.l.s4 1934713408
        %v4489 = vunpack.c.0.s8 %v4488
        %v4490 = vlaneseq
        %v4491 = vshrl.u32 %v4490, 7
        %v4492 = vsub.s32 %v4489, %v4491
        %v4493 = vrot.slane %v4479, %v4492
        %v4494 = vcombine.low %v4470, %v4486
        %v4495 = vcombine.high %v4470, %v4486
        %v4496 = vcombine.low %v4477, %v4493
        %v4497 = vcombine.high %v4477, %v4493
        %4498 = vst.msk [vmem:[#allocation3] sm:$0xff] %vm554, 0.0
        %4499 = vst.msk [vmem:[#allocation3 + $0x8] sm:$0xff] %vm554, 0.0
        %4500 = vst.msk [vmem:[#allocation3 + $0x10] sm:$0x3] %vm557, 0.0
        %4501 = vst.msk [vmem:[#allocation3 + $0x18] sm:$0xff] %vm554, 0.0
        %4502 = vst.msk [vmem:[#allocation3 + $0x20] sm:$0xff] %vm554, 0.0
        %4503 = vst.msk [vmem:[#allocation3 + $0x28] sm:$0x3] %vm557, 0.0
        %4504 = vst.msk [vmem:[#allocation3 + $0x30] sm:$0xff] %vm554, 0.0
        %4505 = vst.msk [vmem:[#allocation3 + $0x38] sm:$0xff] %vm554, 0.0
        %4506 = vst.msk [vmem:[#allocation3 + $0x40] sm:$0x3] %vm557, 0.0
        %4507 = vst.msk [vmem:[#allocation3 + $0x48] sm:$0xff] %vm554, 0.0
        %4508 = vst.msk [vmem:[#allocation3 + $0x50] sm:$0xff] %vm554, 0.0
        %4509 = vst.msk [vmem:[#allocation3 + $0x58] sm:$0x3] %vm557, 0.0
        %4518 = vrot.lane.b32.xlu0 %v4426, 1
        %v4519 = vpop.permute.xlu0 %4518
        %4520 = vrot.lane.b32.xlu0 %v4494, 1
        %v4521 = vpop.permute.xlu0 %4520
        %4522 = vrot.lane.b32.xlu0 %v4427, 1
        %v4523 = vpop.permute.xlu0 %4522
        %4524 = vrot.lane.b32.xlu0 %v4495, 1
        %v4525 = vpop.permute.xlu0 %4524
        %4526 = vrot.lane.b32.xlu0 %v4428, 1
        %v4527 = vpop.permute.xlu0 %4526
        %4528 = vrot.lane.b32.xlu0 %v4496, 1
        %v4529 = vpop.permute.xlu0 %4528
        %4530 = vrot.lane.b32.xlu0 %v4429, 1
        %v4531 = vpop.permute.xlu0 %4530
        %4532 = vrot.lane.b32.xlu0 %v4497, 1
        %v4533 = vpop.permute.xlu0 %4532
        %4542 = vst.msk [vmem:[#allocation3 + $0x1] sm:$0xff] %vm644, %v4519
        %4543 = vst.msk [vmem:[#allocation3 + $0x9] sm:$0xff] %vm644, %v4521
        %4544 = vst.msk [vmem:[#allocation3 + $0x19] sm:$0xff] %vm644, %v4523
        %4545 = vst.msk [vmem:[#allocation3 + $0x21] sm:$0xff] %vm644, %v4525
        %4546 = vst.msk [vmem:[#allocation3 + $0x31] sm:$0xff] %vm644, %v4527
        %4547 = vst.msk [vmem:[#allocation3 + $0x39] sm:$0xff] %vm644, %v4529
        %4548 = vst.msk [vmem:[#allocation3 + $0x49] sm:$0xff] %vm644, %v4531
        %4549 = vst.msk [vmem:[#allocation3 + $0x51] sm:$0xff] %vm644, %v4533
        %v4550 = vld [vmem:[#allocation3] sm:$0xff]
        %v4551 = vld [vmem:[#allocation3 + $0x8] sm:$0xff]
        %v4552 = vld [vmem:[#allocation3 + $0x10] sm:$0x3]
        %v4553 = vld [vmem:[#allocation3 + $0x18] sm:$0xff]
        %v4554 = vld [vmem:[#allocation3 + $0x20] sm:$0xff]
        %v4555 = vld [vmem:[#allocation3 + $0x28] sm:$0x3]
        %v4556 = vld [vmem:[#allocation3 + $0x30] sm:$0xff]
        %v4557 = vld [vmem:[#allocation3 + $0x38] sm:$0xff]
        %v4558 = vld [vmem:[#allocation3 + $0x40] sm:$0x3]
        %v4559 = vld [vmem:[#allocation3 + $0x48] sm:$0xff]
        %v4560 = vld [vmem:[#allocation3 + $0x50] sm:$0xff]
        %v4561 = vld [vmem:[#allocation3 + $0x58] sm:$0x3]
        %v4562 = vcombine.low %v4550, %v4556
        %v4563 = vcombine.high %v4550, %v4556
        %v4565 = vunpack.c.l.s4 1983009808
        %v4566 = vunpack.c.0.s8 %v4565
        %v4567 = vlaneseq
        %v4568 = vshrl.u32 %v4567, 7
        %v4569 = vsub.s32 %v4566, %v4568
        %v4570 = vrot.slane %v4562, %v4569
        %v4572 = vunpack.c.l.s4 1983009808
        %v4573 = vunpack.c.0.s8 %v4572
        %v4574 = vlaneseq
        %v4575 = vshrl.u32 %v4574, 7
        %v4576 = vsub.s32 %v4573, %v4575
        %v4577 = vrot.slane %v4563, %v4576
        %v4578 = vcombine.low %v4553, %v4559
        %v4579 = vcombine.high %v4553, %v4559
        %v4581 = vunpack.c.l.s4 1983009808
        %v4582 = vunpack.c.0.s8 %v4581
        %v4583 = vlaneseq
        %v4584 = vshrl.u32 %v4583, 7
        %v4585 = vsub.s32 %v4582, %v4584
        %v4586 = vrot.slane %v4578, %v4585
        %v4588 = vunpack.c.l.s4 1983009808
        %v4589 = vunpack.c.0.s8 %v4588
        %v4590 = vlaneseq
        %v4591 = vshrl.u32 %v4590, 7
        %v4592 = vsub.s32 %v4589, %v4591
        %v4593 = vrot.slane %v4579, %v4592
        %v4594 = vcombine.low %v4570, %v4586
        %v4595 = vcombine.high %v4570, %v4586
        %v4597 = vunpack.c.l.s4 1934713408
        %v4598 = vunpack.c.0.s8 %v4597
        %v4599 = vlaneseq
        %v4600 = vshrl.u32 %v4599, 7
        %v4601 = vsub.s32 %v4598, %v4600
        %v4602 = vrot.slane %v4594, %v4601
        %v4604 = vunpack.c.l.s4 1934713408
        %v4605 = vunpack.c.0.s8 %v4604
        %v4606 = vlaneseq
        %v4607 = vshrl.u32 %v4606, 7
        %v4608 = vsub.s32 %v4605, %v4607
        %v4609 = vrot.slane %v4595, %v4608
        %v4610 = vcombine.low %v4577, %v4593
        %v4611 = vcombine.high %v4577, %v4593
        %v4613 = vunpack.c.l.s4 1934713408
        %v4614 = vunpack.c.0.s8 %v4613
        %v4615 = vlaneseq
        %v4616 = vshrl.u32 %v4615, 7
        %v4617 = vsub.s32 %v4614, %v4616
        %v4618 = vrot.slane %v4610, %v4617
        %v4620 = vunpack.c.l.s4 1934713408
        %v4621 = vunpack.c.0.s8 %v4620
        %v4622 = vlaneseq
        %v4623 = vshrl.u32 %v4622, 7
        %v4624 = vsub.s32 %v4621, %v4623
        %v4625 = vrot.slane %v4611, %v4624
        %v4626 = vcombine.high %v4602, 0.0
        %v4627 = vcombine.high %v4609, 0.0
        %v4628 = vcombine.high %v4618, 0.0
        %v4629 = vcombine.high %v4625, 0.0
        %v4630 = vcombine.low %v4551, %v4557
        %v4631 = vcombine.high %v4551, %v4557
        %v4633 = vunpack.c.l.s4 1983009808
        %v4634 = vunpack.c.0.s8 %v4633
        %v4635 = vlaneseq
        %v4636 = vshrl.u32 %v4635, 7
        %v4637 = vsub.s32 %v4634, %v4636
        %v4638 = vrot.slane %v4630, %v4637
        %v4640 = vunpack.c.l.s4 1983009808
        %v4641 = vunpack.c.0.s8 %v4640
        %v4642 = vlaneseq
        %v4643 = vshrl.u32 %v4642, 7
        %v4644 = vsub.s32 %v4641, %v4643
        %v4645 = vrot.slane %v4631, %v4644
        %v4646 = vcombine.low %v4554, %v4560
        %v4647 = vcombine.high %v4554, %v4560
        %v4649 = vunpack.c.l.s4 1983009808
        %v4650 = vunpack.c.0.s8 %v4649
        %v4651 = vlaneseq
        %v4652 = vshrl.u32 %v4651, 7
        %v4653 = vsub.s32 %v4650, %v4652
        %v4654 = vrot.slane %v4646, %v4653
        %v4656 = vunpack.c.l.s4 1983009808
        %v4657 = vunpack.c.0.s8 %v4656
        %v4658 = vlaneseq
        %v4659 = vshrl.u32 %v4658, 7
        %v4660 = vsub.s32 %v4657, %v4659
        %v4661 = vrot.slane %v4647, %v4660
        %v4662 = vcombine.low %v4638, %v4654
        %v4663 = vcombine.high %v4638, %v4654
        %v4665 = vunpack.c.l.s4 1934713408
        %v4666 = vunpack.c.0.s8 %v4665
        %v4667 = vlaneseq
        %v4668 = vshrl.u32 %v4667, 7
        %v4669 = vsub.s32 %v4666, %v4668
        %v4670 = vrot.slane %v4662, %v4669
        %v4672 = vunpack.c.l.s4 1934713408
        %v4673 = vunpack.c.0.s8 %v4672
        %v4674 = vlaneseq
        %v4675 = vshrl.u32 %v4674, 7
        %v4676 = vsub.s32 %v4673, %v4675
        %v4677 = vrot.slane %v4663, %v4676
        %v4678 = vcombine.low %v4645, %v4661
        %v4679 = vcombine.high %v4645, %v4661
        %v4681 = vunpack.c.l.s4 1934713408
        %v4682 = vunpack.c.0.s8 %v4681
        %v4683 = vlaneseq
        %v4684 = vshrl.u32 %v4683, 7
        %v4685 = vsub.s32 %v4682, %v4684
        %v4686 = vrot.slane %v4678, %v4685
        %v4688 = vunpack.c.l.s4 1934713408
        %v4689 = vunpack.c.0.s8 %v4688
        %v4690 = vlaneseq
        %v4691 = vshrl.u32 %v4690, 7
        %v4692 = vsub.s32 %v4689, %v4691
        %v4693 = vrot.slane %v4679, %v4692
        %v4694 = vcombine.high %v4670, 0.0
        %v4695 = vcombine.high %v4677, 0.0
        %v4696 = vcombine.high %v4686, 0.0
        %v4697 = vcombine.high %v4693, 0.0
        %4699 = vrot.lane.b32.xlu0 %v4626, 16
        %v4700 = vpop.permute.xlu0 %4699
        %4703 = vrot.lane.b32.xlu0 %v4609, 32
        %v4704 = vpop.permute.xlu0 %4703
        %4707 = vrot.lane.b32.xlu0 %v4627, 48
        %v4708 = vpop.permute.xlu0 %4707
        %4711 = vrot.lane.b32.xlu0 %v4618, 64
        %v4712 = vpop.permute.xlu0 %4711
        %4715 = vrot.lane.b32.xlu0 %v4628, 80
        %v4716 = vpop.permute.xlu0 %4715
        %4719 = vrot.lane.b32.xlu0 %v4625, 96
        %v4720 = vpop.permute.xlu0 %4719
        %4723 = vrot.lane.b32.xlu0 %v4629, 112
        %v4724 = vpop.permute.xlu0 %4723
        %4727 = vrot.lane.b32.xlu0 %v4694, 16
        %v4728 = vpop.permute.xlu0 %4727
        %4731 = vrot.lane.b32.xlu0 %v4677, 32
        %v4732 = vpop.permute.xlu0 %4731
        %4735 = vrot.lane.b32.xlu0 %v4695, 48
        %v4736 = vpop.permute.xlu0 %4735
        %4739 = vrot.lane.b32.xlu0 %v4686, 64
        %v4740 = vpop.permute.xlu0 %4739
        %4743 = vrot.lane.b32.xlu0 %v4696, 80
        %v4744 = vpop.permute.xlu0 %4743
        %4747 = vrot.lane.b32.xlu0 %v4693, 96
        %v4748 = vpop.permute.xlu0 %4747
        %4751 = vrot.lane.b32.xlu0 %v4697, 112
        %v4752 = vpop.permute.xlu0 %4751
        %v4754 = vsel %vm1013, %v4602, %v4700
        %v4755 = vsel %vm1015, %v4754, %v4704
        %v4756 = vsel %vm1017, %v4755, %v4708
        %v4757 = vsel %vm1019, %v4756, %v4712
        %v4758 = vsel %vm1021, %v4757, %v4716
        %v4759 = vsel %vm1023, %v4758, %v4720
        %v4760 = vsel %vm1025, %v4759, %v4724
        %v4761 = vsel %vm1013, %v4670, %v4728
        %v4762 = vsel %vm1015, %v4761, %v4732
        %v4763 = vsel %vm1017, %v4762, %v4736
        %v4764 = vsel %vm1019, %v4763, %v4740
        %v4765 = vsel %vm1021, %v4764, %v4744
        %v4766 = vsel %vm1023, %v4765, %v4748
        %v4767 = vsel %vm1025, %v4766, %v4752
        %4776 = vrot.lane.b32.xlu0 %v4550, 127
        %v4777 = vpop.permute.xlu0 %4776
        %4778 = vrot.lane.b32.xlu0 %v4551, 127
        %v4779 = vpop.permute.xlu0 %4778
        %4780 = vrot.lane.b32.xlu0 %v4553, 127
        %v4781 = vpop.permute.xlu0 %4780
        %4782 = vrot.lane.b32.xlu0 %v4554, 127
        %v4783 = vpop.permute.xlu0 %4782
        %4784 = vrot.lane.b32.xlu0 %v4556, 127
        %v4785 = vpop.permute.xlu0 %4784
        %4786 = vrot.lane.b32.xlu0 %v4557, 127
        %v4787 = vpop.permute.xlu0 %4786
        %4788 = vrot.lane.b32.xlu0 %v4559, 127
        %v4789 = vpop.permute.xlu0 %4788
        %4790 = vrot.lane.b32.xlu0 %v4560, 127
        %v4791 = vpop.permute.xlu0 %4790
        %v4800 = vcombine.low %v4777, %v4785
        %v4801 = vcombine.high %v4777, %v4785
        %v4803 = vunpack.c.l.s4 1983009808
        %v4804 = vunpack.c.0.s8 %v4803
        %v4805 = vlaneseq
        %v4806 = vshrl.u32 %v4805, 7
        %v4807 = vsub.s32 %v4804, %v4806
        %v4808 = vrot.slane %v4800, %v4807
        %v4810 = vunpack.c.l.s4 1983009808
        %v4811 = vunpack.c.0.s8 %v4810
        %v4812 = vlaneseq
        %v4813 = vshrl.u32 %v4812, 7
        %v4814 = vsub.s32 %v4811, %v4813
        %v4815 = vrot.slane %v4801, %v4814
        %v4816 = vcombine.low %v4781, %v4789
        %v4817 = vcombine.high %v4781, %v4789
        %v4819 = vunpack.c.l.s4 1983009808
        %v4820 = vunpack.c.0.s8 %v4819
        %v4821 = vlaneseq
        %v4822 = vshrl.u32 %v4821, 7
        %v4823 = vsub.s32 %v4820, %v4822
        %v4824 = vrot.slane %v4816, %v4823
        %v4826 = vunpack.c.l.s4 1983009808
        %v4827 = vunpack.c.0.s8 %v4826
        %v4828 = vlaneseq
        %v4829 = vshrl.u32 %v4828, 7
        %v4830 = vsub.s32 %v4827, %v4829
        %v4831 = vrot.slane %v4817, %v4830
        %v4832 = vcombine.low %v4808, %v4824
        %v4833 = vcombine.high %v4808, %v4824
        %v4835 = vunpack.c.l.s4 1934713408
        %v4836 = vunpack.c.0.s8 %v4835
        %v4837 = vlaneseq
        %v4838 = vshrl.u32 %v4837, 7
        %v4839 = vsub.s32 %v4836, %v4838
        %v4840 = vrot.slane %v4832, %v4839
        %v4842 = vunpack.c.l.s4 1934713408
        %v4843 = vunpack.c.0.s8 %v4842
        %v4844 = vlaneseq
        %v4845 = vshrl.u32 %v4844, 7
        %v4846 = vsub.s32 %v4843, %v4845
        %v4847 = vrot.slane %v4833, %v4846
        %v4848 = vcombine.low %v4815, %v4831
        %v4849 = vcombine.high %v4815, %v4831
        %v4851 = vunpack.c.l.s4 1934713408
        %v4852 = vunpack.c.0.s8 %v4851
        %v4853 = vlaneseq
        %v4854 = vshrl.u32 %v4853, 7
        %v4855 = vsub.s32 %v4852, %v4854
        %v4856 = vrot.slane %v4848, %v4855
        %v4858 = vunpack.c.l.s4 1934713408
        %v4859 = vunpack.c.0.s8 %v4858
        %v4860 = vlaneseq
        %v4861 = vshrl.u32 %v4860, 7
        %v4862 = vsub.s32 %v4859, %v4861
        %v4863 = vrot.slane %v4849, %v4862
        %v4864 = vcombine.high %v4840, 0.0
        %v4865 = vcombine.high %v4847, 0.0
        %v4866 = vcombine.high %v4856, 0.0
        %v4867 = vcombine.high %v4863, 0.0
        %v4868 = vcombine.low %v4779, %v4787
        %v4869 = vcombine.high %v4779, %v4787
        %v4871 = vunpack.c.l.s4 1983009808
        %v4872 = vunpack.c.0.s8 %v4871
        %v4873 = vlaneseq
        %v4874 = vshrl.u32 %v4873, 7
        %v4875 = vsub.s32 %v4872, %v4874
        %v4876 = vrot.slane %v4868, %v4875
        %v4878 = vunpack.c.l.s4 1983009808
        %v4879 = vunpack.c.0.s8 %v4878
        %v4880 = vlaneseq
        %v4881 = vshrl.u32 %v4880, 7
        %v4882 = vsub.s32 %v4879, %v4881
        %v4883 = vrot.slane %v4869, %v4882
        %v4884 = vcombine.low %v4783, %v4791
        %v4885 = vcombine.high %v4783, %v4791
        %v4887 = vunpack.c.l.s4 1983009808
        %v4888 = vunpack.c.0.s8 %v4887
        %v4889 = vlaneseq
        %v4890 = vshrl.u32 %v4889, 7
        %v4891 = vsub.s32 %v4888, %v4890
        %v4892 = vrot.slane %v4884, %v4891
        %v4894 = vunpack.c.l.s4 1983009808
        %v4895 = vunpack.c.0.s8 %v4894
        %v4896 = vlaneseq
        %v4897 = vshrl.u32 %v4896, 7
        %v4898 = vsub.s32 %v4895, %v4897
        %v4899 = vrot.slane %v4885, %v4898
        %v4900 = vcombine.low %v4876, %v4892
        %v4901 = vcombine.high %v4876, %v4892
        %v4903 = vunpack.c.l.s4 1934713408
        %v4904 = vunpack.c.0.s8 %v4903
        %v4905 = vlaneseq
        %v4906 = vshrl.u32 %v4905, 7
        %v4907 = vsub.s32 %v4904, %v4906
        %v4908 = vrot.slane %v4900, %v4907
        %v4910 = vunpack.c.l.s4 1934713408
        %v4911 = vunpack.c.0.s8 %v4910
        %v4912 = vlaneseq
        %v4913 = vshrl.u32 %v4912, 7
        %v4914 = vsub.s32 %v4911, %v4913
        %v4915 = vrot.slane %v4901, %v4914
        %v4916 = vcombine.low %v4883, %v4899
        %v4917 = vcombine.high %v4883, %v4899
        %v4919 = vunpack.c.l.s4 1934713408
        %v4920 = vunpack.c.0.s8 %v4919
        %v4921 = vlaneseq
        %v4922 = vshrl.u32 %v4921, 7
        %v4923 = vsub.s32 %v4920, %v4922
        %v4924 = vrot.slane %v4916, %v4923
        %v4926 = vunpack.c.l.s4 1934713408
        %v4927 = vunpack.c.0.s8 %v4926
        %v4928 = vlaneseq
        %v4929 = vshrl.u32 %v4928, 7
        %v4930 = vsub.s32 %v4927, %v4929
        %v4931 = vrot.slane %v4917, %v4930
        %v4932 = vcombine.high %v4908, 0.0
        %v4933 = vcombine.high %v4915, 0.0
        %v4934 = vcombine.high %v4924, 0.0
        %v4935 = vcombine.high %v4931, 0.0
        %4937 = vrot.lane.b32.xlu0 %v4864, 16
        %v4938 = vpop.permute.xlu0 %4937
        %4941 = vrot.lane.b32.xlu0 %v4847, 32
        %v4942 = vpop.permute.xlu0 %4941
        %4945 = vrot.lane.b32.xlu0 %v4865, 48
        %v4946 = vpop.permute.xlu0 %4945
        %4949 = vrot.lane.b32.xlu0 %v4856, 64
        %v4950 = vpop.permute.xlu0 %4949
        %4953 = vrot.lane.b32.xlu0 %v4866, 80
        %v4954 = vpop.permute.xlu0 %4953
        %4957 = vrot.lane.b32.xlu0 %v4863, 96
        %v4958 = vpop.permute.xlu0 %4957
        %4961 = vrot.lane.b32.xlu0 %v4867, 112
        %v4962 = vpop.permute.xlu0 %4961
        %4965 = vrot.lane.b32.xlu0 %v4932, 16
        %v4966 = vpop.permute.xlu0 %4965
        %4969 = vrot.lane.b32.xlu0 %v4915, 32
        %v4970 = vpop.permute.xlu0 %4969
        %4973 = vrot.lane.b32.xlu0 %v4933, 48
        %v4974 = vpop.permute.xlu0 %4973
        %4977 = vrot.lane.b32.xlu0 %v4924, 64
        %v4978 = vpop.permute.xlu0 %4977
        %4981 = vrot.lane.b32.xlu0 %v4934, 80
        %v4982 = vpop.permute.xlu0 %4981
        %4985 = vrot.lane.b32.xlu0 %v4931, 96
        %v4986 = vpop.permute.xlu0 %4985
        %4989 = vrot.lane.b32.xlu0 %v4935, 112
        %v4990 = vpop.permute.xlu0 %4989
        %v4992 = vsel %vm1013, %v4840, %v4938
        %v4993 = vsel %vm1015, %v4992, %v4942
        %v4994 = vsel %vm1017, %v4993, %v4946
        %v4995 = vsel %vm1019, %v4994, %v4950
        %v4996 = vsel %vm1021, %v4995, %v4954
        %v4997 = vsel %vm1023, %v4996, %v4958
        %v4998 = vsel %vm1025, %v4997, %v4962
        %v4999 = vsel %vm1013, %v4908, %v4966
        %v5000 = vsel %vm1015, %v4999, %v4970
        %v5001 = vsel %vm1017, %v5000, %v4974
        %v5002 = vsel %vm1019, %v5001, %v4978
        %v5003 = vsel %vm1021, %v5002, %v4982
        %v5004 = vsel %vm1023, %v5003, %v4986
        %v5005 = vsel %vm1025, %v5004, %v4990
        %5006 = vrot.lane.b32.xlu0 %v4550, 126
        %v5007 = vpop.permute.xlu0 %5006
        %5008 = vrot.lane.b32.xlu0 %v4551, 126
        %v5009 = vpop.permute.xlu0 %5008
        %5010 = vrot.lane.b32.xlu0 %v4553, 126
        %v5011 = vpop.permute.xlu0 %5010
        %5012 = vrot.lane.b32.xlu0 %v4554, 126
        %v5013 = vpop.permute.xlu0 %5012
        %5014 = vrot.lane.b32.xlu0 %v4556, 126
        %v5015 = vpop.permute.xlu0 %5014
        %5016 = vrot.lane.b32.xlu0 %v4557, 126
        %v5017 = vpop.permute.xlu0 %5016
        %5018 = vrot.lane.b32.xlu0 %v4559, 126
        %v5019 = vpop.permute.xlu0 %5018
        %5020 = vrot.lane.b32.xlu0 %v4560, 126
        %v5021 = vpop.permute.xlu0 %5020
        %v5030 = vcombine.low %v5007, %v5015
        %v5031 = vcombine.high %v5007, %v5015
        %v5033 = vunpack.c.l.s4 1983009808
        %v5034 = vunpack.c.0.s8 %v5033
        %v5035 = vlaneseq
        %v5036 = vshrl.u32 %v5035, 7
        %v5037 = vsub.s32 %v5034, %v5036
        %v5038 = vrot.slane %v5030, %v5037
        %v5040 = vunpack.c.l.s4 1983009808
        %v5041 = vunpack.c.0.s8 %v5040
        %v5042 = vlaneseq
        %v5043 = vshrl.u32 %v5042, 7
        %v5044 = vsub.s32 %v5041, %v5043
        %v5045 = vrot.slane %v5031, %v5044
        %v5046 = vcombine.low %v5011, %v5019
        %v5047 = vcombine.high %v5011, %v5019
        %v5049 = vunpack.c.l.s4 1983009808
        %v5050 = vunpack.c.0.s8 %v5049
        %v5051 = vlaneseq
        %v5052 = vshrl.u32 %v5051, 7
        %v5053 = vsub.s32 %v5050, %v5052
        %v5054 = vrot.slane %v5046, %v5053
        %v5056 = vunpack.c.l.s4 1983009808
        %v5057 = vunpack.c.0.s8 %v5056
        %v5058 = vlaneseq
        %v5059 = vshrl.u32 %v5058, 7
        %v5060 = vsub.s32 %v5057, %v5059
        %v5061 = vrot.slane %v5047, %v5060
        %v5062 = vcombine.low %v5038, %v5054
        %v5063 = vcombine.high %v5038, %v5054
        %v5065 = vunpack.c.l.s4 1934713408
        %v5066 = vunpack.c.0.s8 %v5065
        %v5067 = vlaneseq
        %v5068 = vshrl.u32 %v5067, 7
        %v5069 = vsub.s32 %v5066, %v5068
        %v5070 = vrot.slane %v5062, %v5069
        %v5072 = vunpack.c.l.s4 1934713408
        %v5073 = vunpack.c.0.s8 %v5072
        %v5074 = vlaneseq
        %v5075 = vshrl.u32 %v5074, 7
        %v5076 = vsub.s32 %v5073, %v5075
        %v5077 = vrot.slane %v5063, %v5076
        %v5078 = vcombine.low %v5045, %v5061
        %v5079 = vcombine.high %v5045, %v5061
        %v5081 = vunpack.c.l.s4 1934713408
        %v5082 = vunpack.c.0.s8 %v5081
        %v5083 = vlaneseq
        %v5084 = vshrl.u32 %v5083, 7
        %v5085 = vsub.s32 %v5082, %v5084
        %v5086 = vrot.slane %v5078, %v5085
        %v5088 = vunpack.c.l.s4 1934713408
        %v5089 = vunpack.c.0.s8 %v5088
        %v5090 = vlaneseq
        %v5091 = vshrl.u32 %v5090, 7
        %v5092 = vsub.s32 %v5089, %v5091
        %v5093 = vrot.slane %v5079, %v5092
        %v5094 = vcombine.high %v5070, 0.0
        %v5095 = vcombine.high %v5077, 0.0
        %v5096 = vcombine.high %v5086, 0.0
        %v5097 = vcombine.high %v5093, 0.0
        %v5098 = vcombine.low %v5009, %v5017
        %v5099 = vcombine.high %v5009, %v5017
        %v5101 = vunpack.c.l.s4 1983009808
        %v5102 = vunpack.c.0.s8 %v5101
        %v5103 = vlaneseq
        %v5104 = vshrl.u32 %v5103, 7
        %v5105 = vsub.s32 %v5102, %v5104
        %v5106 = vrot.slane %v5098, %v5105
        %v5108 = vunpack.c.l.s4 1983009808
        %v5109 = vunpack.c.0.s8 %v5108
        %v5110 = vlaneseq
        %v5111 = vshrl.u32 %v5110, 7
        %v5112 = vsub.s32 %v5109, %v5111
        %v5113 = vrot.slane %v5099, %v5112
        %v5114 = vcombine.low %v5013, %v5021
        %v5115 = vcombine.high %v5013, %v5021
        %v5117 = vunpack.c.l.s4 1983009808
        %v5118 = vunpack.c.0.s8 %v5117
        %v5119 = vlaneseq
        %v5120 = vshrl.u32 %v5119, 7
        %v5121 = vsub.s32 %v5118, %v5120
        %v5122 = vrot.slane %v5114, %v5121
        %v5124 = vunpack.c.l.s4 1983009808
        %v5125 = vunpack.c.0.s8 %v5124
        %v5126 = vlaneseq
        %v5127 = vshrl.u32 %v5126, 7
        %v5128 = vsub.s32 %v5125, %v5127
        %v5129 = vrot.slane %v5115, %v5128
        %v5130 = vcombine.low %v5106, %v5122
        %v5131 = vcombine.high %v5106, %v5122
        %v5133 = vunpack.c.l.s4 1934713408
        %v5134 = vunpack.c.0.s8 %v5133
        %v5135 = vlaneseq
        %v5136 = vshrl.u32 %v5135, 7
        %v5137 = vsub.s32 %v5134, %v5136
        %v5138 = vrot.slane %v5130, %v5137
        %v5140 = vunpack.c.l.s4 1934713408
        %v5141 = vunpack.c.0.s8 %v5140
        %v5142 = vlaneseq
        %v5143 = vshrl.u32 %v5142, 7
        %v5144 = vsub.s32 %v5141, %v5143
        %v5145 = vrot.slane %v5131, %v5144
        %v5146 = vcombine.low %v5113, %v5129
        %v5147 = vcombine.high %v5113, %v5129
        %v5149 = vunpack.c.l.s4 1934713408
        %v5150 = vunpack.c.0.s8 %v5149
        %v5151 = vlaneseq
        %v5152 = vshrl.u32 %v5151, 7
        %v5153 = vsub.s32 %v5150, %v5152
        %v5154 = vrot.slane %v5146, %v5153
        %v5156 = vunpack.c.l.s4 1934713408
        %v5157 = vunpack.c.0.s8 %v5156
        %v5158 = vlaneseq
        %v5159 = vshrl.u32 %v5158, 7
        %v5160 = vsub.s32 %v5157, %v5159
        %v5161 = vrot.slane %v5147, %v5160
        %v5162 = vcombine.high %v5138, 0.0
        %v5163 = vcombine.high %v5145, 0.0
        %v5164 = vcombine.high %v5154, 0.0
        %v5165 = vcombine.high %v5161, 0.0
        %5167 = vrot.lane.b32.xlu0 %v5094, 16
        %v5168 = vpop.permute.xlu0 %5167
        %5171 = vrot.lane.b32.xlu0 %v5077, 32
        %v5172 = vpop.permute.xlu0 %5171
        %5175 = vrot.lane.b32.xlu0 %v5095, 48
        %v5176 = vpop.permute.xlu0 %5175
        %5179 = vrot.lane.b32.xlu0 %v5086, 64
        %v5180 = vpop.permute.xlu0 %5179
        %5183 = vrot.lane.b32.xlu0 %v5096, 80
        %v5184 = vpop.permute.xlu0 %5183
        %5187 = vrot.lane.b32.xlu0 %v5093, 96
        %v5188 = vpop.permute.xlu0 %5187
        %5191 = vrot.lane.b32.xlu0 %v5097, 112
        %v5192 = vpop.permute.xlu0 %5191
        %5195 = vrot.lane.b32.xlu0 %v5162, 16
        %v5196 = vpop.permute.xlu0 %5195
        %5199 = vrot.lane.b32.xlu0 %v5145, 32
        %v5200 = vpop.permute.xlu0 %5199
        %5203 = vrot.lane.b32.xlu0 %v5163, 48
        %v5204 = vpop.permute.xlu0 %5203
        %5207 = vrot.lane.b32.xlu0 %v5154, 64
        %v5208 = vpop.permute.xlu0 %5207
        %5211 = vrot.lane.b32.xlu0 %v5164, 80
        %v5212 = vpop.permute.xlu0 %5211
        %5215 = vrot.lane.b32.xlu0 %v5161, 96
        %v5216 = vpop.permute.xlu0 %5215
        %5219 = vrot.lane.b32.xlu0 %v5165, 112
        %v5220 = vpop.permute.xlu0 %5219
        %v5222 = vsel %vm1013, %v5070, %v5168
        %v5223 = vsel %vm1015, %v5222, %v5172
        %v5224 = vsel %vm1017, %v5223, %v5176
        %v5225 = vsel %vm1019, %v5224, %v5180
        %v5226 = vsel %vm1021, %v5225, %v5184
        %v5227 = vsel %vm1023, %v5226, %v5188
        %v5228 = vsel %vm1025, %v5227, %v5192
        %v5229 = vsel %vm1013, %v5138, %v5196
        %v5230 = vsel %vm1015, %v5229, %v5200
        %v5231 = vsel %vm1017, %v5230, %v5204
        %v5232 = vsel %vm1019, %v5231, %v5208
        %v5233 = vsel %vm1021, %v5232, %v5212
        %v5234 = vsel %vm1023, %v5233, %v5216
        %v5235 = vsel %vm1025, %v5234, %v5220
        %v5240 = vrot.slane %v4550, 1
        %v5241 = vrot.slane %v4551, 1
        %v5242 = vsel %vm1838, %v5240, %v5241
        %v5243 = vrot.slane %v4552, 1
        %v5244 = vsel %vm1838, %v5241, %v5243
        %v5245 = vrot.slane %v4553, 1
        %v5246 = vrot.slane %v4554, 1
        %v5247 = vsel %vm1838, %v5245, %v5246
        %v5248 = vrot.slane %v4555, 1
        %v5249 = vsel %vm1838, %v5246, %v5248
        %v5250 = vrot.slane %v4556, 1
        %v5251 = vrot.slane %v4557, 1
        %v5252 = vsel %vm1838, %v5250, %v5251
        %v5253 = vrot.slane %v4558, 1
        %v5254 = vsel %vm1838, %v5251, %v5253
        %v5255 = vrot.slane %v4559, 1
        %v5256 = vrot.slane %v4560, 1
        %v5257 = vsel %vm1838, %v5255, %v5256
        %v5258 = vrot.slane %v4561, 1
        %v5259 = vsel %vm1838, %v5256, %v5258
        %v5268 = vcombine.low %v5242, %v5252
        %v5269 = vcombine.high %v5242, %v5252
        %v5271 = vunpack.c.l.s4 1983009808
        %v5272 = vunpack.c.0.s8 %v5271
        %v5273 = vlaneseq
        %v5274 = vshrl.u32 %v5273, 7
        %v5275 = vsub.s32 %v5272, %v5274
        %v5276 = vrot.slane %v5268, %v5275
        %v5278 = vunpack.c.l.s4 1983009808
        %v5279 = vunpack.c.0.s8 %v5278
        %v5280 = vlaneseq
        %v5281 = vshrl.u32 %v5280, 7
        %v5282 = vsub.s32 %v5279, %v5281
        %v5283 = vrot.slane %v5269, %v5282
        %v5284 = vcombine.low %v5247, %v5257
        %v5285 = vcombine.high %v5247, %v5257
        %v5287 = vunpack.c.l.s4 1983009808
        %v5288 = vunpack.c.0.s8 %v5287
        %v5289 = vlaneseq
        %v5290 = vshrl.u32 %v5289, 7
        %v5291 = vsub.s32 %v5288, %v5290
        %v5292 = vrot.slane %v5284, %v5291
        %v5294 = vunpack.c.l.s4 1983009808
        %v5295 = vunpack.c.0.s8 %v5294
        %v5296 = vlaneseq
        %v5297 = vshrl.u32 %v5296, 7
        %v5298 = vsub.s32 %v5295, %v5297
        %v5299 = vrot.slane %v5285, %v5298
        %v5300 = vcombine.low %v5276, %v5292
        %v5301 = vcombine.high %v5276, %v5292
        %v5303 = vunpack.c.l.s4 1934713408
        %v5304 = vunpack.c.0.s8 %v5303
        %v5305 = vlaneseq
        %v5306 = vshrl.u32 %v5305, 7
        %v5307 = vsub.s32 %v5304, %v5306
        %v5308 = vrot.slane %v5300, %v5307
        %v5310 = vunpack.c.l.s4 1934713408
        %v5311 = vunpack.c.0.s8 %v5310
        %v5312 = vlaneseq
        %v5313 = vshrl.u32 %v5312, 7
        %v5314 = vsub.s32 %v5311, %v5313
        %v5315 = vrot.slane %v5301, %v5314
        %v5316 = vcombine.low %v5283, %v5299
        %v5317 = vcombine.high %v5283, %v5299
        %v5319 = vunpack.c.l.s4 1934713408
        %v5320 = vunpack.c.0.s8 %v5319
        %v5321 = vlaneseq
        %v5322 = vshrl.u32 %v5321, 7
        %v5323 = vsub.s32 %v5320, %v5322
        %v5324 = vrot.slane %v5316, %v5323
        %v5326 = vunpack.c.l.s4 1934713408
        %v5327 = vunpack.c.0.s8 %v5326
        %v5328 = vlaneseq
        %v5329 = vshrl.u32 %v5328, 7
        %v5330 = vsub.s32 %v5327, %v5329
        %v5331 = vrot.slane %v5317, %v5330
        %v5332 = vcombine.high %v5308, 0.0
        %v5333 = vcombine.high %v5315, 0.0
        %v5334 = vcombine.high %v5324, 0.0
        %v5335 = vcombine.high %v5331, 0.0
        %v5336 = vcombine.low %v5244, %v5254
        %v5337 = vcombine.high %v5244, %v5254
        %v5339 = vunpack.c.l.s4 1983009808
        %v5340 = vunpack.c.0.s8 %v5339
        %v5341 = vlaneseq
        %v5342 = vshrl.u32 %v5341, 7
        %v5343 = vsub.s32 %v5340, %v5342
        %v5344 = vrot.slane %v5336, %v5343
        %v5346 = vunpack.c.l.s4 1983009808
        %v5347 = vunpack.c.0.s8 %v5346
        %v5348 = vlaneseq
        %v5349 = vshrl.u32 %v5348, 7
        %v5350 = vsub.s32 %v5347, %v5349
        %v5351 = vrot.slane %v5337, %v5350
        %v5352 = vcombine.low %v5249, %v5259
        %v5353 = vcombine.high %v5249, %v5259
        %v5355 = vunpack.c.l.s4 1983009808
        %v5356 = vunpack.c.0.s8 %v5355
        %v5357 = vlaneseq
        %v5358 = vshrl.u32 %v5357, 7
        %v5359 = vsub.s32 %v5356, %v5358
        %v5360 = vrot.slane %v5352, %v5359
        %v5362 = vunpack.c.l.s4 1983009808
        %v5363 = vunpack.c.0.s8 %v5362
        %v5364 = vlaneseq
        %v5365 = vshrl.u32 %v5364, 7
        %v5366 = vsub.s32 %v5363, %v5365
        %v5367 = vrot.slane %v5353, %v5366
        %v5368 = vcombine.low %v5344, %v5360
        %v5369 = vcombine.high %v5344, %v5360
        %v5371 = vunpack.c.l.s4 1934713408
        %v5372 = vunpack.c.0.s8 %v5371
        %v5373 = vlaneseq
        %v5374 = vshrl.u32 %v5373, 7
        %v5375 = vsub.s32 %v5372, %v5374
        %v5376 = vrot.slane %v5368, %v5375
        %v5378 = vunpack.c.l.s4 1934713408
        %v5379 = vunpack.c.0.s8 %v5378
        %v5380 = vlaneseq
        %v5381 = vshrl.u32 %v5380, 7
        %v5382 = vsub.s32 %v5379, %v5381
        %v5383 = vrot.slane %v5369, %v5382
        %v5384 = vcombine.low %v5351, %v5367
        %v5385 = vcombine.high %v5351, %v5367
        %v5387 = vunpack.c.l.s4 1934713408
        %v5388 = vunpack.c.0.s8 %v5387
        %v5389 = vlaneseq
        %v5390 = vshrl.u32 %v5389, 7
        %v5391 = vsub.s32 %v5388, %v5390
        %v5392 = vrot.slane %v5384, %v5391
        %v5394 = vunpack.c.l.s4 1934713408
        %v5395 = vunpack.c.0.s8 %v5394
        %v5396 = vlaneseq
        %v5397 = vshrl.u32 %v5396, 7
        %v5398 = vsub.s32 %v5395, %v5397
        %v5399 = vrot.slane %v5385, %v5398
        %v5400 = vcombine.high %v5376, 0.0
        %v5401 = vcombine.high %v5383, 0.0
        %v5402 = vcombine.high %v5392, 0.0
        %v5403 = vcombine.high %v5399, 0.0
        %5405 = vrot.lane.b32.xlu0 %v5332, 16
        %v5406 = vpop.permute.xlu0 %5405
        %5409 = vrot.lane.b32.xlu0 %v5315, 32
        %v5410 = vpop.permute.xlu0 %5409
        %5413 = vrot.lane.b32.xlu0 %v5333, 48
        %v5414 = vpop.permute.xlu0 %5413
        %5417 = vrot.lane.b32.xlu0 %v5324, 64
        %v5418 = vpop.permute.xlu0 %5417
        %5421 = vrot.lane.b32.xlu0 %v5334, 80
        %v5422 = vpop.permute.xlu0 %5421
        %5425 = vrot.lane.b32.xlu0 %v5331, 96
        %v5426 = vpop.permute.xlu0 %5425
        %5429 = vrot.lane.b32.xlu0 %v5335, 112
        %v5430 = vpop.permute.xlu0 %5429
        %5433 = vrot.lane.b32.xlu0 %v5400, 16
        %v5434 = vpop.permute.xlu0 %5433
        %5437 = vrot.lane.b32.xlu0 %v5383, 32
        %v5438 = vpop.permute.xlu0 %5437
        %5441 = vrot.lane.b32.xlu0 %v5401, 48
        %v5442 = vpop.permute.xlu0 %5441
        %5445 = vrot.lane.b32.xlu0 %v5392, 64
        %v5446 = vpop.permute.xlu0 %5445
        %5449 = vrot.lane.b32.xlu0 %v5402, 80
        %v5450 = vpop.permute.xlu0 %5449
        %5453 = vrot.lane.b32.xlu0 %v5399, 96
        %v5454 = vpop.permute.xlu0 %5453
        %5457 = vrot.lane.b32.xlu0 %v5403, 112
        %v5458 = vpop.permute.xlu0 %5457
        %v5460 = vsel %vm1013, %v5308, %v5406
        %v5461 = vsel %vm1015, %v5460, %v5410
        %v5462 = vsel %vm1017, %v5461, %v5414
        %v5463 = vsel %vm1019, %v5462, %v5418
        %v5464 = vsel %vm1021, %v5463, %v5422
        %v5465 = vsel %vm1023, %v5464, %v5426
        %v5466 = vsel %vm1025, %v5465, %v5430
        %v5467 = vsel %vm1013, %v5376, %v5434
        %v5468 = vsel %vm1015, %v5467, %v5438
        %v5469 = vsel %vm1017, %v5468, %v5442
        %v5470 = vsel %vm1019, %v5469, %v5446
        %v5471 = vsel %vm1021, %v5470, %v5450
        %v5472 = vsel %vm1023, %v5471, %v5454
        %v5473 = vsel %vm1025, %v5472, %v5458
        %5474 = vrot.lane.b32.xlu0 %v5242, 127
        %v5475 = vpop.permute.xlu0 %5474
        %5476 = vrot.lane.b32.xlu0 %v5244, 127
        %v5477 = vpop.permute.xlu0 %5476
        %5478 = vrot.lane.b32.xlu0 %v5247, 127
        %v5479 = vpop.permute.xlu0 %5478
        %5480 = vrot.lane.b32.xlu0 %v5249, 127
        %v5481 = vpop.permute.xlu0 %5480
        %5482 = vrot.lane.b32.xlu0 %v5252, 127
        %v5483 = vpop.permute.xlu0 %5482
        %5484 = vrot.lane.b32.xlu0 %v5254, 127
        %v5485 = vpop.permute.xlu0 %5484
        %5486 = vrot.lane.b32.xlu0 %v5257, 127
        %v5487 = vpop.permute.xlu0 %5486
        %5488 = vrot.lane.b32.xlu0 %v5259, 127
        %v5489 = vpop.permute.xlu0 %5488
        %v5498 = vcombine.low %v5475, %v5483
        %v5499 = vcombine.high %v5475, %v5483
        %v5501 = vunpack.c.l.s4 1983009808
        %v5502 = vunpack.c.0.s8 %v5501
        %v5503 = vlaneseq
        %v5504 = vshrl.u32 %v5503, 7
        %v5505 = vsub.s32 %v5502, %v5504
        %v5506 = vrot.slane %v5498, %v5505
        %v5508 = vunpack.c.l.s4 1983009808
        %v5509 = vunpack.c.0.s8 %v5508
        %v5510 = vlaneseq
        %v5511 = vshrl.u32 %v5510, 7
        %v5512 = vsub.s32 %v5509, %v5511
        %v5513 = vrot.slane %v5499, %v5512
        %v5514 = vcombine.low %v5479, %v5487
        %v5515 = vcombine.high %v5479, %v5487
        %v5517 = vunpack.c.l.s4 1983009808
        %v5518 = vunpack.c.0.s8 %v5517
        %v5519 = vlaneseq
        %v5520 = vshrl.u32 %v5519, 7
        %v5521 = vsub.s32 %v5518, %v5520
        %v5522 = vrot.slane %v5514, %v5521
        %v5524 = vunpack.c.l.s4 1983009808
        %v5525 = vunpack.c.0.s8 %v5524
        %v5526 = vlaneseq
        %v5527 = vshrl.u32 %v5526, 7
        %v5528 = vsub.s32 %v5525, %v5527
        %v5529 = vrot.slane %v5515, %v5528
        %v5530 = vcombine.low %v5506, %v5522
        %v5531 = vcombine.high %v5506, %v5522
        %v5533 = vunpack.c.l.s4 1934713408
        %v5534 = vunpack.c.0.s8 %v5533
        %v5535 = vlaneseq
        %v5536 = vshrl.u32 %v5535, 7
        %v5537 = vsub.s32 %v5534, %v5536
        %v5538 = vrot.slane %v5530, %v5537
        %v5540 = vunpack.c.l.s4 1934713408
        %v5541 = vunpack.c.0.s8 %v5540
        %v5542 = vlaneseq
        %v5543 = vshrl.u32 %v5542, 7
        %v5544 = vsub.s32 %v5541, %v5543
        %v5545 = vrot.slane %v5531, %v5544
        %v5546 = vcombine.low %v5513, %v5529
        %v5547 = vcombine.high %v5513, %v5529
        %v5549 = vunpack.c.l.s4 1934713408
        %v5550 = vunpack.c.0.s8 %v5549
        %v5551 = vlaneseq
        %v5552 = vshrl.u32 %v5551, 7
        %v5553 = vsub.s32 %v5550, %v5552
        %v5554 = vrot.slane %v5546, %v5553
        %v5556 = vunpack.c.l.s4 1934713408
        %v5557 = vunpack.c.0.s8 %v5556
        %v5558 = vlaneseq
        %v5559 = vshrl.u32 %v5558, 7
        %v5560 = vsub.s32 %v5557, %v5559
        %v5561 = vrot.slane %v5547, %v5560
        %v5562 = vcombine.high %v5538, 0.0
        %v5563 = vcombine.high %v5545, 0.0
        %v5564 = vcombine.high %v5554, 0.0
        %v5565 = vcombine.high %v5561, 0.0
        %v5566 = vcombine.low %v5477, %v5485
        %v5567 = vcombine.high %v5477, %v5485
        %v5569 = vunpack.c.l.s4 1983009808
        %v5570 = vunpack.c.0.s8 %v5569
        %v5571 = vlaneseq
        %v5572 = vshrl.u32 %v5571, 7
        %v5573 = vsub.s32 %v5570, %v5572
        %v5574 = vrot.slane %v5566, %v5573
        %v5576 = vunpack.c.l.s4 1983009808
        %v5577 = vunpack.c.0.s8 %v5576
        %v5578 = vlaneseq
        %v5579 = vshrl.u32 %v5578, 7
        %v5580 = vsub.s32 %v5577, %v5579
        %v5581 = vrot.slane %v5567, %v5580
        %v5582 = vcombine.low %v5481, %v5489
        %v5583 = vcombine.high %v5481, %v5489
        %v5585 = vunpack.c.l.s4 1983009808
        %v5586 = vunpack.c.0.s8 %v5585
        %v5587 = vlaneseq
        %v5588 = vshrl.u32 %v5587, 7
        %v5589 = vsub.s32 %v5586, %v5588
        %v5590 = vrot.slane %v5582, %v5589
        %v5592 = vunpack.c.l.s4 1983009808
        %v5593 = vunpack.c.0.s8 %v5592
        %v5594 = vlaneseq
        %v5595 = vshrl.u32 %v5594, 7
        %v5596 = vsub.s32 %v5593, %v5595
        %v5597 = vrot.slane %v5583, %v5596
        %v5598 = vcombine.low %v5574, %v5590
        %v5599 = vcombine.high %v5574, %v5590
        %v5601 = vunpack.c.l.s4 1934713408
        %v5602 = vunpack.c.0.s8 %v5601
        %v5603 = vlaneseq
        %v5604 = vshrl.u32 %v5603, 7
        %v5605 = vsub.s32 %v5602, %v5604
        %v5606 = vrot.slane %v5598, %v5605
        %v5608 = vunpack.c.l.s4 1934713408
        %v5609 = vunpack.c.0.s8 %v5608
        %v5610 = vlaneseq
        %v5611 = vshrl.u32 %v5610, 7
        %v5612 = vsub.s32 %v5609, %v5611
        %v5613 = vrot.slane %v5599, %v5612
        %v5614 = vcombine.low %v5581, %v5597
        %v5615 = vcombine.high %v5581, %v5597
        %v5617 = vunpack.c.l.s4 1934713408
        %v5618 = vunpack.c.0.s8 %v5617
        %v5619 = vlaneseq
        %v5620 = vshrl.u32 %v5619, 7
        %v5621 = vsub.s32 %v5618, %v5620
        %v5622 = vrot.slane %v5614, %v5621
        %v5624 = vunpack.c.l.s4 1934713408
        %v5625 = vunpack.c.0.s8 %v5624
        %v5626 = vlaneseq
        %v5627 = vshrl.u32 %v5626, 7
        %v5628 = vsub.s32 %v5625, %v5627
        %v5629 = vrot.slane %v5615, %v5628
        %v5630 = vcombine.high %v5606, 0.0
        %v5631 = vcombine.high %v5613, 0.0
        %v5632 = vcombine.high %v5622, 0.0
        %v5633 = vcombine.high %v5629, 0.0
        %5635 = vrot.lane.b32.xlu0 %v5562, 16
        %v5636 = vpop.permute.xlu0 %5635
        %5639 = vrot.lane.b32.xlu0 %v5545, 32
        %v5640 = vpop.permute.xlu0 %5639
        %5643 = vrot.lane.b32.xlu0 %v5563, 48
        %v5644 = vpop.permute.xlu0 %5643
        %5647 = vrot.lane.b32.xlu0 %v5554, 64
        %v5648 = vpop.permute.xlu0 %5647
        %5651 = vrot.lane.b32.xlu0 %v5564, 80
        %v5652 = vpop.permute.xlu0 %5651
        %5655 = vrot.lane.b32.xlu0 %v5561, 96
        %v5656 = vpop.permute.xlu0 %5655
        %5659 = vrot.lane.b32.xlu0 %v5565, 112
        %v5660 = vpop.permute.xlu0 %5659
        %5663 = vrot.lane.b32.xlu0 %v5630, 16
        %v5664 = vpop.permute.xlu0 %5663
        %5667 = vrot.lane.b32.xlu0 %v5613, 32
        %v5668 = vpop.permute.xlu0 %5667
        %5671 = vrot.lane.b32.xlu0 %v5631, 48
        %v5672 = vpop.permute.xlu0 %5671
        %5675 = vrot.lane.b32.xlu0 %v5622, 64
        %v5676 = vpop.permute.xlu0 %5675
        %5679 = vrot.lane.b32.xlu0 %v5632, 80
        %v5680 = vpop.permute.xlu0 %5679
        %5683 = vrot.lane.b32.xlu0 %v5629, 96
        %v5684 = vpop.permute.xlu0 %5683
        %5687 = vrot.lane.b32.xlu0 %v5633, 112
        %v5688 = vpop.permute.xlu0 %5687
        %v5690 = vsel %vm1013, %v5538, %v5636
        %v5691 = vsel %vm1015, %v5690, %v5640
        %v5692 = vsel %vm1017, %v5691, %v5644
        %v5693 = vsel %vm1019, %v5692, %v5648
        %v5694 = vsel %vm1021, %v5693, %v5652
        %v5695 = vsel %vm1023, %v5694, %v5656
        %v5696 = vsel %vm1025, %v5695, %v5660
        %v5697 = vsel %vm1013, %v5606, %v5664
        %v5698 = vsel %vm1015, %v5697, %v5668
        %v5699 = vsel %vm1017, %v5698, %v5672
        %v5700 = vsel %vm1019, %v5699, %v5676
        %v5701 = vsel %vm1021, %v5700, %v5680
        %v5702 = vsel %vm1023, %v5701, %v5684
        %v5703 = vsel %vm1025, %v5702, %v5688
        %5704 = vrot.lane.b32.xlu0 %v5242, 126
        %v5705 = vpop.permute.xlu0 %5704
        %5706 = vrot.lane.b32.xlu0 %v5244, 126
        %v5707 = vpop.permute.xlu0 %5706
        %5708 = vrot.lane.b32.xlu0 %v5247, 126
        %v5709 = vpop.permute.xlu0 %5708
        %5710 = vrot.lane.b32.xlu0 %v5249, 126
        %v5711 = vpop.permute.xlu0 %5710
        %5712 = vrot.lane.b32.xlu0 %v5252, 126
        %v5713 = vpop.permute.xlu0 %5712
        %5714 = vrot.lane.b32.xlu0 %v5254, 126
        %v5715 = vpop.permute.xlu0 %5714
        %5716 = vrot.lane.b32.xlu0 %v5257, 126
        %v5717 = vpop.permute.xlu0 %5716
        %5718 = vrot.lane.b32.xlu0 %v5259, 126
        %v5719 = vpop.permute.xlu0 %5718
        %v5728 = vcombine.low %v5705, %v5713
        %v5729 = vcombine.high %v5705, %v5713
        %v5731 = vunpack.c.l.s4 1983009808
        %v5732 = vunpack.c.0.s8 %v5731
        %v5733 = vlaneseq
        %v5734 = vshrl.u32 %v5733, 7
        %v5735 = vsub.s32 %v5732, %v5734
        %v5736 = vrot.slane %v5728, %v5735
        %v5738 = vunpack.c.l.s4 1983009808
        %v5739 = vunpack.c.0.s8 %v5738
        %v5740 = vlaneseq
        %v5741 = vshrl.u32 %v5740, 7
        %v5742 = vsub.s32 %v5739, %v5741
        %v5743 = vrot.slane %v5729, %v5742
        %v5744 = vcombine.low %v5709, %v5717
        %v5745 = vcombine.high %v5709, %v5717
        %v5747 = vunpack.c.l.s4 1983009808
        %v5748 = vunpack.c.0.s8 %v5747
        %v5749 = vlaneseq
        %v5750 = vshrl.u32 %v5749, 7
        %v5751 = vsub.s32 %v5748, %v5750
        %v5752 = vrot.slane %v5744, %v5751
        %v5754 = vunpack.c.l.s4 1983009808
        %v5755 = vunpack.c.0.s8 %v5754
        %v5756 = vlaneseq
        %v5757 = vshrl.u32 %v5756, 7
        %v5758 = vsub.s32 %v5755, %v5757
        %v5759 = vrot.slane %v5745, %v5758
        %v5760 = vcombine.low %v5736, %v5752
        %v5761 = vcombine.high %v5736, %v5752
        %v5763 = vunpack.c.l.s4 1934713408
        %v5764 = vunpack.c.0.s8 %v5763
        %v5765 = vlaneseq
        %v5766 = vshrl.u32 %v5765, 7
        %v5767 = vsub.s32 %v5764, %v5766
        %v5768 = vrot.slane %v5760, %v5767
        %v5770 = vunpack.c.l.s4 1934713408
        %v5771 = vunpack.c.0.s8 %v5770
        %v5772 = vlaneseq
        %v5773 = vshrl.u32 %v5772, 7
        %v5774 = vsub.s32 %v5771, %v5773
        %v5775 = vrot.slane %v5761, %v5774
        %v5776 = vcombine.low %v5743, %v5759
        %v5777 = vcombine.high %v5743, %v5759
        %v5779 = vunpack.c.l.s4 1934713408
        %v5780 = vunpack.c.0.s8 %v5779
        %v5781 = vlaneseq
        %v5782 = vshrl.u32 %v5781, 7
        %v5783 = vsub.s32 %v5780, %v5782
        %v5784 = vrot.slane %v5776, %v5783
        %v5786 = vunpack.c.l.s4 1934713408
        %v5787 = vunpack.c.0.s8 %v5786
        %v5788 = vlaneseq
        %v5789 = vshrl.u32 %v5788, 7
        %v5790 = vsub.s32 %v5787, %v5789
        %v5791 = vrot.slane %v5777, %v5790
        %v5792 = vcombine.high %v5768, 0.0
        %v5793 = vcombine.high %v5775, 0.0
        %v5794 = vcombine.high %v5784, 0.0
        %v5795 = vcombine.high %v5791, 0.0
        %v5796 = vcombine.low %v5707, %v5715
        %v5797 = vcombine.high %v5707, %v5715
        %v5799 = vunpack.c.l.s4 1983009808
        %v5800 = vunpack.c.0.s8 %v5799
        %v5801 = vlaneseq
        %v5802 = vshrl.u32 %v5801, 7
        %v5803 = vsub.s32 %v5800, %v5802
        %v5804 = vrot.slane %v5796, %v5803
        %v5806 = vunpack.c.l.s4 1983009808
        %v5807 = vunpack.c.0.s8 %v5806
        %v5808 = vlaneseq
        %v5809 = vshrl.u32 %v5808, 7
        %v5810 = vsub.s32 %v5807, %v5809
        %v5811 = vrot.slane %v5797, %v5810
        %v5812 = vcombine.low %v5711, %v5719
        %v5813 = vcombine.high %v5711, %v5719
        %v5815 = vunpack.c.l.s4 1983009808
        %v5816 = vunpack.c.0.s8 %v5815
        %v5817 = vlaneseq
        %v5818 = vshrl.u32 %v5817, 7
        %v5819 = vsub.s32 %v5816, %v5818
        %v5820 = vrot.slane %v5812, %v5819
        %v5822 = vunpack.c.l.s4 1983009808
        %v5823 = vunpack.c.0.s8 %v5822
        %v5824 = vlaneseq
        %v5825 = vshrl.u32 %v5824, 7
        %v5826 = vsub.s32 %v5823, %v5825
        %v5827 = vrot.slane %v5813, %v5826
        %v5828 = vcombine.low %v5804, %v5820
        %v5829 = vcombine.high %v5804, %v5820
        %v5831 = vunpack.c.l.s4 1934713408
        %v5832 = vunpack.c.0.s8 %v5831
        %v5833 = vlaneseq
        %v5834 = vshrl.u32 %v5833, 7
        %v5835 = vsub.s32 %v5832, %v5834
        %v5836 = vrot.slane %v5828, %v5835
        %v5838 = vunpack.c.l.s4 1934713408
        %v5839 = vunpack.c.0.s8 %v5838
        %v5840 = vlaneseq
        %v5841 = vshrl.u32 %v5840, 7
        %v5842 = vsub.s32 %v5839, %v5841
        %v5843 = vrot.slane %v5829, %v5842
        %v5844 = vcombine.low %v5811, %v5827
        %v5845 = vcombine.high %v5811, %v5827
        %v5847 = vunpack.c.l.s4 1934713408
        %v5848 = vunpack.c.0.s8 %v5847
        %v5849 = vlaneseq
        %v5850 = vshrl.u32 %v5849, 7
        %v5851 = vsub.s32 %v5848, %v5850
        %v5852 = vrot.slane %v5844, %v5851
        %v5854 = vunpack.c.l.s4 1934713408
        %v5855 = vunpack.c.0.s8 %v5854
        %v5856 = vlaneseq
        %v5857 = vshrl.u32 %v5856, 7
        %v5858 = vsub.s32 %v5855, %v5857
        %v5859 = vrot.slane %v5845, %v5858
        %v5860 = vcombine.high %v5836, 0.0
        %v5861 = vcombine.high %v5843, 0.0
        %v5862 = vcombine.high %v5852, 0.0
        %v5863 = vcombine.high %v5859, 0.0
        %5865 = vrot.lane.b32.xlu0 %v5792, 16
        %v5866 = vpop.permute.xlu0 %5865
        %5869 = vrot.lane.b32.xlu0 %v5775, 32
        %v5870 = vpop.permute.xlu0 %5869
        %5873 = vrot.lane.b32.xlu0 %v5793, 48
        %v5874 = vpop.permute.xlu0 %5873
        %5877 = vrot.lane.b32.xlu0 %v5784, 64
        %v5878 = vpop.permute.xlu0 %5877
        %5881 = vrot.lane.b32.xlu0 %v5794, 80
        %v5882 = vpop.permute.xlu0 %5881
        %5885 = vrot.lane.b32.xlu0 %v5791, 96
        %v5886 = vpop.permute.xlu0 %5885
        %5889 = vrot.lane.b32.xlu0 %v5795, 112
        %v5890 = vpop.permute.xlu0 %5889
        %5893 = vrot.lane.b32.xlu0 %v5860, 16
        %v5894 = vpop.permute.xlu0 %5893
        %5897 = vrot.lane.b32.xlu0 %v5843, 32
        %v5898 = vpop.permute.xlu0 %5897
        %5901 = vrot.lane.b32.xlu0 %v5861, 48
        %v5902 = vpop.permute.xlu0 %5901
        %5905 = vrot.lane.b32.xlu0 %v5852, 64
        %v5906 = vpop.permute.xlu0 %5905
        %5909 = vrot.lane.b32.xlu0 %v5862, 80
        %v5910 = vpop.permute.xlu0 %5909
        %5913 = vrot.lane.b32.xlu0 %v5859, 96
        %v5914 = vpop.permute.xlu0 %5913
        %5917 = vrot.lane.b32.xlu0 %v5863, 112
        %v5918 = vpop.permute.xlu0 %5917
        %v5920 = vsel %vm1013, %v5768, %v5866
        %v5921 = vsel %vm1015, %v5920, %v5870
        %v5922 = vsel %vm1017, %v5921, %v5874
        %v5923 = vsel %vm1019, %v5922, %v5878
        %v5924 = vsel %vm1021, %v5923, %v5882
        %v5925 = vsel %vm1023, %v5924, %v5886
        %v5926 = vsel %vm1025, %v5925, %v5890
        %v5927 = vsel %vm1013, %v5836, %v5894
        %v5928 = vsel %vm1015, %v5927, %v5898
        %v5929 = vsel %vm1017, %v5928, %v5902
        %v5930 = vsel %vm1019, %v5929, %v5906
        %v5931 = vsel %vm1021, %v5930, %v5910
        %v5932 = vsel %vm1023, %v5931, %v5914
        %v5933 = vsel %vm1025, %v5932, %v5918
        %v5934 = vrot.slane %v4550, 2
        %v5935 = vrot.slane %v4551, 2
        %v5936 = vsel %vm3017, %v5934, %v5935
        %v5937 = vrot.slane %v4552, 2
        %v5938 = vsel %vm3017, %v5935, %v5937
        %v5939 = vrot.slane %v4553, 2
        %v5940 = vrot.slane %v4554, 2
        %v5941 = vsel %vm3017, %v5939, %v5940
        %v5942 = vrot.slane %v4555, 2
        %v5943 = vsel %vm3017, %v5940, %v5942
        %v5944 = vrot.slane %v4556, 2
        %v5945 = vrot.slane %v4557, 2
        %v5946 = vsel %vm3017, %v5944, %v5945
        %v5947 = vrot.slane %v4558, 2
        %v5948 = vsel %vm3017, %v5945, %v5947
        %v5949 = vrot.slane %v4559, 2
        %v5950 = vrot.slane %v4560, 2
        %v5951 = vsel %vm3017, %v5949, %v5950
        %v5952 = vrot.slane %v4561, 2
        %v5953 = vsel %vm3017, %v5950, %v5952
        %v5962 = vcombine.low %v5936, %v5946
        %v5963 = vcombine.high %v5936, %v5946
        %v5965 = vunpack.c.l.s4 1983009808
        %v5966 = vunpack.c.0.s8 %v5965
        %v5967 = vlaneseq
        %v5968 = vshrl.u32 %v5967, 7
        %v5969 = vsub.s32 %v5966, %v5968
        %v5970 = vrot.slane %v5962, %v5969
        %v5972 = vunpack.c.l.s4 1983009808
        %v5973 = vunpack.c.0.s8 %v5972
        %v5974 = vlaneseq
        %v5975 = vshrl.u32 %v5974, 7
        %v5976 = vsub.s32 %v5973, %v5975
        %v5977 = vrot.slane %v5963, %v5976
        %v5978 = vcombine.low %v5941, %v5951
        %v5979 = vcombine.high %v5941, %v5951
        %v5981 = vunpack.c.l.s4 1983009808
        %v5982 = vunpack.c.0.s8 %v5981
        %v5983 = vlaneseq
        %v5984 = vshrl.u32 %v5983, 7
        %v5985 = vsub.s32 %v5982, %v5984
        %v5986 = vrot.slane %v5978, %v5985
        %v5988 = vunpack.c.l.s4 1983009808
        %v5989 = vunpack.c.0.s8 %v5988
        %v5990 = vlaneseq
        %v5991 = vshrl.u32 %v5990, 7
        %v5992 = vsub.s32 %v5989, %v5991
        %v5993 = vrot.slane %v5979, %v5992
        %v5994 = vcombine.low %v5970, %v5986
        %v5995 = vcombine.high %v5970, %v5986
        %v5997 = vunpack.c.l.s4 1934713408
        %v5998 = vunpack.c.0.s8 %v5997
        %v5999 = vlaneseq
        %v6000 = vshrl.u32 %v5999, 7
        %v6001 = vsub.s32 %v5998, %v6000
        %v6002 = vrot.slane %v5994, %v6001
        %v6004 = vunpack.c.l.s4 1934713408
        %v6005 = vunpack.c.0.s8 %v6004
        %v6006 = vlaneseq
        %v6007 = vshrl.u32 %v6006, 7
        %v6008 = vsub.s32 %v6005, %v6007
        %v6009 = vrot.slane %v5995, %v6008
        %v6010 = vcombine.low %v5977, %v5993
        %v6011 = vcombine.high %v5977, %v5993
        %v6013 = vunpack.c.l.s4 1934713408
        %v6014 = vunpack.c.0.s8 %v6013
        %v6015 = vlaneseq
        %v6016 = vshrl.u32 %v6015, 7
        %v6017 = vsub.s32 %v6014, %v6016
        %v6018 = vrot.slane %v6010, %v6017
        %v6020 = vunpack.c.l.s4 1934713408
        %v6021 = vunpack.c.0.s8 %v6020
        %v6022 = vlaneseq
        %v6023 = vshrl.u32 %v6022, 7
        %v6024 = vsub.s32 %v6021, %v6023
        %v6025 = vrot.slane %v6011, %v6024
        %v6026 = vcombine.high %v6002, 0.0
        %v6027 = vcombine.high %v6009, 0.0
        %v6028 = vcombine.high %v6018, 0.0
        %v6029 = vcombine.high %v6025, 0.0
        %v6030 = vcombine.low %v5938, %v5948
        %v6031 = vcombine.high %v5938, %v5948
        %v6033 = vunpack.c.l.s4 1983009808
        %v6034 = vunpack.c.0.s8 %v6033
        %v6035 = vlaneseq
        %v6036 = vshrl.u32 %v6035, 7
        %v6037 = vsub.s32 %v6034, %v6036
        %v6038 = vrot.slane %v6030, %v6037
        %v6040 = vunpack.c.l.s4 1983009808
        %v6041 = vunpack.c.0.s8 %v6040
        %v6042 = vlaneseq
        %v6043 = vshrl.u32 %v6042, 7
        %v6044 = vsub.s32 %v6041, %v6043
        %v6045 = vrot.slane %v6031, %v6044
        %v6046 = vcombine.low %v5943, %v5953
        %v6047 = vcombine.high %v5943, %v5953
        %v6049 = vunpack.c.l.s4 1983009808
        %v6050 = vunpack.c.0.s8 %v6049
        %v6051 = vlaneseq
        %v6052 = vshrl.u32 %v6051, 7
        %v6053 = vsub.s32 %v6050, %v6052
        %v6054 = vrot.slane %v6046, %v6053
        %v6056 = vunpack.c.l.s4 1983009808
        %v6057 = vunpack.c.0.s8 %v6056
        %v6058 = vlaneseq
        %v6059 = vshrl.u32 %v6058, 7
        %v6060 = vsub.s32 %v6057, %v6059
        %v6061 = vrot.slane %v6047, %v6060
        %v6062 = vcombine.low %v6038, %v6054
        %v6063 = vcombine.high %v6038, %v6054
        %v6065 = vunpack.c.l.s4 1934713408
        %v6066 = vunpack.c.0.s8 %v6065
        %v6067 = vlaneseq
        %v6068 = vshrl.u32 %v6067, 7
        %v6069 = vsub.s32 %v6066, %v6068
        %v6070 = vrot.slane %v6062, %v6069
        %v6072 = vunpack.c.l.s4 1934713408
        %v6073 = vunpack.c.0.s8 %v6072
        %v6074 = vlaneseq
        %v6075 = vshrl.u32 %v6074, 7
        %v6076 = vsub.s32 %v6073, %v6075
        %v6077 = vrot.slane %v6063, %v6076
        %v6078 = vcombine.low %v6045, %v6061
        %v6079 = vcombine.high %v6045, %v6061
        %v6081 = vunpack.c.l.s4 1934713408
        %v6082 = vunpack.c.0.s8 %v6081
        %v6083 = vlaneseq
        %v6084 = vshrl.u32 %v6083, 7
        %v6085 = vsub.s32 %v6082, %v6084
        %v6086 = vrot.slane %v6078, %v6085
        %v6088 = vunpack.c.l.s4 1934713408
        %v6089 = vunpack.c.0.s8 %v6088
        %v6090 = vlaneseq
        %v6091 = vshrl.u32 %v6090, 7
        %v6092 = vsub.s32 %v6089, %v6091
        %v6093 = vrot.slane %v6079, %v6092
        %v6094 = vcombine.high %v6070, 0.0
        %v6095 = vcombine.high %v6077, 0.0
        %v6096 = vcombine.high %v6086, 0.0
        %v6097 = vcombine.high %v6093, 0.0
        %6099 = vrot.lane.b32.xlu0 %v6026, 16
        %v6100 = vpop.permute.xlu0 %6099
        %6103 = vrot.lane.b32.xlu0 %v6009, 32
        %v6104 = vpop.permute.xlu0 %6103
        %6107 = vrot.lane.b32.xlu0 %v6027, 48
        %v6108 = vpop.permute.xlu0 %6107
        %6111 = vrot.lane.b32.xlu0 %v6018, 64
        %v6112 = vpop.permute.xlu0 %6111
        %6115 = vrot.lane.b32.xlu0 %v6028, 80
        %v6116 = vpop.permute.xlu0 %6115
        %6119 = vrot.lane.b32.xlu0 %v6025, 96
        %v6120 = vpop.permute.xlu0 %6119
        %6123 = vrot.lane.b32.xlu0 %v6029, 112
        %v6124 = vpop.permute.xlu0 %6123
        %6127 = vrot.lane.b32.xlu0 %v6094, 16
        %v6128 = vpop.permute.xlu0 %6127
        %6131 = vrot.lane.b32.xlu0 %v6077, 32
        %v6132 = vpop.permute.xlu0 %6131
        %6135 = vrot.lane.b32.xlu0 %v6095, 48
        %v6136 = vpop.permute.xlu0 %6135
        %6139 = vrot.lane.b32.xlu0 %v6086, 64
        %v6140 = vpop.permute.xlu0 %6139
        %6143 = vrot.lane.b32.xlu0 %v6096, 80
        %v6144 = vpop.permute.xlu0 %6143
        %6147 = vrot.lane.b32.xlu0 %v6093, 96
        %v6148 = vpop.permute.xlu0 %6147
        %6151 = vrot.lane.b32.xlu0 %v6097, 112
        %v6152 = vpop.permute.xlu0 %6151
        %v6154 = vsel %vm1013, %v6002, %v6100
        %v6155 = vsel %vm1015, %v6154, %v6104
        %v6156 = vsel %vm1017, %v6155, %v6108
        %v6157 = vsel %vm1019, %v6156, %v6112
        %v6158 = vsel %vm1021, %v6157, %v6116
        %v6159 = vsel %vm1023, %v6158, %v6120
        %v6160 = vsel %vm1025, %v6159, %v6124
        %v6161 = vsel %vm1013, %v6070, %v6128
        %v6162 = vsel %vm1015, %v6161, %v6132
        %v6163 = vsel %vm1017, %v6162, %v6136
        %v6164 = vsel %vm1019, %v6163, %v6140
        %v6165 = vsel %vm1021, %v6164, %v6144
        %v6166 = vsel %vm1023, %v6165, %v6148
        %v6167 = vsel %vm1025, %v6166, %v6152
        %6168 = vrot.lane.b32.xlu0 %v5936, 127
        %v6169 = vpop.permute.xlu0 %6168
        %6170 = vrot.lane.b32.xlu0 %v5938, 127
        %v6171 = vpop.permute.xlu0 %6170
        %6172 = vrot.lane.b32.xlu0 %v5941, 127
        %v6173 = vpop.permute.xlu0 %6172
        %6174 = vrot.lane.b32.xlu0 %v5943, 127
        %v6175 = vpop.permute.xlu0 %6174
        %6176 = vrot.lane.b32.xlu0 %v5946, 127
        %v6177 = vpop.permute.xlu0 %6176
        %6178 = vrot.lane.b32.xlu0 %v5948, 127
        %v6179 = vpop.permute.xlu0 %6178
        %6180 = vrot.lane.b32.xlu0 %v5951, 127
        %v6181 = vpop.permute.xlu0 %6180
        %6182 = vrot.lane.b32.xlu0 %v5953, 127
        %v6183 = vpop.permute.xlu0 %6182
        %v6192 = vcombine.low %v6169, %v6177
        %v6193 = vcombine.high %v6169, %v6177
        %v6195 = vunpack.c.l.s4 1983009808
        %v6196 = vunpack.c.0.s8 %v6195
        %v6197 = vlaneseq
        %v6198 = vshrl.u32 %v6197, 7
        %v6199 = vsub.s32 %v6196, %v6198
        %v6200 = vrot.slane %v6192, %v6199
        %v6202 = vunpack.c.l.s4 1983009808
        %v6203 = vunpack.c.0.s8 %v6202
        %v6204 = vlaneseq
        %v6205 = vshrl.u32 %v6204, 7
        %v6206 = vsub.s32 %v6203, %v6205
        %v6207 = vrot.slane %v6193, %v6206
        %v6208 = vcombine.low %v6173, %v6181
        %v6209 = vcombine.high %v6173, %v6181
        %v6211 = vunpack.c.l.s4 1983009808
        %v6212 = vunpack.c.0.s8 %v6211
        %v6213 = vlaneseq
        %v6214 = vshrl.u32 %v6213, 7
        %v6215 = vsub.s32 %v6212, %v6214
        %v6216 = vrot.slane %v6208, %v6215
        %v6218 = vunpack.c.l.s4 1983009808
        %v6219 = vunpack.c.0.s8 %v6218
        %v6220 = vlaneseq
        %v6221 = vshrl.u32 %v6220, 7
        %v6222 = vsub.s32 %v6219, %v6221
        %v6223 = vrot.slane %v6209, %v6222
        %v6224 = vcombine.low %v6200, %v6216
        %v6225 = vcombine.high %v6200, %v6216
        %v6227 = vunpack.c.l.s4 1934713408
        %v6228 = vunpack.c.0.s8 %v6227
        %v6229 = vlaneseq
        %v6230 = vshrl.u32 %v6229, 7
        %v6231 = vsub.s32 %v6228, %v6230
        %v6232 = vrot.slane %v6224, %v6231
        %v6234 = vunpack.c.l.s4 1934713408
        %v6235 = vunpack.c.0.s8 %v6234
        %v6236 = vlaneseq
        %v6237 = vshrl.u32 %v6236, 7
        %v6238 = vsub.s32 %v6235, %v6237
        %v6239 = vrot.slane %v6225, %v6238
        %v6240 = vcombine.low %v6207, %v6223
        %v6241 = vcombine.high %v6207, %v6223
        %v6243 = vunpack.c.l.s4 1934713408
        %v6244 = vunpack.c.0.s8 %v6243
        %v6245 = vlaneseq
        %v6246 = vshrl.u32 %v6245, 7
        %v6247 = vsub.s32 %v6244, %v6246
        %v6248 = vrot.slane %v6240, %v6247
        %v6250 = vunpack.c.l.s4 1934713408
        %v6251 = vunpack.c.0.s8 %v6250
        %v6252 = vlaneseq
        %v6253 = vshrl.u32 %v6252, 7
        %v6254 = vsub.s32 %v6251, %v6253
        %v6255 = vrot.slane %v6241, %v6254
        %v6256 = vcombine.high %v6232, 0.0
        %v6257 = vcombine.high %v6239, 0.0
        %v6258 = vcombine.high %v6248, 0.0
        %v6259 = vcombine.high %v6255, 0.0
        %v6260 = vcombine.low %v6171, %v6179
        %v6261 = vcombine.high %v6171, %v6179
        %v6263 = vunpack.c.l.s4 1983009808
        %v6264 = vunpack.c.0.s8 %v6263
        %v6265 = vlaneseq
        %v6266 = vshrl.u32 %v6265, 7
        %v6267 = vsub.s32 %v6264, %v6266
        %v6268 = vrot.slane %v6260, %v6267
        %v6270 = vunpack.c.l.s4 1983009808
        %v6271 = vunpack.c.0.s8 %v6270
        %v6272 = vlaneseq
        %v6273 = vshrl.u32 %v6272, 7
        %v6274 = vsub.s32 %v6271, %v6273
        %v6275 = vrot.slane %v6261, %v6274
        %v6276 = vcombine.low %v6175, %v6183
        %v6277 = vcombine.high %v6175, %v6183
        %v6279 = vunpack.c.l.s4 1983009808
        %v6280 = vunpack.c.0.s8 %v6279
        %v6281 = vlaneseq
        %v6282 = vshrl.u32 %v6281, 7
        %v6283 = vsub.s32 %v6280, %v6282
        %v6284 = vrot.slane %v6276, %v6283
        %v6286 = vunpack.c.l.s4 1983009808
        %v6287 = vunpack.c.0.s8 %v6286
        %v6288 = vlaneseq
        %v6289 = vshrl.u32 %v6288, 7
        %v6290 = vsub.s32 %v6287, %v6289
        %v6291 = vrot.slane %v6277, %v6290
        %v6292 = vcombine.low %v6268, %v6284
        %v6293 = vcombine.high %v6268, %v6284
        %v6295 = vunpack.c.l.s4 1934713408
        %v6296 = vunpack.c.0.s8 %v6295
        %v6297 = vlaneseq
        %v6298 = vshrl.u32 %v6297, 7
        %v6299 = vsub.s32 %v6296, %v6298
        %v6300 = vrot.slane %v6292, %v6299
        %v6302 = vunpack.c.l.s4 1934713408
        %v6303 = vunpack.c.0.s8 %v6302
        %v6304 = vlaneseq
        %v6305 = vshrl.u32 %v6304, 7
        %v6306 = vsub.s32 %v6303, %v6305
        %v6307 = vrot.slane %v6293, %v6306
        %v6308 = vcombine.low %v6275, %v6291
        %v6309 = vcombine.high %v6275, %v6291
        %v6311 = vunpack.c.l.s4 1934713408
        %v6312 = vunpack.c.0.s8 %v6311
        %v6313 = vlaneseq
        %v6314 = vshrl.u32 %v6313, 7
        %v6315 = vsub.s32 %v6312, %v6314
        %v6316 = vrot.slane %v6308, %v6315
        %v6318 = vunpack.c.l.s4 1934713408
        %v6319 = vunpack.c.0.s8 %v6318
        %v6320 = vlaneseq
        %v6321 = vshrl.u32 %v6320, 7
        %v6322 = vsub.s32 %v6319, %v6321
        %v6323 = vrot.slane %v6309, %v6322
        %v6324 = vcombine.high %v6300, 0.0
        %v6325 = vcombine.high %v6307, 0.0
        %v6326 = vcombine.high %v6316, 0.0
        %v6327 = vcombine.high %v6323, 0.0
        %6329 = vrot.lane.b32.xlu0 %v6256, 16
        %v6330 = vpop.permute.xlu0 %6329
        %6333 = vrot.lane.b32.xlu0 %v6239, 32
        %v6334 = vpop.permute.xlu0 %6333
        %6337 = vrot.lane.b32.xlu0 %v6257, 48
        %v6338 = vpop.permute.xlu0 %6337
        %6341 = vrot.lane.b32.xlu0 %v6248, 64
        %v6342 = vpop.permute.xlu0 %6341
        %6345 = vrot.lane.b32.xlu0 %v6258, 80
        %v6346 = vpop.permute.xlu0 %6345
        %6349 = vrot.lane.b32.xlu0 %v6255, 96
        %v6350 = vpop.permute.xlu0 %6349
        %6353 = vrot.lane.b32.xlu0 %v6259, 112
        %v6354 = vpop.permute.xlu0 %6353
        %6357 = vrot.lane.b32.xlu0 %v6324, 16
        %v6358 = vpop.permute.xlu0 %6357
        %6361 = vrot.lane.b32.xlu0 %v6307, 32
        %v6362 = vpop.permute.xlu0 %6361
        %6365 = vrot.lane.b32.xlu0 %v6325, 48
        %v6366 = vpop.permute.xlu0 %6365
        %6369 = vrot.lane.b32.xlu0 %v6316, 64
        %v6370 = vpop.permute.xlu0 %6369
        %6373 = vrot.lane.b32.xlu0 %v6326, 80
        %v6374 = vpop.permute.xlu0 %6373
        %6377 = vrot.lane.b32.xlu0 %v6323, 96
        %v6378 = vpop.permute.xlu0 %6377
        %6381 = vrot.lane.b32.xlu0 %v6327, 112
        %v6382 = vpop.permute.xlu0 %6381
        %v6384 = vsel %vm1013, %v6232, %v6330
        %v6385 = vsel %vm1015, %v6384, %v6334
        %v6386 = vsel %vm1017, %v6385, %v6338
        %v6387 = vsel %vm1019, %v6386, %v6342
        %v6388 = vsel %vm1021, %v6387, %v6346
        %v6389 = vsel %vm1023, %v6388, %v6350
        %v6390 = vsel %vm1025, %v6389, %v6354
        %v6391 = vsel %vm1013, %v6300, %v6358
        %v6392 = vsel %vm1015, %v6391, %v6362
        %v6393 = vsel %vm1017, %v6392, %v6366
        %v6394 = vsel %vm1019, %v6393, %v6370
        %v6395 = vsel %vm1021, %v6394, %v6374
        %v6396 = vsel %vm1023, %v6395, %v6378
        %v6397 = vsel %vm1025, %v6396, %v6382
        %6398 = vrot.lane.b32.xlu0 %v5936, 126
        %v6399 = vpop.permute.xlu0 %6398
        %6400 = vrot.lane.b32.xlu0 %v5938, 126
        %v6401 = vpop.permute.xlu0 %6400
        %6402 = vrot.lane.b32.xlu0 %v5941, 126
        %v6403 = vpop.permute.xlu0 %6402
        %6404 = vrot.lane.b32.xlu0 %v5943, 126
        %v6405 = vpop.permute.xlu0 %6404
        %6406 = vrot.lane.b32.xlu0 %v5946, 126
        %v6407 = vpop.permute.xlu0 %6406
        %6408 = vrot.lane.b32.xlu0 %v5948, 126
        %v6409 = vpop.permute.xlu0 %6408
        %6410 = vrot.lane.b32.xlu0 %v5951, 126
        %v6411 = vpop.permute.xlu0 %6410
        %6412 = vrot.lane.b32.xlu0 %v5953, 126
        %v6413 = vpop.permute.xlu0 %6412
        %v6422 = vcombine.low %v6399, %v6407
        %v6423 = vcombine.high %v6399, %v6407
        %v6425 = vunpack.c.l.s4 1983009808
        %v6426 = vunpack.c.0.s8 %v6425
        %v6427 = vlaneseq
        %v6428 = vshrl.u32 %v6427, 7
        %v6429 = vsub.s32 %v6426, %v6428
        %v6430 = vrot.slane %v6422, %v6429
        %v6432 = vunpack.c.l.s4 1983009808
        %v6433 = vunpack.c.0.s8 %v6432
        %v6434 = vlaneseq
        %v6435 = vshrl.u32 %v6434, 7
        %v6436 = vsub.s32 %v6433, %v6435
        %v6437 = vrot.slane %v6423, %v6436
        %v6438 = vcombine.low %v6403, %v6411
        %v6439 = vcombine.high %v6403, %v6411
        %v6441 = vunpack.c.l.s4 1983009808
        %v6442 = vunpack.c.0.s8 %v6441
        %v6443 = vlaneseq
        %v6444 = vshrl.u32 %v6443, 7
        %v6445 = vsub.s32 %v6442, %v6444
        %v6446 = vrot.slane %v6438, %v6445
        %v6448 = vunpack.c.l.s4 1983009808
        %v6449 = vunpack.c.0.s8 %v6448
        %v6450 = vlaneseq
        %v6451 = vshrl.u32 %v6450, 7
        %v6452 = vsub.s32 %v6449, %v6451
        %v6453 = vrot.slane %v6439, %v6452
        %v6454 = vcombine.low %v6430, %v6446
        %v6455 = vcombine.high %v6430, %v6446
        %v6457 = vunpack.c.l.s4 1934713408
        %v6458 = vunpack.c.0.s8 %v6457
        %v6459 = vlaneseq
        %v6460 = vshrl.u32 %v6459, 7
        %v6461 = vsub.s32 %v6458, %v6460
        %v6462 = vrot.slane %v6454, %v6461
        %v6464 = vunpack.c.l.s4 1934713408
        %v6465 = vunpack.c.0.s8 %v6464
        %v6466 = vlaneseq
        %v6467 = vshrl.u32 %v6466, 7
        %v6468 = vsub.s32 %v6465, %v6467
        %v6469 = vrot.slane %v6455, %v6468
        %v6470 = vcombine.low %v6437, %v6453
        %v6471 = vcombine.high %v6437, %v6453
        %v6473 = vunpack.c.l.s4 1934713408
        %v6474 = vunpack.c.0.s8 %v6473
        %v6475 = vlaneseq
        %v6476 = vshrl.u32 %v6475, 7
        %v6477 = vsub.s32 %v6474, %v6476
        %v6478 = vrot.slane %v6470, %v6477
        %v6480 = vunpack.c.l.s4 1934713408
        %v6481 = vunpack.c.0.s8 %v6480
        %v6482 = vlaneseq
        %v6483 = vshrl.u32 %v6482, 7
        %v6484 = vsub.s32 %v6481, %v6483
        %v6485 = vrot.slane %v6471, %v6484
        %v6486 = vcombine.high %v6462, 0.0
        %v6487 = vcombine.high %v6469, 0.0
        %v6488 = vcombine.high %v6478, 0.0
        %v6489 = vcombine.high %v6485, 0.0
        %v6490 = vcombine.low %v6401, %v6409
        %v6491 = vcombine.high %v6401, %v6409
        %v6493 = vunpack.c.l.s4 1983009808
        %v6494 = vunpack.c.0.s8 %v6493
        %v6495 = vlaneseq
        %v6496 = vshrl.u32 %v6495, 7
        %v6497 = vsub.s32 %v6494, %v6496
        %v6498 = vrot.slane %v6490, %v6497
        %v6500 = vunpack.c.l.s4 1983009808
        %v6501 = vunpack.c.0.s8 %v6500
        %v6502 = vlaneseq
        %v6503 = vshrl.u32 %v6502, 7
        %v6504 = vsub.s32 %v6501, %v6503
        %v6505 = vrot.slane %v6491, %v6504
        %v6506 = vcombine.low %v6405, %v6413
        %v6507 = vcombine.high %v6405, %v6413
        %v6509 = vunpack.c.l.s4 1983009808
        %v6510 = vunpack.c.0.s8 %v6509
        %v6511 = vlaneseq
        %v6512 = vshrl.u32 %v6511, 7
        %v6513 = vsub.s32 %v6510, %v6512
        %v6514 = vrot.slane %v6506, %v6513
        %v6516 = vunpack.c.l.s4 1983009808
        %v6517 = vunpack.c.0.s8 %v6516
        %v6518 = vlaneseq
        %v6519 = vshrl.u32 %v6518, 7
        %v6520 = vsub.s32 %v6517, %v6519
        %v6521 = vrot.slane %v6507, %v6520
        %v6522 = vcombine.low %v6498, %v6514
        %v6523 = vcombine.high %v6498, %v6514
        %v6525 = vunpack.c.l.s4 1934713408
        %v6526 = vunpack.c.0.s8 %v6525
        %v6527 = vlaneseq
        %v6528 = vshrl.u32 %v6527, 7
        %v6529 = vsub.s32 %v6526, %v6528
        %v6530 = vrot.slane %v6522, %v6529
        %v6532 = vunpack.c.l.s4 1934713408
        %v6533 = vunpack.c.0.s8 %v6532
        %v6534 = vlaneseq
        %v6535 = vshrl.u32 %v6534, 7
        %v6536 = vsub.s32 %v6533, %v6535
        %v6537 = vrot.slane %v6523, %v6536
        %v6538 = vcombine.low %v6505, %v6521
        %v6539 = vcombine.high %v6505, %v6521
        %v6541 = vunpack.c.l.s4 1934713408
        %v6542 = vunpack.c.0.s8 %v6541
        %v6543 = vlaneseq
        %v6544 = vshrl.u32 %v6543, 7
        %v6545 = vsub.s32 %v6542, %v6544
        %v6546 = vrot.slane %v6538, %v6545
        %v6548 = vunpack.c.l.s4 1934713408
        %v6549 = vunpack.c.0.s8 %v6548
        %v6550 = vlaneseq
        %v6551 = vshrl.u32 %v6550, 7
        %v6552 = vsub.s32 %v6549, %v6551
        %v6553 = vrot.slane %v6539, %v6552
        %v6554 = vcombine.high %v6530, 0.0
        %v6555 = vcombine.high %v6537, 0.0
        %v6556 = vcombine.high %v6546, 0.0
        %v6557 = vcombine.high %v6553, 0.0
        %6559 = vrot.lane.b32.xlu0 %v6486, 16
        %v6560 = vpop.permute.xlu0 %6559
        %6563 = vrot.lane.b32.xlu0 %v6469, 32
        %v6564 = vpop.permute.xlu0 %6563
        %6567 = vrot.lane.b32.xlu0 %v6487, 48
        %v6568 = vpop.permute.xlu0 %6567
        %6571 = vrot.lane.b32.xlu0 %v6478, 64
        %v6572 = vpop.permute.xlu0 %6571
        %6575 = vrot.lane.b32.xlu0 %v6488, 80
        %v6576 = vpop.permute.xlu0 %6575
        %6579 = vrot.lane.b32.xlu0 %v6485, 96
        %v6580 = vpop.permute.xlu0 %6579
        %6583 = vrot.lane.b32.xlu0 %v6489, 112
        %v6584 = vpop.permute.xlu0 %6583
        %6587 = vrot.lane.b32.xlu0 %v6554, 16
        %v6588 = vpop.permute.xlu0 %6587
        %6591 = vrot.lane.b32.xlu0 %v6537, 32
        %v6592 = vpop.permute.xlu0 %6591
        %6595 = vrot.lane.b32.xlu0 %v6555, 48
        %v6596 = vpop.permute.xlu0 %6595
        %6599 = vrot.lane.b32.xlu0 %v6546, 64
        %v6600 = vpop.permute.xlu0 %6599
        %6603 = vrot.lane.b32.xlu0 %v6556, 80
        %v6604 = vpop.permute.xlu0 %6603
        %6607 = vrot.lane.b32.xlu0 %v6553, 96
        %v6608 = vpop.permute.xlu0 %6607
        %6611 = vrot.lane.b32.xlu0 %v6557, 112
        %v6612 = vpop.permute.xlu0 %6611
        %v6614 = vsel %vm1013, %v6462, %v6560
        %v6615 = vsel %vm1015, %v6614, %v6564
        %v6616 = vsel %vm1017, %v6615, %v6568
        %v6617 = vsel %vm1019, %v6616, %v6572
        %v6618 = vsel %vm1021, %v6617, %v6576
        %v6619 = vsel %vm1023, %v6618, %v6580
        %v6620 = vsel %vm1025, %v6619, %v6584
        %v6621 = vsel %vm1013, %v6530, %v6588
        %v6622 = vsel %vm1015, %v6621, %v6592
        %v6623 = vsel %vm1017, %v6622, %v6596
        %v6624 = vsel %vm1019, %v6623, %v6600
        %v6625 = vsel %vm1021, %v6624, %v6604
        %v6626 = vsel %vm1023, %v6625, %v6608
        %v6627 = vsel %vm1025, %v6626, %v6612
        %v6630 = vrot.slane %v4998, 4
        %v6631 = vrot.slane %v5005, 4
        %v6636 = vrot.slane %v5466, 4
        %v6637 = vrot.slane %v5473, 4
        %v6642 = vrot.slane %v5926, 4
        %v6643 = vrot.slane %v5933, 4
        %v6648 = vrot.slane %v6390, 4
        %v6649 = vrot.slane %v6397, 4
        %vm6652 = vcmask 1043456
        %v6653 = vsel %vm6652, %v4760, %v6630
        %v6654 = vsel %vm6652, %v4767, %v6631
        %v6655 = vsel %vm6652, %v5228, %v6636
        %v6656 = vsel %vm6652, %v5235, %v6637
        %v6657 = vsel %vm6652, %v5696, %v6642
        %v6658 = vsel %vm6652, %v5703, %v6643
        %v6659 = vsel %vm6652, %v6160, %v6648
        %v6660 = vsel %vm6652, %v6167, %v6649
        %v6661 = vld [vmem:[%s6] sm:$0xf]
        %v6662 = vld [vmem:[%s8] sm:$0xf]
        %v6663 = vcombine.low %v394, %v398
        %v6664 = vcombine.high %v394, %v398
        %v6666 = vunpack.c.l.s4 1983009808
        %v6667 = vunpack.c.0.s8 %v6666
        %v6668 = vlaneseq
        %v6669 = vshrl.u32 %v6668, 7
        %v6670 = vsub.s32 %v6667, %v6669
        %v6671 = vrot.slane %v6663, %v6670
        %v6673 = vunpack.c.l.s4 1983009808
        %v6674 = vunpack.c.0.s8 %v6673
        %v6675 = vlaneseq
        %v6676 = vshrl.u32 %v6675, 7
        %v6677 = vsub.s32 %v6674, %v6676
        %v6678 = vrot.slane %v6664, %v6677
        %v6679 = vcombine.low %v396, %v400
        %v6680 = vcombine.high %v396, %v400
        %v6682 = vunpack.c.l.s4 1983009808
        %v6683 = vunpack.c.0.s8 %v6682
        %v6684 = vlaneseq
        %v6685 = vshrl.u32 %v6684, 7
        %v6686 = vsub.s32 %v6683, %v6685
        %v6687 = vrot.slane %v6679, %v6686
        %v6689 = vunpack.c.l.s4 1983009808
        %v6690 = vunpack.c.0.s8 %v6689
        %v6691 = vlaneseq
        %v6692 = vshrl.u32 %v6691, 7
        %v6693 = vsub.s32 %v6690, %v6692
        %v6694 = vrot.slane %v6680, %v6693
        %v6695 = vcombine.low %v402, %v406
        %v6696 = vcombine.high %v402, %v406
        %v6698 = vunpack.c.l.s4 1983009808
        %v6699 = vunpack.c.0.s8 %v6698
        %v6700 = vlaneseq
        %v6701 = vshrl.u32 %v6700, 7
        %v6702 = vsub.s32 %v6699, %v6701
        %v6703 = vrot.slane %v6695, %v6702
        %v6705 = vunpack.c.l.s4 1983009808
        %v6706 = vunpack.c.0.s8 %v6705
        %v6707 = vlaneseq
        %v6708 = vshrl.u32 %v6707, 7
        %v6709 = vsub.s32 %v6706, %v6708
        %v6710 = vrot.slane %v6696, %v6709
        %v6711 = vcombine.low %v404, %v408
        %v6712 = vcombine.high %v404, %v408
        %v6714 = vunpack.c.l.s4 1983009808
        %v6715 = vunpack.c.0.s8 %v6714
        %v6716 = vlaneseq
        %v6717 = vshrl.u32 %v6716, 7
        %v6718 = vsub.s32 %v6715, %v6717
        %v6719 = vrot.slane %v6711, %v6718
        %v6721 = vunpack.c.l.s4 1983009808
        %v6722 = vunpack.c.0.s8 %v6721
        %v6723 = vlaneseq
        %v6724 = vshrl.u32 %v6723, 7
        %v6725 = vsub.s32 %v6722, %v6724
        %v6726 = vrot.slane %v6712, %v6725
        %v6727 = vcombine.low %v6671, %v6687
        %v6728 = vcombine.high %v6671, %v6687
        %v6730 = vunpack.c.l.s4 1934713408
        %v6731 = vunpack.c.0.s8 %v6730
        %v6732 = vlaneseq
        %v6733 = vshrl.u32 %v6732, 7
        %v6734 = vsub.s32 %v6731, %v6733
        %v6735 = vrot.slane %v6727, %v6734
        %v6737 = vunpack.c.l.s4 1934713408
        %v6738 = vunpack.c.0.s8 %v6737
        %v6739 = vlaneseq
        %v6740 = vshrl.u32 %v6739, 7
        %v6741 = vsub.s32 %v6738, %v6740
        %v6742 = vrot.slane %v6728, %v6741
        %v6743 = vcombine.low %v6678, %v6694
        %v6744 = vcombine.high %v6678, %v6694
        %v6746 = vunpack.c.l.s4 1934713408
        %v6747 = vunpack.c.0.s8 %v6746
        %v6748 = vlaneseq
        %v6749 = vshrl.u32 %v6748, 7
        %v6750 = vsub.s32 %v6747, %v6749
        %v6751 = vrot.slane %v6743, %v6750
        %v6753 = vunpack.c.l.s4 1934713408
        %v6754 = vunpack.c.0.s8 %v6753
        %v6755 = vlaneseq
        %v6756 = vshrl.u32 %v6755, 7
        %v6757 = vsub.s32 %v6754, %v6756
        %v6758 = vrot.slane %v6744, %v6757
        %v6759 = vcombine.low %v6703, %v6719
        %v6760 = vcombine.high %v6703, %v6719
        %v6762 = vunpack.c.l.s4 1934713408
        %v6763 = vunpack.c.0.s8 %v6762
        %v6764 = vlaneseq
        %v6765 = vshrl.u32 %v6764, 7
        %v6766 = vsub.s32 %v6763, %v6765
        %v6767 = vrot.slane %v6759, %v6766
        %v6769 = vunpack.c.l.s4 1934713408
        %v6770 = vunpack.c.0.s8 %v6769
        %v6771 = vlaneseq
        %v6772 = vshrl.u32 %v6771, 7
        %v6773 = vsub.s32 %v6770, %v6772
        %v6774 = vrot.slane %v6760, %v6773
        %v6775 = vcombine.low %v6710, %v6726
        %v6776 = vcombine.high %v6710, %v6726
        %v6778 = vunpack.c.l.s4 1934713408
        %v6779 = vunpack.c.0.s8 %v6778
        %v6780 = vlaneseq
        %v6781 = vshrl.u32 %v6780, 7
        %v6782 = vsub.s32 %v6779, %v6781
        %v6783 = vrot.slane %v6775, %v6782
        %v6785 = vunpack.c.l.s4 1934713408
        %v6786 = vunpack.c.0.s8 %v6785
        %v6787 = vlaneseq
        %v6788 = vshrl.u32 %v6787, 7
        %v6789 = vsub.s32 %v6786, %v6788
        %v6790 = vrot.slane %v6776, %v6789
        %v6791 = vcombine.low %v6735, %v6767
        %v6792 = vcombine.high %v6735, %v6767
        %v6793 = vcombine.low %v6742, %v6774
        %v6794 = vcombine.high %v6742, %v6774
        %v6795 = vcombine.low %v6751, %v6783
        %v6796 = vcombine.high %v6751, %v6783
        %v6797 = vcombine.low %v6758, %v6790
        %v6798 = vcombine.high %v6758, %v6790
        %v6799 = vcombine.low %v395, %v399
        %v6800 = vcombine.high %v395, %v399
        %v6802 = vunpack.c.l.s4 1983009808
        %v6803 = vunpack.c.0.s8 %v6802
        %v6804 = vlaneseq
        %v6805 = vshrl.u32 %v6804, 7
        %v6806 = vsub.s32 %v6803, %v6805
        %v6807 = vrot.slane %v6799, %v6806
        %v6809 = vunpack.c.l.s4 1983009808
        %v6810 = vunpack.c.0.s8 %v6809
        %v6811 = vlaneseq
        %v6812 = vshrl.u32 %v6811, 7
        %v6813 = vsub.s32 %v6810, %v6812
        %v6814 = vrot.slane %v6800, %v6813
        %v6815 = vcombine.low %v397, %v401
        %v6816 = vcombine.high %v397, %v401
        %v6818 = vunpack.c.l.s4 1983009808
        %v6819 = vunpack.c.0.s8 %v6818
        %v6820 = vlaneseq
        %v6821 = vshrl.u32 %v6820, 7
        %v6822 = vsub.s32 %v6819, %v6821
        %v6823 = vrot.slane %v6815, %v6822
        %v6825 = vunpack.c.l.s4 1983009808
        %v6826 = vunpack.c.0.s8 %v6825
        %v6827 = vlaneseq
        %v6828 = vshrl.u32 %v6827, 7
        %v6829 = vsub.s32 %v6826, %v6828
        %v6830 = vrot.slane %v6816, %v6829
        %v6831 = vcombine.low %v403, %v407
        %v6832 = vcombine.high %v403, %v407
        %v6834 = vunpack.c.l.s4 1983009808
        %v6835 = vunpack.c.0.s8 %v6834
        %v6836 = vlaneseq
        %v6837 = vshrl.u32 %v6836, 7
        %v6838 = vsub.s32 %v6835, %v6837
        %v6839 = vrot.slane %v6831, %v6838
        %v6841 = vunpack.c.l.s4 1983009808
        %v6842 = vunpack.c.0.s8 %v6841
        %v6843 = vlaneseq
        %v6844 = vshrl.u32 %v6843, 7
        %v6845 = vsub.s32 %v6842, %v6844
        %v6846 = vrot.slane %v6832, %v6845
        %v6847 = vcombine.low %v405, %v409
        %v6848 = vcombine.high %v405, %v409
        %v6850 = vunpack.c.l.s4 1983009808
        %v6851 = vunpack.c.0.s8 %v6850
        %v6852 = vlaneseq
        %v6853 = vshrl.u32 %v6852, 7
        %v6854 = vsub.s32 %v6851, %v6853
        %v6855 = vrot.slane %v6847, %v6854
        %v6857 = vunpack.c.l.s4 1983009808
        %v6858 = vunpack.c.0.s8 %v6857
        %v6859 = vlaneseq
        %v6860 = vshrl.u32 %v6859, 7
        %v6861 = vsub.s32 %v6858, %v6860
        %v6862 = vrot.slane %v6848, %v6861
        %v6863 = vcombine.low %v6807, %v6823
        %v6864 = vcombine.high %v6807, %v6823
        %v6866 = vunpack.c.l.s4 1934713408
        %v6867 = vunpack.c.0.s8 %v6866
        %v6868 = vlaneseq
        %v6869 = vshrl.u32 %v6868, 7
        %v6870 = vsub.s32 %v6867, %v6869
        %v6871 = vrot.slane %v6863, %v6870
        %v6873 = vunpack.c.l.s4 1934713408
        %v6874 = vunpack.c.0.s8 %v6873
        %v6875 = vlaneseq
        %v6876 = vshrl.u32 %v6875, 7
        %v6877 = vsub.s32 %v6874, %v6876
        %v6878 = vrot.slane %v6864, %v6877
        %v6879 = vcombine.low %v6814, %v6830
        %v6880 = vcombine.high %v6814, %v6830
        %v6882 = vunpack.c.l.s4 1934713408
        %v6883 = vunpack.c.0.s8 %v6882
        %v6884 = vlaneseq
        %v6885 = vshrl.u32 %v6884, 7
        %v6886 = vsub.s32 %v6883, %v6885
        %v6887 = vrot.slane %v6879, %v6886
        %v6889 = vunpack.c.l.s4 1934713408
        %v6890 = vunpack.c.0.s8 %v6889
        %v6891 = vlaneseq
        %v6892 = vshrl.u32 %v6891, 7
        %v6893 = vsub.s32 %v6890, %v6892
        %v6894 = vrot.slane %v6880, %v6893
        %v6895 = vcombine.low %v6839, %v6855
        %v6896 = vcombine.high %v6839, %v6855
        %v6898 = vunpack.c.l.s4 1934713408
        %v6899 = vunpack.c.0.s8 %v6898
        %v6900 = vlaneseq
        %v6901 = vshrl.u32 %v6900, 7
        %v6902 = vsub.s32 %v6899, %v6901
        %v6903 = vrot.slane %v6895, %v6902
        %v6905 = vunpack.c.l.s4 1934713408
        %v6906 = vunpack.c.0.s8 %v6905
        %v6907 = vlaneseq
        %v6908 = vshrl.u32 %v6907, 7
        %v6909 = vsub.s32 %v6906, %v6908
        %v6910 = vrot.slane %v6896, %v6909
        %v6911 = vcombine.low %v6846, %v6862
        %v6912 = vcombine.high %v6846, %v6862
        %v6914 = vunpack.c.l.s4 1934713408
        %v6915 = vunpack.c.0.s8 %v6914
        %v6916 = vlaneseq
        %v6917 = vshrl.u32 %v6916, 7
        %v6918 = vsub.s32 %v6915, %v6917
        %v6919 = vrot.slane %v6911, %v6918
        %v6921 = vunpack.c.l.s4 1934713408
        %v6922 = vunpack.c.0.s8 %v6921
        %v6923 = vlaneseq
        %v6924 = vshrl.u32 %v6923, 7
        %v6925 = vsub.s32 %v6922, %v6924
        %v6926 = vrot.slane %v6912, %v6925
        %v6927 = vcombine.low %v6871, %v6903
        %v6928 = vcombine.high %v6871, %v6903
        %v6929 = vcombine.low %v6878, %v6910
        %v6930 = vcombine.high %v6878, %v6910
        %v6931 = vcombine.low %v6887, %v6919
        %v6932 = vcombine.high %v6887, %v6919
        %v6933 = vcombine.low %v6894, %v6926
        %v6934 = vcombine.high %v6894, %v6926
        %6936 = vrot.lane.b32.xlu0 %v6792, 16
        %v6937 = vpop.permute.xlu0 %6936
        %6940 = vrot.lane.b32.xlu0 %v6793, 32
        %v6941 = vpop.permute.xlu0 %6940
        %6944 = vrot.lane.b32.xlu0 %v6794, 48
        %v6945 = vpop.permute.xlu0 %6944
        %6948 = vrot.lane.b32.xlu0 %v6795, 64
        %v6949 = vpop.permute.xlu0 %6948
        %6952 = vrot.lane.b32.xlu0 %v6796, 80
        %v6953 = vpop.permute.xlu0 %6952
        %6956 = vrot.lane.b32.xlu0 %v6797, 96
        %v6957 = vpop.permute.xlu0 %6956
        %6960 = vrot.lane.b32.xlu0 %v6798, 112
        %v6961 = vpop.permute.xlu0 %6960
        %6964 = vrot.lane.b32.xlu0 %v6928, 16
        %v6965 = vpop.permute.xlu0 %6964
        %6968 = vrot.lane.b32.xlu0 %v6929, 32
        %v6969 = vpop.permute.xlu0 %6968
        %6972 = vrot.lane.b32.xlu0 %v6930, 48
        %v6973 = vpop.permute.xlu0 %6972
        %6976 = vrot.lane.b32.xlu0 %v6931, 64
        %v6977 = vpop.permute.xlu0 %6976
        %6980 = vrot.lane.b32.xlu0 %v6932, 80
        %v6981 = vpop.permute.xlu0 %6980
        %6984 = vrot.lane.b32.xlu0 %v6933, 96
        %v6985 = vpop.permute.xlu0 %6984
        %6988 = vrot.lane.b32.xlu0 %v6934, 112
        %v6989 = vpop.permute.xlu0 %6988
        %v6991 = vsel %vm1013, %v6791, %v6937
        %v6992 = vsel %vm1015, %v6991, %v6941
        %v6993 = vsel %vm1017, %v6992, %v6945
        %v6994 = vsel %vm1019, %v6993, %v6949
        %v6995 = vsel %vm1021, %v6994, %v6953
        %v6996 = vsel %vm1023, %v6995, %v6957
        %v6997 = vsel %vm1025, %v6996, %v6961
        %v6998 = vsel %vm1013, %v6927, %v6965
        %v6999 = vsel %vm1015, %v6998, %v6969
        %v7000 = vsel %vm1017, %v6999, %v6973
        %v7001 = vsel %vm1019, %v7000, %v6977
        %v7002 = vsel %vm1021, %v7001, %v6981
        %v7003 = vsel %vm1023, %v7002, %v6985
        %v7004 = vsel %vm1025, %v7003, %v6989
        %v7005 = vld [vmem:[%s9] sm:$0xf]
        %7007 = vset.pattern.permute.xlu0 0
        %7008 = vperm.xlu0 %7007, %v7005
        %v7009 = vpop.permute.xlu0 %7008
        %vm7011 = vcmask 64512
        %v7013 = vsel %vm7011, %v6662, 0
        %7015 = vmatprep.subr.mxu0 0.0
        %7016 = vmatpush1.msra.mxu0 0.0
        %7017 = vmatprep.subr.mxu0 0.0
        %7018 = vmatpush1.msra.mxu0 0.0
        %7019 = vmatprep.subr.mxu0 0.0
        %7020 = vmatpush1.msra.mxu0 0.0
        %7021 = vmatprep.subr.mxu0 0.0
        %7022 = vmatpush1.msra.mxu0 0.0
        %7023 = vmatprep.subr.mxu0 0.0
        %7024 = vmatpush1.msra.mxu0 0.0
        %7025 = vmatprep.subr.mxu0 0.0
        %7026 = vmatpush1.msra.mxu0 0.0
        %7027 = vmatprep.subr.mxu0 0.0
        %7028 = vmatpush1.msra.mxu0 0.0
        %7029 = vmatprep.subr.mxu0 0.0
        %7030 = vmatpush1.msra.mxu0 0.0
        %7031 = vmatprep.subr.mxu0 0.0
        %7032 = vmatpush1.msra.mxu0 0.0
        %7033 = vmatprep.subr.mxu0 0.0
        %7034 = vmatpush1.msra.mxu0 0.0
        %7035 = vmatprep.subr.mxu0 0.0
        %7036 = vmatpush1.msra.mxu0 0.0
        %7037 = vmatprep.subr.mxu0 0.0
        %7038 = vmatpush1.msra.mxu0 0.0
        %7039 = vmatprep.subr.mxu0 0.0
        %7040 = vmatpush1.msra.mxu0 0.0
        %7041 = vmatprep.subr.mxu0 0.0
        %7042 = vmatpush1.msra.mxu0 0.0
        %7043 = vmatprep.subr.mxu0 0.0
        %7044 = vmatpush1.msra.mxu0 0.0
        %7045 = vmatprep.subr.mxu0 %v7004
        %7046 = vmatpush1.msra.mxu0 %v6997
        %7047 = vmatprep.subr.mxu0 0.0
        %7048 = vmatpush2.msra.mxu0 0.0
        %7049 = vmatprep.subr.mxu0 0.0
        %7050 = vmatpush2.msra.mxu0 0.0
        %7051 = vmatprep.subr.mxu0 0.0
        %7052 = vmatpush2.msra.mxu0 0.0
        %7053 = vmatprep.subr.mxu0 0.0
        %7054 = vmatpush2.msra.mxu0 0.0
        %7055 = vmatprep.subr.mxu0 0.0
        %7056 = vmatpush2.msra.mxu0 0.0
        %7057 = vmatprep.subr.mxu0 0.0
        %7058 = vmatpush2.msra.mxu0 0.0
        %7059 = vmatprep.subr.mxu0 0.0
        %7060 = vmatpush2.msra.mxu0 0.0
        %7061 = vmatprep.subr.mxu0 0.0
        %7062 = vmatpush2.msra.mxu0 0.0
        %7063 = vmatprep.subr.mxu0 0.0
        %7064 = vmatpush2.msra.mxu0 0.0
        %7065 = vmatprep.subr.mxu0 0.0
        %7066 = vmatpush2.msra.mxu0 0.0
        %7067 = vmatprep.subr.mxu0 0.0
        %7068 = vmatpush2.msra.mxu0 0.0
        %7069 = vmatprep.subr.mxu0 0.0
        %7070 = vmatpush2.msra.mxu0 0.0
        %7071 = vmatprep.subr.mxu0 0.0
        %7072 = vmatpush2.msra.mxu0 0.0
        %7073 = vmatprep.subr.mxu0 0.0
        %7074 = vmatpush2.msra.mxu0 0.0
        %7075 = vmatprep.subr.mxu0 0.0
        %7076 = vmatpush2.msra.mxu0 0.0
        %7077 = vmatprep.subr.mxu0 0.0
        %7078 = vmatpush2.msra.mxu0 0.0
        %7079 = vmatprep.mubr.f32.mxu0 0.0
        %7080 = vmatmul.mubr.f32.gmra.mxu0 %v7013
        %v7081 = vpop.f32.mrf.mxu0
        %v7082 = vadd.f32 %v7009, %v7081
        %v7083 = vpop.f32.mrf.mxu0
        %v7084 = vadd.f32 %v7009, %v7083
        %7085 = vdwg.mxu0
        %v7086 = vld [vmem:[%s7] sm:$0xf]
        %7088 = vset.pattern.permute.xlu0 0
        %7089 = vperm.xlu0 %7088, %v7086
        %v7090 = vpop.permute.xlu0 %7089
        %vm7092 = vcmask 293888
        %v7094 = vsel %vm7092, %v6661, 0
        %v7097 = vsel %vm6652, %v6620, 0
        %v7100 = vsel %vm6652, %v6627, 0
        %7102 = vmatprep.subr.mxu0 0.0
        %7103 = vmatpush1.msra.mxu0 0.0
        %7104 = vmatprep.subr.mxu0 0.0
        %7105 = vmatpush1.msra.mxu0 0.0
        %7106 = vmatprep.subr.mxu0 0.0
        %7107 = vmatpush1.msra.mxu0 0.0
        %7108 = vmatprep.subr.mxu0 0.0
        %7109 = vmatpush1.msra.mxu0 0.0
        %7110 = vmatprep.subr.mxu0 0.0
        %7111 = vmatpush1.msra.mxu0 0.0
        %7112 = vmatprep.subr.mxu0 0.0
        %7113 = vmatpush1.msra.mxu0 0.0
        %7114 = vmatprep.subr.mxu0 0.0
        %7115 = vmatpush1.msra.mxu0 0.0
        %7116 = vmatprep.subr.mxu0 0.0
        %7117 = vmatpush1.msra.mxu0 0.0
        %7118 = vmatprep.subr.mxu0 0.0
        %7119 = vmatpush1.msra.mxu0 0.0
        %7120 = vmatprep.subr.mxu0 0.0
        %7121 = vmatpush1.msra.mxu0 0.0
        %7122 = vmatprep.subr.mxu0 0.0
        %7123 = vmatpush1.msra.mxu0 0.0
        %7124 = vmatprep.subr.mxu0 %v7100
        %7125 = vmatpush1.msra.mxu0 %v7097
        %7126 = vmatprep.subr.mxu0 %v6660
        %7127 = vmatpush1.msra.mxu0 %v6659
        %7128 = vmatprep.subr.mxu0 %v6658
        %7129 = vmatpush1.msra.mxu0 %v6657
        %7130 = vmatprep.subr.mxu0 %v6656
        %7131 = vmatpush1.msra.mxu0 %v6655
        %7132 = vmatprep.subr.mxu0 %v6654
        %7133 = vmatpush1.msra.mxu0 %v6653
        %7134 = vmatprep.subr.mxu0 0.0
        %7135 = vmatpush2.msra.mxu0 0.0
        %7136 = vmatprep.subr.mxu0 0.0
        %7137 = vmatpush2.msra.mxu0 0.0
        %7138 = vmatprep.subr.mxu0 0.0
        %7139 = vmatpush2.msra.mxu0 0.0
        %7140 = vmatprep.subr.mxu0 0.0
        %7141 = vmatpush2.msra.mxu0 0.0
        %7142 = vmatprep.subr.mxu0 0.0
        %7143 = vmatpush2.msra.mxu0 0.0
        %7144 = vmatprep.subr.mxu0 0.0
        %7145 = vmatpush2.msra.mxu0 0.0
        %7146 = vmatprep.subr.mxu0 0.0
        %7147 = vmatpush2.msra.mxu0 0.0
        %7148 = vmatprep.subr.mxu0 0.0
        %7149 = vmatpush2.msra.mxu0 0.0
        %7150 = vmatprep.subr.mxu0 0.0
        %7151 = vmatpush2.msra.mxu0 0.0
        %7152 = vmatprep.subr.mxu0 0.0
        %7153 = vmatpush2.msra.mxu0 0.0
        %7154 = vmatprep.subr.mxu0 0.0
        %7155 = vmatpush2.msra.mxu0 0.0
        %7156 = vmatprep.subr.mxu0 0.0
        %7157 = vmatpush2.msra.mxu0 0.0
        %7158 = vmatprep.subr.mxu0 0.0
        %7159 = vmatpush2.msra.mxu0 0.0
        %7160 = vmatprep.subr.mxu0 0.0
        %7161 = vmatpush2.msra.mxu0 0.0
        %7162 = vmatprep.subr.mxu0 0.0
        %7163 = vmatpush2.msra.mxu0 0.0
        %7164 = vmatprep.subr.mxu0 0.0
        %7165 = vmatpush2.msra.mxu0 0.0
        %7166 = vmatprep.mubr.f32.mxu0 0.0
        %7167 = vmatmul.mubr.f32.gmra.mxu0 %v7094
        %v7168 = vpop.f32.mrf.mxu0
        %v7169 = vadd.f32 %v7090, %v7168
        %v7170 = vpop.f32.mrf.mxu0
        %v7171 = vadd.f32 %v7090, %v7170
        %7172 = vdwg.mxu0
        %v7173 = vadd.f32 %v7169, %v7082
        %v7174 = vadd.f32 %v7171, %v7084
        %v7177 = vcombine.low %v7173, %v7174
        %7179 = vst [vmem:[%s393] sm:$0xff] %v7177
        %p7180 = scmp.lt.s32.totalorder %s24, 1
        %s7181 = scalar_select %p7180, %s24, 1
        %s7182 = smul.addr %s7181, 2
        %s7183 = smul.addr %s7182, 4
        %s7184 = scalar_lea.vmem %s10, %s7183
        // Predicated region
        $region65: #{upblock_forward.1} parent=59 // pred_check
          %p7185 = pneg %p262
        $region66: #{upblock_forward.1} parent=59 // pred_check_branch
          %7187 = sbr.rel (%p7185) target = $region68
        $region67: #{upblock_forward.1} parent=59 // pred_region
          _
        $region68: #{upblock_forward.1} parent=59 // pred_fallthru
          _
      $region60: #{upblock_forward.1} parent=5 // pred_fallthru
        _
      %p7188 = scmp.le.s32.totalorder 2, %s19
      // Predicated region
      $region69: #{upblock_forward.1} parent=5 // pred_check
        %p7189 = pneg %p7188
      $region70: #{upblock_forward.1} parent=5 // pred_check_branch
        %7191 = sbr.rel (%p7189) target = $region72
      $region71: #{upblock_forward.1} parent=5 // pred_region
        %s7192 = ssub.s32 %s19, 2
        // Predicated region
        $region73: #{upblock_forward.1} parent=71 // pred_check
          %p7193 = pneg %p268
        $region74: #{upblock_forward.1} parent=71 // pred_check_branch
          %7195 = sbr.rel (%p7193) target = $region76
        $region75: #{upblock_forward.1} parent=71 // pred_region
          %p7196 = scmp.lt.s32.totalorder %s25, 1
          %s7197 = scalar_select %p7196, %s25, 1
          %s7198 = smul.addr %s7197, 2
          %s7199 = smul.addr %s7198, 4
          %s7200 = scalar_lea.vmem %s10, %s7199
        $region76: #{upblock_forward.1} parent=71 // pred_fallthru
          _
      $region72: #{upblock_forward.1} parent=5 // pred_fallthru
        _
    $region6: #{upblock_forward.1} parent=1 // loop_footer
      %s23 = sadd.s32 1, %s19
    $region7: #{upblock_forward.1} parent=1 // loop_footer_branch
      %18 = sbr.rel target = $region3
    $region8: #{upblock_forward.1} parent=1 // loop_exit
      _
    %7201 = vsyncpa [#allocation5], 1
    %s7202 = scalar_lea.sflag [#allocation5], 1
    %7203 = vsyncpa %s7202, 1

</llo_original>
